<compile_context>
chip_gen: v5e
topology: v5e:2x2
jax: 0.10.0
libtpu: 0.0.40
codegen_flags: <defaults>
</compile_context>

<pallas_src>
import math

import jax
import jax.numpy as jnp
from jax.experimental import pallas as pl
from jax.experimental.pallas import tpu as pltpu

# ---------------- small, module-consistent config ----------------
B = 2            # batch
NC = 4           # n_input_channels
T = 8            # block_size (= time samples per trial)
E = 8            # n_embedding_tokens (subject tokens)
TT = E + T       # total sequence length seen by the transformer blocks
D = 32           # d_model
H = 4            # n_heads
DH = D // H      # head dim
DM = 64          # d_mlp
NLAYER = 2       # n_layers
NSUB = 4         # n_subjects
SCALE_EXP = -0.25
SCALE = float((D // H) ** SCALE_EXP)   # applied to both q and k (Whisper convention)
EPS = 1e-6                             # RMSNorm eps


# ---------------- shared math helpers (used by kernel AND reference) ----------------
def _rmsnorm(x, w):
    var = jnp.mean(x * x, axis=-1, keepdims=True)
    return x * jax.lax.rsqrt(var + EPS) * w


def _softmax(s):
    m = jnp.max(s, axis=-1, keepdims=True)
    e = jnp.exp(s - m)
    return e / jnp.sum(e, axis=-1, keepdims=True)


def _mm(a, w):
    """bf16 MXU matmul with f32 accumulation (weights already stored bf16)."""
    return jnp.dot(a.astype(jnp.bfloat16), w.astype(jnp.bfloat16),
                   preferred_element_type=jnp.float32)


def sinusoids(length, channels, max_timescale=1000):
    assert channels % 2 == 0
    log_inc = math.log(max_timescale) / (channels // 2 - 1)
    inv = jnp.exp(-log_inc * jnp.arange(channels // 2, dtype=jnp.float32))
    t = jnp.arange(length, dtype=jnp.float32)[:, None] * inv[None, :]
    return jnp.concatenate([jnp.sin(t), jnp.cos(t)], axis=1)      # (length, channels) f32


# ---------------- the fused Pallas kernel ----------------
def _encoder_kernel(xt_ref, sub_ref, pos_ref, wp_ref, bp_ref,
                    aln_ref, wq_ref, bq_ref, wk_ref, wv_ref, bv_ref, wo_ref, bo_ref,
                    mln_ref, wg_ref, wl_ref, w2_ref, lnp_ref,
                    out_ref):
    pos = pos_ref[...]                                            # (T, D) f32

    # ---- sample projection + positions + subject-token concat (flattened rows) ----
    rows = []
    for b in range(B):
        xp = _mm(xt_ref[b], wp_ref[...]) + bp_ref[...] + pos      # (T, D)
        rows.append(sub_ref[b])                                   # (E, D)
        rows.append(xp)
    x = jnp.concatenate(rows, axis=0)                             # (B*TT, D) f32

    # ---- transformer blocks (unrolled; weights stacked on a leading layer axis) ----
    for l in range(NLAYER):
        # bidirectional self-attention
        h = _rmsnorm(x, aln_ref[l])
        q = (_mm(h, wq_ref[l]) + bq_ref[l]) * SCALE
        k = _mm(h, wk_ref[l]) * SCALE                             # key projection: no bias
        v = _mm(h, wv_ref[l]) + bv_ref[l]
        outs = []
        for b in range(B):
            r = slice(b * TT, (b + 1) * TT)
            qb = q[r].astype(jnp.bfloat16)
            kb = k[r].astype(jnp.bfloat16)
            vb = v[r].astype(jnp.bfloat16)
            heads = []
            for hd in range(H):
                c = slice(hd * DH, (hd + 1) * DH)
                s = jax.lax.dot_general(qb[:, c], kb[:, c],
                                        (((1,), (1,)), ((), ())),  # contract head dim, no k.T
                                        preferred_element_type=jnp.float32)
                p = _softmax(s)
                heads.append(jnp.dot(p.astype(jnp.bfloat16), vb[:, c],
                                     preferred_element_type=jnp.float32))
            outs.append(jnp.concatenate(heads, axis=1))            # (TT, D)
        o = jnp.concatenate(outs, axis=0)                          # (B*TT, D)
        x = x + _mm(o, wo_ref[l]) + bo_ref[l]                      # single K=D out-proj matmul

        # GEGLU MLP
        h = _rmsnorm(x, mln_ref[l])
        hb = h.astype(jnp.bfloat16)
        g = jax.nn.gelu(jnp.dot(hb, wg_ref[l], preferred_element_type=jnp.float32))
        lin = jnp.dot(hb, wl_ref[l], preferred_element_type=jnp.float32)
        x = x + _mm(g * lin, w2_ref[l])

    out_ref[...] = _rmsnorm(x, lnp_ref[...])                       # (B*TT, D)


# ---------------- wrapper ----------------
def _fs(shape):
    nd = len(shape)
    return pl.BlockSpec(shape, lambda i, _nd=nd: (0,) * _nd)


def neural_encoder_forward(x, subject_ids, params):
    # glue: center on the middle sample, move channels to the lane axis, gather subject tokens
    xt = jnp.swapaxes(x - x[:, :, T // 2][:, :, None], 1, 2)       # (B, T, NC) f32
    sub = params["sub_emb"][subject_ids]                           # (B, E, D)  f32 gather

    in_specs = [
        _fs((B, T, NC)),                                           # xt
        _fs((B, E, D)),                                            # subject tokens
        _fs((T, D)),                                               # sinusoid positions
        _fs((NC, D)), _fs((1, D)),                                 # sample_proj W, b
        _fs((NLAYER, 1, D)),                                       # attn_ln
        _fs((NLAYER, D, D)), _fs((NLAYER, 1, D)),                  # wq, bq
        _fs((NLAYER, D, D)),                                       # wk (no bias)
        _fs((NLAYER, D, D)), _fs((NLAYER, 1, D)),                  # wv, bv
        _fs((NLAYER, D, D)), _fs((NLAYER, 1, D)),                  # wo, bo
        _fs((NLAYER, 1, D)),                                       # mlp_ln
        _fs((NLAYER, D, DM)), _fs((NLAYER, D, DM)), _fs((NLAYER, DM, D)),  # wg, wl, w2
        _fs((1, D)),                                               # ln_post
    ]

    out_flat = pl.pallas_call(
        _encoder_kernel,
        out_shape=jax.ShapeDtypeStruct((B * TT, D), jnp.float32),
        grid=(1,),                                                 # single fused invocation
        in_specs=in_specs,
        out_specs=_fs((B * TT, D)),
        compiler_params=pltpu.CompilerParams(dimension_semantics=("arbitrary",)),
    )(xt, sub, params["pos"], params["wp"], params["bp"],
      params["attn_ln"], params["wq"], params["bq"], params["wk"],
      params["wv"], params["bv"], params["wo"], params["bo"],
      params["mlp_ln"], params["wg"], params["wl"], params["w2"],
      params["ln_post"])
    return out_flat.reshape(B, TT, D)


# ---------------- pure-JAX reference (same math, same bf16 MXU operands) ----------------
def ref_forward(x, subject_ids, params):
    xt = jnp.swapaxes(x - x[:, :, T // 2][:, :, None], 1, 2)       # (B, T, NC)
    xp = _mm(xt.reshape(B * T, NC), params["wp"]) + params["bp"]
    xp = xp.reshape(B, T, D) + params["pos"][None]
    sub = params["sub_emb"][subject_ids]                           # (B, E, D)
    xx = jnp.concatenate([sub, xp], axis=1)                        # (B, TT, D)

    for l in range(NLAYER):
        h = _rmsnorm(xx, params["attn_ln"][l]).reshape(B * TT, D)
        q = (_mm(h, params["wq"][l]) + params["bq"][l]) * SCALE
        k = _mm(h, params["wk"][l]) * SCALE
        v = _mm(h, params["wv"][l]) + params["bv"][l]
        q = q.reshape(B, TT, H, DH).astype(jnp.bfloat16)
        k = k.reshape(B, TT, H, DH).astype(jnp.bfloat16)
        v = v.reshape(B, TT, H, DH).astype(jnp.bfloat16)
        s = jnp.einsum('bqhd,bkhd->bhqk', q, k, preferred_element_type=jnp.float32)
        p = jax.nn.softmax(s, axis=-1)
        o = jnp.einsum('bhqk,bkhd->bqhd', p.astype(jnp.bfloat16), v,
                       preferred_element_type=jnp.float32).reshape(B * TT, D)
        att = _mm(o, params["wo"][l]) + params["bo"][l]
        xx = xx + att.reshape(B, TT, D)

        h = _rmsnorm(xx, params["mlp_ln"][l]).reshape(B * TT, D).astype(jnp.bfloat16)
        g = jax.nn.gelu(jnp.dot(h, params["wg"][l], preferred_element_type=jnp.float32))
        lin = jnp.dot(h, params["wl"][l], preferred_element_type=jnp.float32)
        xx = xx + _mm(g * lin, params["w2"][l]).reshape(B, TT, D)

    return _rmsnorm(xx, params["ln_post"])


# ---------------- deterministic parameter init ----------------
def init_params(key):
    ks = iter(jax.random.split(key, 20))
    nrm = lambda shape, s: s * jax.random.normal(next(ks), shape, jnp.float32)
    bf = jnp.bfloat16
    return {
        "pos": sinusoids(T, D),                                    # fixed sinusoid positions (f32)
        "sub_emb": nrm((NSUB, E, D), 0.1),                         # Embedding3D weight (f32)
        "wp": nrm((NC, D), 0.2).astype(bf), "bp": nrm((1, D), 0.05),
        "attn_ln": 1.0 + nrm((NLAYER, 1, D), 0.05),
        "wq": nrm((NLAYER, D, D), 0.05).astype(bf), "bq": nrm((NLAYER, 1, D), 0.02),
        "wk": nrm((NLAYER, D, D), 0.05).astype(bf),                # key proj: bias-free
        "wv": nrm((NLAYER, D, D), 0.05).astype(bf), "bv": nrm((NLAYER, 1, D), 0.02),
        "wo": nrm((NLAYER, D, D), 0.05).astype(bf), "bo": nrm((NLAYER, 1, D), 0.02),
        "mlp_ln": 1.0 + nrm((NLAYER, 1, D), 0.05),
        "wg": nrm((NLAYER, D, DM), 0.05).astype(bf),
        "wl": nrm((NLAYER, D, DM), 0.05).astype(bf),
        "w2": nrm((NLAYER, DM, D), 0.05).astype(bf),
        "ln_post": 1.0 + nrm((1, D), 0.05),
    }


if __name__ == "__main__":
    root = jax.random.PRNGKey(0)
    k_par, k_x, k_sub = jax.random.split(root, 3)
    params = init_params(k_par)
    x = jax.random.normal(k_x, (B, NC, T), jnp.float32)            # raw neural samples (B, N_C, T)
    subject_ids = jax.random.randint(k_sub, (B,), 0, NSUB)

    out = neural_encoder_forward(x, subject_ids, params)
    jax.block_until_ready(out)
    assert out.shape == (B, TT, D)

    ref = ref_forward(x, subject_ids, params)
    assert jnp.allclose(out, ref, atol=1e-3, rtol=1e-3), "Pallas output mismatch vs reference"

    print("KERNEL_OK")
</pallas_src>

<mosaic_0001>
module attributes {stable_mosaic.version = 11 : i64} {
  func.func @_encoder_kernel(%arg0: i32, %arg1: memref<2x8x4xf32, #tpu.memory_space<vmem>>, %arg2: memref<2x8x32xf32, #tpu.memory_space<vmem>>, %arg3: memref<8x32xf32, #tpu.memory_space<vmem>>, %arg4: memref<4x32xbf16, #tpu.memory_space<vmem>>, %arg5: memref<1x32xf32, #tpu.memory_space<vmem>>, %arg6: memref<2x1x32xf32, #tpu.memory_space<vmem>>, %arg7: memref<2x32x32xbf16, #tpu.memory_space<vmem>>, %arg8: memref<2x1x32xf32, #tpu.memory_space<vmem>>, %arg9: memref<2x32x32xbf16, #tpu.memory_space<vmem>>, %arg10: memref<2x32x32xbf16, #tpu.memory_space<vmem>>, %arg11: memref<2x1x32xf32, #tpu.memory_space<vmem>>, %arg12: memref<2x32x32xbf16, #tpu.memory_space<vmem>>, %arg13: memref<2x1x32xf32, #tpu.memory_space<vmem>>, %arg14: memref<2x1x32xf32, #tpu.memory_space<vmem>>, %arg15: memref<2x32x64xbf16, #tpu.memory_space<vmem>>, %arg16: memref<2x32x64xbf16, #tpu.memory_space<vmem>>, %arg17: memref<2x64x32xbf16, #tpu.memory_space<vmem>>, %arg18: memref<1x32xf32, #tpu.memory_space<vmem>>, %arg19: memref<32x32xf32, #tpu.memory_space<vmem>>) attributes {dimension_semantics = [#tpu.dimension_semantics<arbitrary>], iteration_bounds = array<i64: 1>, scalar_prefetch = 0 : i64, scratch_operands = 0 : i64, tpu.core_type = #tpu.core_type<tc>, window_params = [{pipeline_mode = #tpu.pipeline_mode<synchronous>, transform_indices = @transform_0, window_bounds = array<i64: 2, 8, 4>}, {pipeline_mode = #tpu.pipeline_mode<synchronous>, transform_indices = @transform_1, window_bounds = array<i64: 2, 8, 32>}, {pipeline_mode = #tpu.pipeline_mode<synchronous>, transform_indices = @transform_2, window_bounds = array<i64: 8, 32>}, {pipeline_mode = #tpu.pipeline_mode<synchronous>, transform_indices = @transform_3, window_bounds = array<i64: 4, 32>}, {pipeline_mode = #tpu.pipeline_mode<synchronous>, transform_indices = @transform_4, window_bounds = array<i64: 1, 32>}, {pipeline_mode = #tpu.pipeline_mode<synchronous>, transform_indices = @transform_5, window_bounds = array<i64: 2, 1, 32>}, {pipeline_mode = #tpu.pipeline_mode<synchronous>, transform_indices = @transform_6, window_bounds = array<i64: 2, 32, 32>}, {pipeline_mode = #tpu.pipeline_mode<synchronous>, transform_indices = @transform_7, window_bounds = array<i64: 2, 1, 32>}, {pipeline_mode = #tpu.pipeline_mode<synchronous>, transform_indices = @transform_8, window_bounds = array<i64: 2, 32, 32>}, {pipeline_mode = #tpu.pipeline_mode<synchronous>, transform_indices = @transform_9, window_bounds = array<i64: 2, 32, 32>}, {pipeline_mode = #tpu.pipeline_mode<synchronous>, transform_indices = @transform_10, window_bounds = array<i64: 2, 1, 32>}, {pipeline_mode = #tpu.pipeline_mode<synchronous>, transform_indices = @transform_11, window_bounds = array<i64: 2, 32, 32>}, {pipeline_mode = #tpu.pipeline_mode<synchronous>, transform_indices = @transform_12, window_bounds = array<i64: 2, 1, 32>}, {pipeline_mode = #tpu.pipeline_mode<synchronous>, transform_indices = @transform_13, window_bounds = array<i64: 2, 1, 32>}, {pipeline_mode = #tpu.pipeline_mode<synchronous>, transform_indices = @transform_14, window_bounds = array<i64: 2, 32, 64>}, {pipeline_mode = #tpu.pipeline_mode<synchronous>, transform_indices = @transform_15, window_bounds = array<i64: 2, 32, 64>}, {pipeline_mode = #tpu.pipeline_mode<synchronous>, transform_indices = @transform_16, window_bounds = array<i64: 2, 64, 32>}, {pipeline_mode = #tpu.pipeline_mode<synchronous>, transform_indices = @transform_17, window_bounds = array<i64: 1, 32>}, {pipeline_mode = #tpu.pipeline_mode<synchronous>, transform_indices = @transform_18, window_bounds = array<i64: 32, 32>}]} {
    %c0 = arith.constant 0 : index
    %c0_0 = arith.constant 0 : index
    %0 = vector.load %arg3[%c0, %c0_0] : memref<8x32xf32, #tpu.memory_space<vmem>>, vector<8x32xf32>
    %c0_1 = arith.constant 0 : index
    %c0_2 = arith.constant 0 : index
    %c0_3 = arith.constant 0 : index
    %1 = vector.load %arg1[%c0_1, %c0_2, %c0_3] : memref<2x8x4xf32, #tpu.memory_space<vmem>>, vector<1x8x4xf32>
    %2 = vector.shape_cast %1 : vector<1x8x4xf32> to vector<8x4xf32>
    %c0_4 = arith.constant 0 : index
    %c0_5 = arith.constant 0 : index
    %3 = vector.load %arg4[%c0_4, %c0_5] : memref<4x32xbf16, #tpu.memory_space<vmem>>, vector<4x32xbf16>
    %4 = arith.truncf %2 : vector<8x4xf32> to vector<8x4xbf16>
    %cst = arith.constant dense<0.000000e+00> : vector<8x32xf32>
    %5 = tpu.matmul %4, %3, %cst {dimension_numbers = #tpu.dot_dimension_numbers<[1], [0], [0], [1], [0, 0, 1, 1], [], []>} : vector<8x4xbf16>, vector<4x32xbf16>, vector<8x32xf32> -> vector<8x32xf32>
    %c0_6 = arith.constant 0 : index
    %c0_7 = arith.constant 0 : index
    %6 = vector.load %arg5[%c0_6, %c0_7] : memref<1x32xf32, #tpu.memory_space<vmem>>, vector<1x32xf32>
    %7 = vector.broadcast %6 : vector<1x32xf32> to vector<8x32xf32>
    %8 = arith.addf %5, %7 : vector<8x32xf32>
    %9 = arith.addf %8, %0 : vector<8x32xf32>
    %c0_8 = arith.constant 0 : index
    %c0_9 = arith.constant 0 : index
    %c0_10 = arith.constant 0 : index
    %10 = vector.load %arg2[%c0_8, %c0_9, %c0_10] : memref<2x8x32xf32, #tpu.memory_space<vmem>>, vector<1x8x32xf32>
    %11 = vector.shape_cast %10 : vector<1x8x32xf32> to vector<8x32xf32>
    %c1 = arith.constant 1 : index
    %c0_11 = arith.constant 0 : index
    %c0_12 = arith.constant 0 : index
    %12 = vector.load %arg1[%c1, %c0_11, %c0_12] : memref<2x8x4xf32, #tpu.memory_space<vmem>>, vector<1x8x4xf32>
    %13 = vector.shape_cast %12 : vector<1x8x4xf32> to vector<8x4xf32>
    %c0_13 = arith.constant 0 : index
    %c0_14 = arith.constant 0 : index
    %14 = vector.load %arg4[%c0_13, %c0_14] : memref<4x32xbf16, #tpu.memory_space<vmem>>, vector<4x32xbf16>
    %15 = arith.truncf %13 : vector<8x4xf32> to vector<8x4xbf16>
    %cst_15 = arith.constant dense<0.000000e+00> : vector<8x32xf32>
    %16 = tpu.matmul %15, %14, %cst_15 {dimension_numbers = #tpu.dot_dimension_numbers<[1], [0], [0], [1], [0, 0, 1, 1], [], []>} : vector<8x4xbf16>, vector<4x32xbf16>, vector<8x32xf32> -> vector<8x32xf32>
    %c0_16 = arith.constant 0 : index
    %c0_17 = arith.constant 0 : index
    %17 = vector.load %arg5[%c0_16, %c0_17] : memref<1x32xf32, #tpu.memory_space<vmem>>, vector<1x32xf32>
    %18 = vector.broadcast %17 : vector<1x32xf32> to vector<8x32xf32>
    %19 = arith.addf %16, %18 : vector<8x32xf32>
    %20 = arith.addf %19, %0 : vector<8x32xf32>
    %c1_18 = arith.constant 1 : index
    %c0_19 = arith.constant 0 : index
    %c0_20 = arith.constant 0 : index
    %21 = vector.load %arg2[%c1_18, %c0_19, %c0_20] : memref<2x8x32xf32, #tpu.memory_space<vmem>>, vector<1x8x32xf32>
    %22 = vector.shape_cast %21 : vector<1x8x32xf32> to vector<8x32xf32>
    %23 = tpu.concatenate %11, %9, %22, %20 in 0 : vector<8x32xf32>, vector<8x32xf32>, vector<8x32xf32>, vector<8x32xf32> -> vector<32x32xf32>
    %c0_21 = arith.constant 0 : index
    %c0_22 = arith.constant 0 : index
    %c0_23 = arith.constant 0 : index
    %24 = vector.load %arg6[%c0_21, %c0_22, %c0_23] : memref<2x1x32xf32, #tpu.memory_space<vmem>>, vector<1x1x32xf32>
    %25 = vector.shape_cast %24 : vector<1x1x32xf32> to vector<1x32xf32>
    %26 = arith.mulf %23, %23 : vector<32x32xf32>
    %cst_24 = arith.constant dense<0.000000e+00> : vector<32xf32>
    %27 = vector.multi_reduction <add>, %26, %cst_24 [1] : vector<32x32xf32> to vector<32xf32>
    %28 = vector.shape_cast %27 : vector<32xf32> to vector<32x1xf32>
    %cst_25 = arith.constant 3.200000e+01 : f32
    %29 = vector.broadcast %cst_25 : f32 to vector<32x1xf32>
    %30 = arith.divf %28, %29 : vector<32x1xf32>
    %cst_26 = arith.constant 9.99999997E-7 : f32
    %31 = vector.broadcast %cst_26 : f32 to vector<32x1xf32>
    %32 = arith.addf %30, %31 : vector<32x1xf32>
    %33 = math.rsqrt %32 : vector<32x1xf32>
    %34 = vector.broadcast %33 : vector<32x1xf32> to vector<32x32xf32>
    %35 = arith.mulf %23, %34 : vector<32x32xf32>
    %36 = vector.broadcast %25 : vector<1x32xf32> to vector<32x32xf32>
    %37 = arith.mulf %35, %36 : vector<32x32xf32>
    %c0_27 = arith.constant 0 : index
    %c0_28 = arith.constant 0 : index
    %c0_29 = arith.constant 0 : index
    %38 = vector.load %arg7[%c0_27, %c0_28, %c0_29] : memref<2x32x32xbf16, #tpu.memory_space<vmem>>, vector<1x32x32xbf16>
    %39 = vector.shape_cast %38 : vector<1x32x32xbf16> to vector<32x32xbf16>
    %40 = arith.truncf %37 : vector<32x32xf32> to vector<32x32xbf16>
    %cst_30 = arith.constant dense<0.000000e+00> : vector<32x32xf32>
    %41 = tpu.matmul %40, %39, %cst_30 {dimension_numbers = #tpu.dot_dimension_numbers<[1], [0], [0], [1], [0, 0, 1, 1], [], []>} : vector<32x32xbf16>, vector<32x32xbf16>, vector<32x32xf32> -> vector<32x32xf32>
    %c0_31 = arith.constant 0 : index
    %c0_32 = arith.constant 0 : index
    %c0_33 = arith.constant 0 : index
    %42 = vector.load %arg8[%c0_31, %c0_32, %c0_33] : memref<2x1x32xf32, #tpu.memory_space<vmem>>, vector<1x1x32xf32>
    %43 = vector.shape_cast %42 : vector<1x1x32xf32> to vector<1x32xf32>
    %44 = vector.broadcast %43 : vector<1x32xf32> to vector<32x32xf32>
    %45 = arith.addf %41, %44 : vector<32x32xf32>
    %cst_34 = arith.constant 0.594603539 : f32
    %46 = vector.broadcast %cst_34 : f32 to vector<32x32xf32>
    %47 = arith.mulf %45, %46 : vector<32x32xf32>
    %c0_35 = arith.constant 0 : index
    %c0_36 = arith.constant 0 : index
    %c0_37 = arith.constant 0 : index
    %48 = vector.load %arg9[%c0_35, %c0_36, %c0_37] : memref<2x32x32xbf16, #tpu.memory_space<vmem>>, vector<1x32x32xbf16>
    %49 = vector.shape_cast %48 : vector<1x32x32xbf16> to vector<32x32xbf16>
    %50 = arith.truncf %37 : vector<32x32xf32> to vector<32x32xbf16>
    %cst_38 = arith.constant dense<0.000000e+00> : vector<32x32xf32>
    %51 = tpu.matmul %50, %49, %cst_38 {dimension_numbers = #tpu.dot_dimension_numbers<[1], [0], [0], [1], [0, 0, 1, 1], [], []>} : vector<32x32xbf16>, vector<32x32xbf16>, vector<32x32xf32> -> vector<32x32xf32>
    %cst_39 = arith.constant 0.594603539 : f32
    %52 = vector.broadcast %cst_39 : f32 to vector<32x32xf32>
    %53 = arith.mulf %51, %52 : vector<32x32xf32>
    %c0_40 = arith.constant 0 : index
    %c0_41 = arith.constant 0 : index
    %c0_42 = arith.constant 0 : index
    %54 = vector.load %arg10[%c0_40, %c0_41, %c0_42] : memref<2x32x32xbf16, #tpu.memory_space<vmem>>, vector<1x32x32xbf16>
    %55 = vector.shape_cast %54 : vector<1x32x32xbf16> to vector<32x32xbf16>
    %56 = arith.truncf %37 : vector<32x32xf32> to vector<32x32xbf16>
    %cst_43 = arith.constant dense<0.000000e+00> : vector<32x32xf32>
    %57 = tpu.matmul %56, %55, %cst_43 {dimension_numbers = #tpu.dot_dimension_numbers<[1], [0], [0], [1], [0, 0, 1, 1], [], []>} : vector<32x32xbf16>, vector<32x32xbf16>, vector<32x32xf32> -> vector<32x32xf32>
    %c0_44 = arith.constant 0 : index
    %c0_45 = arith.constant 0 : index
    %c0_46 = arith.constant 0 : index
    %58 = vector.load %arg11[%c0_44, %c0_45, %c0_46] : memref<2x1x32xf32, #tpu.memory_space<vmem>>, vector<1x1x32xf32>
    %59 = vector.shape_cast %58 : vector<1x1x32xf32> to vector<1x32xf32>
    %60 = vector.broadcast %59 : vector<1x32xf32> to vector<32x32xf32>
    %61 = arith.addf %57, %60 : vector<32x32xf32>
    %62 = vector.extract_strided_slice %47 {offsets = [0, 0], sizes = [16, 32], strides = [1, 1]} : vector<32x32xf32> to vector<16x32xf32>
    %63 = arith.truncf %62 : vector<16x32xf32> to vector<16x32xbf16>
    %64 = vector.extract_strided_slice %53 {offsets = [0, 0], sizes = [16, 32], strides = [1, 1]} : vector<32x32xf32> to vector<16x32xf32>
    %65 = arith.truncf %64 : vector<16x32xf32> to vector<16x32xbf16>
    %66 = vector.extract_strided_slice %61 {offsets = [0, 0], sizes = [16, 32], strides = [1, 1]} : vector<32x32xf32> to vector<16x32xf32>
    %67 = arith.truncf %66 : vector<16x32xf32> to vector<16x32xbf16>
    %68 = vector.extract_strided_slice %63 {offsets = [0, 0], sizes = [16, 8], strides = [1, 1]} : vector<16x32xbf16> to vector<16x8xbf16>
    %69 = vector.extract_strided_slice %65 {offsets = [0, 0], sizes = [16, 8], strides = [1, 1]} : vector<16x32xbf16> to vector<16x8xbf16>
    %cst_47 = arith.constant dense<0.000000e+00> : vector<16x16xf32>
    %70 = tpu.matmul %68, %69, %cst_47 {dimension_numbers = #tpu.dot_dimension_numbers<[1], [1], [0], [0], [0, 0, 1, 0], [], []>} : vector<16x8xbf16>, vector<16x8xbf16>, vector<16x16xf32> -> vector<16x16xf32>
    %cst_48 = arith.constant dense<0xFF800000> : vector<16xf32>
    %71 = vector.multi_reduction <maximumf>, %70, %cst_48 [1] : vector<16x16xf32> to vector<16xf32>
    %72 = vector.shape_cast %71 : vector<16xf32> to vector<16x1xf32>
    %73 = vector.broadcast %72 : vector<16x1xf32> to vector<16x16xf32>
    %74 = arith.subf %70, %73 : vector<16x16xf32>
    %75 = math.exp %74 : vector<16x16xf32>
    %cst_49 = arith.constant dense<0.000000e+00> : vector<16xf32>
    %76 = vector.multi_reduction <add>, %75, %cst_49 [1] : vector<16x16xf32> to vector<16xf32>
    %77 = vector.shape_cast %76 : vector<16xf32> to vector<16x1xf32>
    %78 = vector.broadcast %77 : vector<16x1xf32> to vector<16x16xf32>
    %79 = arith.divf %75, %78 : vector<16x16xf32>
    %80 = arith.truncf %79 : vector<16x16xf32> to vector<16x16xbf16>
    %81 = vector.extract_strided_slice %67 {offsets = [0, 0], sizes = [16, 8], strides = [1, 1]} : vector<16x32xbf16> to vector<16x8xbf16>
    %cst_50 = arith.constant dense<0.000000e+00> : vector<16x8xf32>
    %82 = tpu.matmul %80, %81, %cst_50 {dimension_numbers = #tpu.dot_dimension_numbers<[1], [0], [0], [1], [0, 0, 1, 1], [], []>} : vector<16x16xbf16>, vector<16x8xbf16>, vector<16x8xf32> -> vector<16x8xf32>
    %83 = vector.extract_strided_slice %63 {offsets = [0, 8], sizes = [16, 8], strides = [1, 1]} : vector<16x32xbf16> to vector<16x8xbf16>
    %84 = vector.extract_strided_slice %65 {offsets = [0, 8], sizes = [16, 8], strides = [1, 1]} : vector<16x32xbf16> to vector<16x8xbf16>
    %cst_51 = arith.constant dense<0.000000e+00> : vector<16x16xf32>
    %85 = tpu.matmul %83, %84, %cst_51 {dimension_numbers = #tpu.dot_dimension_numbers<[1], [1], [0], [0], [0, 0, 1, 0], [], []>} : vector<16x8xbf16>, vector<16x8xbf16>, vector<16x16xf32> -> vector<16x16xf32>
    %cst_52 = arith.constant dense<0xFF800000> : vector<16xf32>
    %86 = vector.multi_reduction <maximumf>, %85, %cst_52 [1] : vector<16x16xf32> to vector<16xf32>
    %87 = vector.shape_cast %86 : vector<16xf32> to vector<16x1xf32>
    %88 = vector.broadcast %87 : vector<16x1xf32> to vector<16x16xf32>
    %89 = arith.subf %85, %88 : vector<16x16xf32>
    %90 = math.exp %89 : vector<16x16xf32>
    %cst_53 = arith.constant dense<0.000000e+00> : vector<16xf32>
    %91 = vector.multi_reduction <add>, %90, %cst_53 [1] : vector<16x16xf32> to vector<16xf32>
    %92 = vector.shape_cast %91 : vector<16xf32> to vector<16x1xf32>
    %93 = vector.broadcast %92 : vector<16x1xf32> to vector<16x16xf32>
    %94 = arith.divf %90, %93 : vector<16x16xf32>
    %95 = arith.truncf %94 : vector<16x16xf32> to vector<16x16xbf16>
    %96 = vector.extract_strided_slice %67 {offsets = [0, 8], sizes = [16, 8], strides = [1, 1]} : vector<16x32xbf16> to vector<16x8xbf16>
    %cst_54 = arith.constant dense<0.000000e+00> : vector<16x8xf32>
    %97 = tpu.matmul %95, %96, %cst_54 {dimension_numbers = #tpu.dot_dimension_numbers<[1], [0], [0], [1], [0, 0, 1, 1], [], []>} : vector<16x16xbf16>, vector<16x8xbf16>, vector<16x8xf32> -> vector<16x8xf32>
    %98 = vector.extract_strided_slice %63 {offsets = [0, 16], sizes = [16, 8], strides = [1, 1]} : vector<16x32xbf16> to vector<16x8xbf16>
    %99 = vector.extract_strided_slice %65 {offsets = [0, 16], sizes = [16, 8], strides = [1, 1]} : vector<16x32xbf16> to vector<16x8xbf16>
    %cst_55 = arith.constant dense<0.000000e+00> : vector<16x16xf32>
    %100 = tpu.matmul %98, %99, %cst_55 {dimension_numbers = #tpu.dot_dimension_numbers<[1], [1], [0], [0], [0, 0, 1, 0], [], []>} : vector<16x8xbf16>, vector<16x8xbf16>, vector<16x16xf32> -> vector<16x16xf32>
    %cst_56 = arith.constant dense<0xFF800000> : vector<16xf32>
    %101 = vector.multi_reduction <maximumf>, %100, %cst_56 [1] : vector<16x16xf32> to vector<16xf32>
    %102 = vector.shape_cast %101 : vector<16xf32> to vector<16x1xf32>
    %103 = vector.broadcast %102 : vector<16x1xf32> to vector<16x16xf32>
    %104 = arith.subf %100, %103 : vector<16x16xf32>
    %105 = math.exp %104 : vector<16x16xf32>
    %cst_57 = arith.constant dense<0.000000e+00> : vector<16xf32>
    %106 = vector.multi_reduction <add>, %105, %cst_57 [1] : vector<16x16xf32> to vector<16xf32>
    %107 = vector.shape_cast %106 : vector<16xf32> to vector<16x1xf32>
    %108 = vector.broadcast %107 : vector<16x1xf32> to vector<16x16xf32>
    %109 = arith.divf %105, %108 : vector<16x16xf32>
    %110 = arith.truncf %109 : vector<16x16xf32> to vector<16x16xbf16>
    %111 = vector.extract_strided_slice %67 {offsets = [0, 16], sizes = [16, 8], strides = [1, 1]} : vector<16x32xbf16> to vector<16x8xbf16>
    %cst_58 = arith.constant dense<0.000000e+00> : vector<16x8xf32>
    %112 = tpu.matmul %110, %111, %cst_58 {dimension_numbers = #tpu.dot_dimension_numbers<[1], [0], [0], [1], [0, 0, 1, 1], [], []>} : vector<16x16xbf16>, vector<16x8xbf16>, vector<16x8xf32> -> vector<16x8xf32>
    %113 = vector.extract_strided_slice %63 {offsets = [0, 24], sizes = [16, 8], strides = [1, 1]} : vector<16x32xbf16> to vector<16x8xbf16>
    %114 = vector.extract_strided_slice %65 {offsets = [0, 24], sizes = [16, 8], strides = [1, 1]} : vector<16x32xbf16> to vector<16x8xbf16>
    %cst_59 = arith.constant dense<0.000000e+00> : vector<16x16xf32>
    %115 = tpu.matmul %113, %114, %cst_59 {dimension_numbers = #tpu.dot_dimension_numbers<[1], [1], [0], [0], [0, 0, 1, 0], [], []>} : vector<16x8xbf16>, vector<16x8xbf16>, vector<16x16xf32> -> vector<16x16xf32>
    %cst_60 = arith.constant dense<0xFF800000> : vector<16xf32>
    %116 = vector.multi_reduction <maximumf>, %115, %cst_60 [1] : vector<16x16xf32> to vector<16xf32>
    %117 = vector.shape_cast %116 : vector<16xf32> to vector<16x1xf32>
    %118 = vector.broadcast %117 : vector<16x1xf32> to vector<16x16xf32>
    %119 = arith.subf %115, %118 : vector<16x16xf32>
    %120 = math.exp %119 : vector<16x16xf32>
    %cst_61 = arith.constant dense<0.000000e+00> : vector<16xf32>
    %121 = vector.multi_reduction <add>, %120, %cst_61 [1] : vector<16x16xf32> to vector<16xf32>
    %122 = vector.shape_cast %121 : vector<16xf32> to vector<16x1xf32>
    %123 = vector.broadcast %122 : vector<16x1xf32> to vector<16x16xf32>
    %124 = arith.divf %120, %123 : vector<16x16xf32>
    %125 = arith.truncf %124 : vector<16x16xf32> to vector<16x16xbf16>
    %126 = vector.extract_strided_slice %67 {offsets = [0, 24], sizes = [16, 8], strides = [1, 1]} : vector<16x32xbf16> to vector<16x8xbf16>
    %cst_62 = arith.constant dense<0.000000e+00> : vector<16x8xf32>
    %127 = tpu.matmul %125, %126, %cst_62 {dimension_numbers = #tpu.dot_dimension_numbers<[1], [0], [0], [1], [0, 0, 1, 1], [], []>} : vector<16x16xbf16>, vector<16x8xbf16>, vector<16x8xf32> -> vector<16x8xf32>
    %128 = tpu.concatenate %82, %97, %112, %127 in 1 : vector<16x8xf32>, vector<16x8xf32>, vector<16x8xf32>, vector<16x8xf32> -> vector<16x32xf32>
    %129 = vector.extract_strided_slice %47 {offsets = [16, 0], sizes = [16, 32], strides = [1, 1]} : vector<32x32xf32> to vector<16x32xf32>
    %130 = arith.truncf %129 : vector<16x32xf32> to vector<16x32xbf16>
    %131 = vector.extract_strided_slice %53 {offsets = [16, 0], sizes = [16, 32], strides = [1, 1]} : vector<32x32xf32> to vector<16x32xf32>
    %132 = arith.truncf %131 : vector<16x32xf32> to vector<16x32xbf16>
    %133 = vector.extract_strided_slice %61 {offsets = [16, 0], sizes = [16, 32], strides = [1, 1]} : vector<32x32xf32> to vector<16x32xf32>
    %134 = arith.truncf %133 : vector<16x32xf32> to vector<16x32xbf16>
    %135 = vector.extract_strided_slice %130 {offsets = [0, 0], sizes = [16, 8], strides = [1, 1]} : vector<16x32xbf16> to vector<16x8xbf16>
    %136 = vector.extract_strided_slice %132 {offsets = [0, 0], sizes = [16, 8], strides = [1, 1]} : vector<16x32xbf16> to vector<16x8xbf16>
    %cst_63 = arith.constant dense<0.000000e+00> : vector<16x16xf32>
    %137 = tpu.matmul %135, %136, %cst_63 {dimension_numbers = #tpu.dot_dimension_numbers<[1], [1], [0], [0], [0, 0, 1, 0], [], []>} : vector<16x8xbf16>, vector<16x8xbf16>, vector<16x16xf32> -> vector<16x16xf32>
    %cst_64 = arith.constant dense<0xFF800000> : vector<16xf32>
    %138 = vector.multi_reduction <maximumf>, %137, %cst_64 [1] : vector<16x16xf32> to vector<16xf32>
    %139 = vector.shape_cast %138 : vector<16xf32> to vector<16x1xf32>
    %140 = vector.broadcast %139 : vector<16x1xf32> to vector<16x16xf32>
    %141 = arith.subf %137, %140 : vector<16x16xf32>
    %142 = math.exp %141 : vector<16x16xf32>
    %cst_65 = arith.constant dense<0.000000e+00> : vector<16xf32>
    %143 = vector.multi_reduction <add>, %142, %cst_65 [1] : vector<16x16xf32> to vector<16xf32>
    %144 = vector.shape_cast %143 : vector<16xf32> to vector<16x1xf32>
    %145 = vector.broadcast %144 : vector<16x1xf32> to vector<16x16xf32>
    %146 = arith.divf %142, %145 : vector<16x16xf32>
    %147 = arith.truncf %146 : vector<16x16xf32> to vector<16x16xbf16>
    %148 = vector.extract_strided_slice %134 {offsets = [0, 0], sizes = [16, 8], strides = [1, 1]} : vector<16x32xbf16> to vector<16x8xbf16>
    %cst_66 = arith.constant dense<0.000000e+00> : vector<16x8xf32>
    %149 = tpu.matmul %147, %148, %cst_66 {dimension_numbers = #tpu.dot_dimension_numbers<[1], [0], [0], [1], [0, 0, 1, 1], [], []>} : vector<16x16xbf16>, vector<16x8xbf16>, vector<16x8xf32> -> vector<16x8xf32>
    %150 = vector.extract_strided_slice %130 {offsets = [0, 8], sizes = [16, 8], strides = [1, 1]} : vector<16x32xbf16> to vector<16x8xbf16>
    %151 = vector.extract_strided_slice %132 {offsets = [0, 8], sizes = [16, 8], strides = [1, 1]} : vector<16x32xbf16> to vector<16x8xbf16>
    %cst_67 = arith.constant dense<0.000000e+00> : vector<16x16xf32>
    %152 = tpu.matmul %150, %151, %cst_67 {dimension_numbers = #tpu.dot_dimension_numbers<[1], [1], [0], [0], [0, 0, 1, 0], [], []>} : vector<16x8xbf16>, vector<16x8xbf16>, vector<16x16xf32> -> vector<16x16xf32>
    %cst_68 = arith.constant dense<0xFF800000> : vector<16xf32>
    %153 = vector.multi_reduction <maximumf>, %152, %cst_68 [1] : vector<16x16xf32> to vector<16xf32>
    %154 = vector.shape_cast %153 : vector<16xf32> to vector<16x1xf32>
    %155 = vector.broadcast %154 : vector<16x1xf32> to vector<16x16xf32>
    %156 = arith.subf %152, %155 : vector<16x16xf32>
    %157 = math.exp %156 : vector<16x16xf32>
    %cst_69 = arith.constant dense<0.000000e+00> : vector<16xf32>
    %158 = vector.multi_reduction <add>, %157, %cst_69 [1] : vector<16x16xf32> to vector<16xf32>
    %159 = vector.shape_cast %158 : vector<16xf32> to vector<16x1xf32>
    %160 = vector.broadcast %159 : vector<16x1xf32> to vector<16x16xf32>
    %161 = arith.divf %157, %160 : vector<16x16xf32>
    %162 = arith.truncf %161 : vector<16x16xf32> to vector<16x16xbf16>
    %163 = vector.extract_strided_slice %134 {offsets = [0, 8], sizes = [16, 8], strides = [1, 1]} : vector<16x32xbf16> to vector<16x8xbf16>
    %cst_70 = arith.constant dense<0.000000e+00> : vector<16x8xf32>
    %164 = tpu.matmul %162, %163, %cst_70 {dimension_numbers = #tpu.dot_dimension_numbers<[1], [0], [0], [1], [0, 0, 1, 1], [], []>} : vector<16x16xbf16>, vector<16x8xbf16>, vector<16x8xf32> -> vector<16x8xf32>
    %165 = vector.extract_strided_slice %130 {offsets = [0, 16], sizes = [16, 8], strides = [1, 1]} : vector<16x32xbf16> to vector<16x8xbf16>
    %166 = vector.extract_strided_slice %132 {offsets = [0, 16], sizes = [16, 8], strides = [1, 1]} : vector<16x32xbf16> to vector<16x8xbf16>
    %cst_71 = arith.constant dense<0.000000e+00> : vector<16x16xf32>
    %167 = tpu.matmul %165, %166, %cst_71 {dimension_numbers = #tpu.dot_dimension_numbers<[1], [1], [0], [0], [0, 0, 1, 0], [], []>} : vector<16x8xbf16>, vector<16x8xbf16>, vector<16x16xf32> -> vector<16x16xf32>
    %cst_72 = arith.constant dense<0xFF800000> : vector<16xf32>
    %168 = vector.multi_reduction <maximumf>, %167, %cst_72 [1] : vector<16x16xf32> to vector<16xf32>
    %169 = vector.shape_cast %168 : vector<16xf32> to vector<16x1xf32>
    %170 = vector.broadcast %169 : vector<16x1xf32> to vector<16x16xf32>
    %171 = arith.subf %167, %170 : vector<16x16xf32>
    %172 = math.exp %171 : vector<16x16xf32>
    %cst_73 = arith.constant dense<0.000000e+00> : vector<16xf32>
    %173 = vector.multi_reduction <add>, %172, %cst_73 [1] : vector<16x16xf32> to vector<16xf32>
    %174 = vector.shape_cast %173 : vector<16xf32> to vector<16x1xf32>
    %175 = vector.broadcast %174 : vector<16x1xf32> to vector<16x16xf32>
    %176 = arith.divf %172, %175 : vector<16x16xf32>
    %177 = arith.truncf %176 : vector<16x16xf32> to vector<16x16xbf16>
    %178 = vector.extract_strided_slice %134 {offsets = [0, 16], sizes = [16, 8], strides = [1, 1]} : vector<16x32xbf16> to vector<16x8xbf16>
    %cst_74 = arith.constant dense<0.000000e+00> : vector<16x8xf32>
    %179 = tpu.matmul %177, %178, %cst_74 {dimension_numbers = #tpu.dot_dimension_numbers<[1], [0], [0], [1], [0, 0, 1, 1], [], []>} : vector<16x16xbf16>, vector<16x8xbf16>, vector<16x8xf32> -> vector<16x8xf32>
    %180 = vector.extract_strided_slice %130 {offsets = [0, 24], sizes = [16, 8], strides = [1, 1]} : vector<16x32xbf16> to vector<16x8xbf16>
    %181 = vector.extract_strided_slice %132 {offsets = [0, 24], sizes = [16, 8], strides = [1, 1]} : vector<16x32xbf16> to vector<16x8xbf16>
    %cst_75 = arith.constant dense<0.000000e+00> : vector<16x16xf32>
    %182 = tpu.matmul %180, %181, %cst_75 {dimension_numbers = #tpu.dot_dimension_numbers<[1], [1], [0], [0], [0, 0, 1, 0], [], []>} : vector<16x8xbf16>, vector<16x8xbf16>, vector<16x16xf32> -> vector<16x16xf32>
    %cst_76 = arith.constant dense<0xFF800000> : vector<16xf32>
    %183 = vector.multi_reduction <maximumf>, %182, %cst_76 [1] : vector<16x16xf32> to vector<16xf32>
    %184 = vector.shape_cast %183 : vector<16xf32> to vector<16x1xf32>
    %185 = vector.broadcast %184 : vector<16x1xf32> to vector<16x16xf32>
    %186 = arith.subf %182, %185 : vector<16x16xf32>
    %187 = math.exp %186 : vector<16x16xf32>
    %cst_77 = arith.constant dense<0.000000e+00> : vector<16xf32>
    %188 = vector.multi_reduction <add>, %187, %cst_77 [1] : vector<16x16xf32> to vector<16xf32>
    %189 = vector.shape_cast %188 : vector<16xf32> to vector<16x1xf32>
    %190 = vector.broadcast %189 : vector<16x1xf32> to vector<16x16xf32>
    %191 = arith.divf %187, %190 : vector<16x16xf32>
    %192 = arith.truncf %191 : vector<16x16xf32> to vector<16x16xbf16>
    %193 = vector.extract_strided_slice %134 {offsets = [0, 24], sizes = [16, 8], strides = [1, 1]} : vector<16x32xbf16> to vector<16x8xbf16>
    %cst_78 = arith.constant dense<0.000000e+00> : vector<16x8xf32>
    %194 = tpu.matmul %192, %193, %cst_78 {dimension_numbers = #tpu.dot_dimension_numbers<[1], [0], [0], [1], [0, 0, 1, 1], [], []>} : vector<16x16xbf16>, vector<16x8xbf16>, vector<16x8xf32> -> vector<16x8xf32>
    %195 = tpu.concatenate %149, %164, %179, %194 in 1 : vector<16x8xf32>, vector<16x8xf32>, vector<16x8xf32>, vector<16x8xf32> -> vector<16x32xf32>
    %196 = tpu.concatenate %128, %195 in 0 : vector<16x32xf32>, vector<16x32xf32> -> vector<32x32xf32>
    %c0_79 = arith.constant 0 : index
    %c0_80 = arith.constant 0 : index
    %c0_81 = arith.constant 0 : index
    %197 = vector.load %arg12[%c0_79, %c0_80, %c0_81] : memref<2x32x32xbf16, #tpu.memory_space<vmem>>, vector<1x32x32xbf16>
    %198 = vector.shape_cast %197 : vector<1x32x32xbf16> to vector<32x32xbf16>
    %199 = arith.truncf %196 : vector<32x32xf32> to vector<32x32xbf16>
    %cst_82 = arith.constant dense<0.000000e+00> : vector<32x32xf32>
    %200 = tpu.matmul %199, %198, %cst_82 {dimension_numbers = #tpu.dot_dimension_numbers<[1], [0], [0], [1], [0, 0, 1, 1], [], []>} : vector<32x32xbf16>, vector<32x32xbf16>, vector<32x32xf32> -> vector<32x32xf32>
    %201 = arith.addf %23, %200 : vector<32x32xf32>
    %c0_83 = arith.constant 0 : index
    %c0_84 = arith.constant 0 : index
    %c0_85 = arith.constant 0 : index
    %202 = vector.load %arg13[%c0_83, %c0_84, %c0_85] : memref<2x1x32xf32, #tpu.memory_space<vmem>>, vector<1x1x32xf32>
    %203 = vector.shape_cast %202 : vector<1x1x32xf32> to vector<1x32xf32>
    %204 = vector.broadcast %203 : vector<1x32xf32> to vector<32x32xf32>
    %205 = arith.addf %201, %204 : vector<32x32xf32>
    %c0_86 = arith.constant 0 : index
    %c0_87 = arith.constant 0 : index
    %c0_88 = arith.constant 0 : index
    %206 = vector.load %arg14[%c0_86, %c0_87, %c0_88] : memref<2x1x32xf32, #tpu.memory_space<vmem>>, vector<1x1x32xf32>
    %207 = vector.shape_cast %206 : vector<1x1x32xf32> to vector<1x32xf32>
    %208 = arith.mulf %205, %205 : vector<32x32xf32>
    %cst_89 = arith.constant dense<0.000000e+00> : vector<32xf32>
    %209 = vector.multi_reduction <add>, %208, %cst_89 [1] : vector<32x32xf32> to vector<32xf32>
    %210 = vector.shape_cast %209 : vector<32xf32> to vector<32x1xf32>
    %cst_90 = arith.constant 3.200000e+01 : f32
    %211 = vector.broadcast %cst_90 : f32 to vector<32x1xf32>
    %212 = arith.divf %210, %211 : vector<32x1xf32>
    %cst_91 = arith.constant 9.99999997E-7 : f32
    %213 = vector.broadcast %cst_91 : f32 to vector<32x1xf32>
    %214 = arith.addf %212, %213 : vector<32x1xf32>
    %215 = math.rsqrt %214 : vector<32x1xf32>
    %216 = vector.broadcast %215 : vector<32x1xf32> to vector<32x32xf32>
    %217 = arith.mulf %205, %216 : vector<32x32xf32>
    %218 = vector.broadcast %207 : vector<1x32xf32> to vector<32x32xf32>
    %219 = arith.mulf %217, %218 : vector<32x32xf32>
    %220 = arith.truncf %219 : vector<32x32xf32> to vector<32x32xbf16>
    %c0_92 = arith.constant 0 : index
    %c0_93 = arith.constant 0 : index
    %c0_94 = arith.constant 0 : index
    %221 = vector.load %arg15[%c0_92, %c0_93, %c0_94] : memref<2x32x64xbf16, #tpu.memory_space<vmem>>, vector<1x32x64xbf16>
    %222 = vector.shape_cast %221 : vector<1x32x64xbf16> to vector<32x64xbf16>
    %cst_95 = arith.constant dense<0.000000e+00> : vector<32x64xf32>
    %223 = tpu.matmul %220, %222, %cst_95 {dimension_numbers = #tpu.dot_dimension_numbers<[1], [0], [0], [1], [0, 0, 1, 1], [], []>} : vector<32x32xbf16>, vector<32x64xbf16>, vector<32x64xf32> -> vector<32x64xf32>
    %224 = arith.mulf %223, %223 : vector<32x64xf32>
    %225 = arith.mulf %223, %224 : vector<32x64xf32>
    %cst_96 = arith.constant 4.471500e-02 : f32
    %226 = vector.broadcast %cst_96 : f32 to vector<32x64xf32>
    %227 = arith.mulf %226, %225 : vector<32x64xf32>
    %228 = arith.addf %223, %227 : vector<32x64xf32>
    %cst_97 = arith.constant 0.797884583 : f32
    %229 = vector.broadcast %cst_97 : f32 to vector<32x64xf32>
    %230 = arith.mulf %229, %228 : vector<32x64xf32>
    %231 = math.tanh %230 : vector<32x64xf32>
    %cst_98 = arith.constant 1.000000e+00 : f32
    %232 = vector.broadcast %cst_98 : f32 to vector<32x64xf32>
    %233 = arith.addf %232, %231 : vector<32x64xf32>
    %cst_99 = arith.constant 5.000000e-01 : f32
    %234 = vector.broadcast %cst_99 : f32 to vector<32x64xf32>
    %235 = arith.mulf %234, %233 : vector<32x64xf32>
    %236 = arith.mulf %223, %235 : vector<32x64xf32>
    %c0_100 = arith.constant 0 : index
    %c0_101 = arith.constant 0 : index
    %c0_102 = arith.constant 0 : index
    %237 = vector.load %arg16[%c0_100, %c0_101, %c0_102] : memref<2x32x64xbf16, #tpu.memory_space<vmem>>, vector<1x32x64xbf16>
    %238 = vector.shape_cast %237 : vector<1x32x64xbf16> to vector<32x64xbf16>
    %cst_103 = arith.constant dense<0.000000e+00> : vector<32x64xf32>
    %239 = tpu.matmul %220, %238, %cst_103 {dimension_numbers = #tpu.dot_dimension_numbers<[1], [0], [0], [1], [0, 0, 1, 1], [], []>} : vector<32x32xbf16>, vector<32x64xbf16>, vector<32x64xf32> -> vector<32x64xf32>
    %240 = arith.mulf %236, %239 : vector<32x64xf32>
    %c0_104 = arith.constant 0 : index
    %c0_105 = arith.constant 0 : index
    %c0_106 = arith.constant 0 : index
    %241 = vector.load %arg17[%c0_104, %c0_105, %c0_106] : memref<2x64x32xbf16, #tpu.memory_space<vmem>>, vector<1x64x32xbf16>
    %242 = vector.shape_cast %241 : vector<1x64x32xbf16> to vector<64x32xbf16>
    %243 = arith.truncf %240 : vector<32x64xf32> to vector<32x64xbf16>
    %cst_107 = arith.constant dense<0.000000e+00> : vector<32x32xf32>
    %244 = tpu.matmul %243, %242, %cst_107 {dimension_numbers = #tpu.dot_dimension_numbers<[1], [0], [0], [1], [0, 0, 1, 1], [], []>} : vector<32x64xbf16>, vector<64x32xbf16>, vector<32x32xf32> -> vector<32x32xf32>
    %245 = arith.addf %205, %244 : vector<32x32xf32>
    %c1_108 = arith.constant 1 : index
    %c0_109 = arith.constant 0 : index
    %c0_110 = arith.constant 0 : index
    %246 = vector.load %arg6[%c1_108, %c0_109, %c0_110] : memref<2x1x32xf32, #tpu.memory_space<vmem>>, vector<1x1x32xf32>
    %247 = vector.shape_cast %246 : vector<1x1x32xf32> to vector<1x32xf32>
    %248 = arith.mulf %245, %245 : vector<32x32xf32>
    %cst_111 = arith.constant dense<0.000000e+00> : vector<32xf32>
    %249 = vector.multi_reduction <add>, %248, %cst_111 [1] : vector<32x32xf32> to vector<32xf32>
    %250 = vector.shape_cast %249 : vector<32xf32> to vector<32x1xf32>
    %cst_112 = arith.constant 3.200000e+01 : f32
    %251 = vector.broadcast %cst_112 : f32 to vector<32x1xf32>
    %252 = arith.divf %250, %251 : vector<32x1xf32>
    %cst_113 = arith.constant 9.99999997E-7 : f32
    %253 = vector.broadcast %cst_113 : f32 to vector<32x1xf32>
    %254 = arith.addf %252, %253 : vector<32x1xf32>
    %255 = math.rsqrt %254 : vector<32x1xf32>
    %256 = vector.broadcast %255 : vector<32x1xf32> to vector<32x32xf32>
    %257 = arith.mulf %245, %256 : vector<32x32xf32>
    %258 = vector.broadcast %247 : vector<1x32xf32> to vector<32x32xf32>
    %259 = arith.mulf %257, %258 : vector<32x32xf32>
    %c1_114 = arith.constant 1 : index
    %c0_115 = arith.constant 0 : index
    %c0_116 = arith.constant 0 : index
    %260 = vector.load %arg7[%c1_114, %c0_115, %c0_116] : memref<2x32x32xbf16, #tpu.memory_space<vmem>>, vector<1x32x32xbf16>
    %261 = vector.shape_cast %260 : vector<1x32x32xbf16> to vector<32x32xbf16>
    %262 = arith.truncf %259 : vector<32x32xf32> to vector<32x32xbf16>
    %cst_117 = arith.constant dense<0.000000e+00> : vector<32x32xf32>
    %263 = tpu.matmul %262, %261, %cst_117 {dimension_numbers = #tpu.dot_dimension_numbers<[1], [0], [0], [1], [0, 0, 1, 1], [], []>} : vector<32x32xbf16>, vector<32x32xbf16>, vector<32x32xf32> -> vector<32x32xf32>
    %c1_118 = arith.constant 1 : index
    %c0_119 = arith.constant 0 : index
    %c0_120 = arith.constant 0 : index
    %264 = vector.load %arg8[%c1_118, %c0_119, %c0_120] : memref<2x1x32xf32, #tpu.memory_space<vmem>>, vector<1x1x32xf32>
    %265 = vector.shape_cast %264 : vector<1x1x32xf32> to vector<1x32xf32>
    %266 = vector.broadcast %265 : vector<1x32xf32> to vector<32x32xf32>
    %267 = arith.addf %263, %266 : vector<32x32xf32>
    %cst_121 = arith.constant 0.594603539 : f32
    %268 = vector.broadcast %cst_121 : f32 to vector<32x32xf32>
    %269 = arith.mulf %267, %268 : vector<32x32xf32>
    %c1_122 = arith.constant 1 : index
    %c0_123 = arith.constant 0 : index
    %c0_124 = arith.constant 0 : index
    %270 = vector.load %arg9[%c1_122, %c0_123, %c0_124] : memref<2x32x32xbf16, #tpu.memory_space<vmem>>, vector<1x32x32xbf16>
    %271 = vector.shape_cast %270 : vector<1x32x32xbf16> to vector<32x32xbf16>
    %272 = arith.truncf %259 : vector<32x32xf32> to vector<32x32xbf16>
    %cst_125 = arith.constant dense<0.000000e+00> : vector<32x32xf32>
    %273 = tpu.matmul %272, %271, %cst_125 {dimension_numbers = #tpu.dot_dimension_numbers<[1], [0], [0], [1], [0, 0, 1, 1], [], []>} : vector<32x32xbf16>, vector<32x32xbf16>, vector<32x32xf32> -> vector<32x32xf32>
    %cst_126 = arith.constant 0.594603539 : f32
    %274 = vector.broadcast %cst_126 : f32 to vector<32x32xf32>
    %275 = arith.mulf %273, %274 : vector<32x32xf32>
    %c1_127 = arith.constant 1 : index
    %c0_128 = arith.constant 0 : index
    %c0_129 = arith.constant 0 : index
    %276 = vector.load %arg10[%c1_127, %c0_128, %c0_129] : memref<2x32x32xbf16, #tpu.memory_space<vmem>>, vector<1x32x32xbf16>
    %277 = vector.shape_cast %276 : vector<1x32x32xbf16> to vector<32x32xbf16>
    %278 = arith.truncf %259 : vector<32x32xf32> to vector<32x32xbf16>
    %cst_130 = arith.constant dense<0.000000e+00> : vector<32x32xf32>
    %279 = tpu.matmul %278, %277, %cst_130 {dimension_numbers = #tpu.dot_dimension_numbers<[1], [0], [0], [1], [0, 0, 1, 1], [], []>} : vector<32x32xbf16>, vector<32x32xbf16>, vector<32x32xf32> -> vector<32x32xf32>
    %c1_131 = arith.constant 1 : index
    %c0_132 = arith.constant 0 : index
    %c0_133 = arith.constant 0 : index
    %280 = vector.load %arg11[%c1_131, %c0_132, %c0_133] : memref<2x1x32xf32, #tpu.memory_space<vmem>>, vector<1x1x32xf32>
    %281 = vector.shape_cast %280 : vector<1x1x32xf32> to vector<1x32xf32>
    %282 = vector.broadcast %281 : vector<1x32xf32> to vector<32x32xf32>
    %283 = arith.addf %279, %282 : vector<32x32xf32>
    %284 = vector.extract_strided_slice %269 {offsets = [0, 0], sizes = [16, 32], strides = [1, 1]} : vector<32x32xf32> to vector<16x32xf32>
    %285 = arith.truncf %284 : vector<16x32xf32> to vector<16x32xbf16>
    %286 = vector.extract_strided_slice %275 {offsets = [0, 0], sizes = [16, 32], strides = [1, 1]} : vector<32x32xf32> to vector<16x32xf32>
    %287 = arith.truncf %286 : vector<16x32xf32> to vector<16x32xbf16>
    %288 = vector.extract_strided_slice %283 {offsets = [0, 0], sizes = [16, 32], strides = [1, 1]} : vector<32x32xf32> to vector<16x32xf32>
    %289 = arith.truncf %288 : vector<16x32xf32> to vector<16x32xbf16>
    %290 = vector.extract_strided_slice %285 {offsets = [0, 0], sizes = [16, 8], strides = [1, 1]} : vector<16x32xbf16> to vector<16x8xbf16>
    %291 = vector.extract_strided_slice %287 {offsets = [0, 0], sizes = [16, 8], strides = [1, 1]} : vector<16x32xbf16> to vector<16x8xbf16>
    %cst_134 = arith.constant dense<0.000000e+00> : vector<16x16xf32>
    %292 = tpu.matmul %290, %291, %cst_134 {dimension_numbers = #tpu.dot_dimension_numbers<[1], [1], [0], [0], [0, 0, 1, 0], [], []>} : vector<16x8xbf16>, vector<16x8xbf16>, vector<16x16xf32> -> vector<16x16xf32>
    %cst_135 = arith.constant dense<0xFF800000> : vector<16xf32>
    %293 = vector.multi_reduction <maximumf>, %292, %cst_135 [1] : vector<16x16xf32> to vector<16xf32>
    %294 = vector.shape_cast %293 : vector<16xf32> to vector<16x1xf32>
    %295 = vector.broadcast %294 : vector<16x1xf32> to vector<16x16xf32>
    %296 = arith.subf %292, %295 : vector<16x16xf32>
    %297 = math.exp %296 : vector<16x16xf32>
    %cst_136 = arith.constant dense<0.000000e+00> : vector<16xf32>
    %298 = vector.multi_reduction <add>, %297, %cst_136 [1] : vector<16x16xf32> to vector<16xf32>
    %299 = vector.shape_cast %298 : vector<16xf32> to vector<16x1xf32>
    %300 = vector.broadcast %299 : vector<16x1xf32> to vector<16x16xf32>
    %301 = arith.divf %297, %300 : vector<16x16xf32>
    %302 = arith.truncf %301 : vector<16x16xf32> to vector<16x16xbf16>
    %303 = vector.extract_strided_slice %289 {offsets = [0, 0], sizes = [16, 8], strides = [1, 1]} : vector<16x32xbf16> to vector<16x8xbf16>
    %cst_137 = arith.constant dense<0.000000e+00> : vector<16x8xf32>
    %304 = tpu.matmul %302, %303, %cst_137 {dimension_numbers = #tpu.dot_dimension_numbers<[1], [0], [0], [1], [0, 0, 1, 1], [], []>} : vector<16x16xbf16>, vector<16x8xbf16>, vector<16x8xf32> -> vector<16x8xf32>
    %305 = vector.extract_strided_slice %285 {offsets = [0, 8], sizes = [16, 8], strides = [1, 1]} : vector<16x32xbf16> to vector<16x8xbf16>
    %306 = vector.extract_strided_slice %287 {offsets = [0, 8], sizes = [16, 8], strides = [1, 1]} : vector<16x32xbf16> to vector<16x8xbf16>
    %cst_138 = arith.constant dense<0.000000e+00> : vector<16x16xf32>
    %307 = tpu.matmul %305, %306, %cst_138 {dimension_numbers = #tpu.dot_dimension_numbers<[1], [1], [0], [0], [0, 0, 1, 0], [], []>} : vector<16x8xbf16>, vector<16x8xbf16>, vector<16x16xf32> -> vector<16x16xf32>
    %cst_139 = arith.constant dense<0xFF800000> : vector<16xf32>
    %308 = vector.multi_reduction <maximumf>, %307, %cst_139 [1] : vector<16x16xf32> to vector<16xf32>
    %309 = vector.shape_cast %308 : vector<16xf32> to vector<16x1xf32>
    %310 = vector.broadcast %309 : vector<16x1xf32> to vector<16x16xf32>
    %311 = arith.subf %307, %310 : vector<16x16xf32>
    %312 = math.exp %311 : vector<16x16xf32>
    %cst_140 = arith.constant dense<0.000000e+00> : vector<16xf32>
    %313 = vector.multi_reduction <add>, %312, %cst_140 [1] : vector<16x16xf32> to vector<16xf32>
    %314 = vector.shape_cast %313 : vector<16xf32> to vector<16x1xf32>
    %315 = vector.broadcast %314 : vector<16x1xf32> to vector<16x16xf32>
    %316 = arith.divf %312, %315 : vector<16x16xf32>
    %317 = arith.truncf %316 : vector<16x16xf32> to vector<16x16xbf16>
    %318 = vector.extract_strided_slice %289 {offsets = [0, 8], sizes = [16, 8], strides = [1, 1]} : vector<16x32xbf16> to vector<16x8xbf16>
    %cst_141 = arith.constant dense<0.000000e+00> : vector<16x8xf32>
    %319 = tpu.matmul %317, %318, %cst_141 {dimension_numbers = #tpu.dot_dimension_numbers<[1], [0], [0], [1], [0, 0, 1, 1], [], []>} : vector<16x16xbf16>, vector<16x8xbf16>, vector<16x8xf32> -> vector<16x8xf32>
    %320 = vector.extract_strided_slice %285 {offsets = [0, 16], sizes = [16, 8], strides = [1, 1]} : vector<16x32xbf16> to vector<16x8xbf16>
    %321 = vector.extract_strided_slice %287 {offsets = [0, 16], sizes = [16, 8], strides = [1, 1]} : vector<16x32xbf16> to vector<16x8xbf16>
    %cst_142 = arith.constant dense<0.000000e+00> : vector<16x16xf32>
    %322 = tpu.matmul %320, %321, %cst_142 {dimension_numbers = #tpu.dot_dimension_numbers<[1], [1], [0], [0], [0, 0, 1, 0], [], []>} : vector<16x8xbf16>, vector<16x8xbf16>, vector<16x16xf32> -> vector<16x16xf32>
    %cst_143 = arith.constant dense<0xFF800000> : vector<16xf32>
    %323 = vector.multi_reduction <maximumf>, %322, %cst_143 [1] : vector<16x16xf32> to vector<16xf32>
    %324 = vector.shape_cast %323 : vector<16xf32> to vector<16x1xf32>
    %325 = vector.broadcast %324 : vector<16x1xf32> to vector<16x16xf32>
    %326 = arith.subf %322, %325 : vector<16x16xf32>
    %327 = math.exp %326 : vector<16x16xf32>
    %cst_144 = arith.constant dense<0.000000e+00> : vector<16xf32>
    %328 = vector.multi_reduction <add>, %327, %cst_144 [1] : vector<16x16xf32> to vector<16xf32>
    %329 = vector.shape_cast %328 : vector<16xf32> to vector<16x1xf32>
    %330 = vector.broadcast %329 : vector<16x1xf32> to vector<16x16xf32>
    %331 = arith.divf %327, %330 : vector<16x16xf32>
    %332 = arith.truncf %331 : vector<16x16xf32> to vector<16x16xbf16>
    %333 = vector.extract_strided_slice %289 {offsets = [0, 16], sizes = [16, 8], strides = [1, 1]} : vector<16x32xbf16> to vector<16x8xbf16>
    %cst_145 = arith.constant dense<0.000000e+00> : vector<16x8xf32>
    %334 = tpu.matmul %332, %333, %cst_145 {dimension_numbers = #tpu.dot_dimension_numbers<[1], [0], [0], [1], [0, 0, 1, 1], [], []>} : vector<16x16xbf16>, vector<16x8xbf16>, vector<16x8xf32> -> vector<16x8xf32>
    %335 = vector.extract_strided_slice %285 {offsets = [0, 24], sizes = [16, 8], strides = [1, 1]} : vector<16x32xbf16> to vector<16x8xbf16>
    %336 = vector.extract_strided_slice %287 {offsets = [0, 24], sizes = [16, 8], strides = [1, 1]} : vector<16x32xbf16> to vector<16x8xbf16>
    %cst_146 = arith.constant dense<0.000000e+00> : vector<16x16xf32>
    %337 = tpu.matmul %335, %336, %cst_146 {dimension_numbers = #tpu.dot_dimension_numbers<[1], [1], [0], [0], [0, 0, 1, 0], [], []>} : vector<16x8xbf16>, vector<16x8xbf16>, vector<16x16xf32> -> vector<16x16xf32>
    %cst_147 = arith.constant dense<0xFF800000> : vector<16xf32>
    %338 = vector.multi_reduction <maximumf>, %337, %cst_147 [1] : vector<16x16xf32> to vector<16xf32>
    %339 = vector.shape_cast %338 : vector<16xf32> to vector<16x1xf32>
    %340 = vector.broadcast %339 : vector<16x1xf32> to vector<16x16xf32>
    %341 = arith.subf %337, %340 : vector<16x16xf32>
    %342 = math.exp %341 : vector<16x16xf32>
    %cst_148 = arith.constant dense<0.000000e+00> : vector<16xf32>
    %343 = vector.multi_reduction <add>, %342, %cst_148 [1] : vector<16x16xf32> to vector<16xf32>
    %344 = vector.shape_cast %343 : vector<16xf32> to vector<16x1xf32>
    %345 = vector.broadcast %344 : vector<16x1xf32> to vector<16x16xf32>
    %346 = arith.divf %342, %345 : vector<16x16xf32>
    %347 = arith.truncf %346 : vector<16x16xf32> to vector<16x16xbf16>
    %348 = vector.extract_strided_slice %289 {offsets = [0, 24], sizes = [16, 8], strides = [1, 1]} : vector<16x32xbf16> to vector<16x8xbf16>
    %cst_149 = arith.constant dense<0.000000e+00> : vector<16x8xf32>
    %349 = tpu.matmul %347, %348, %cst_149 {dimension_numbers = #tpu.dot_dimension_numbers<[1], [0], [0], [1], [0, 0, 1, 1], [], []>} : vector<16x16xbf16>, vector<16x8xbf16>, vector<16x8xf32> -> vector<16x8xf32>
    %350 = tpu.concatenate %304, %319, %334, %349 in 1 : vector<16x8xf32>, vector<16x8xf32>, vector<16x8xf32>, vector<16x8xf32> -> vector<16x32xf32>
    %351 = vector.extract_strided_slice %269 {offsets = [16, 0], sizes = [16, 32], strides = [1, 1]} : vector<32x32xf32> to vector<16x32xf32>
    %352 = arith.truncf %351 : vector<16x32xf32> to vector<16x32xbf16>
    %353 = vector.extract_strided_slice %275 {offsets = [16, 0], sizes = [16, 32], strides = [1, 1]} : vector<32x32xf32> to vector<16x32xf32>
    %354 = arith.truncf %353 : vector<16x32xf32> to vector<16x32xbf16>
    %355 = vector.extract_strided_slice %283 {offsets = [16, 0], sizes = [16, 32], strides = [1, 1]} : vector<32x32xf32> to vector<16x32xf32>
    %356 = arith.truncf %355 : vector<16x32xf32> to vector<16x32xbf16>
    %357 = vector.extract_strided_slice %352 {offsets = [0, 0], sizes = [16, 8], strides = [1, 1]} : vector<16x32xbf16> to vector<16x8xbf16>
    %358 = vector.extract_strided_slice %354 {offsets = [0, 0], sizes = [16, 8], strides = [1, 1]} : vector<16x32xbf16> to vector<16x8xbf16>
    %cst_150 = arith.constant dense<0.000000e+00> : vector<16x16xf32>
    %359 = tpu.matmul %357, %358, %cst_150 {dimension_numbers = #tpu.dot_dimension_numbers<[1], [1], [0], [0], [0, 0, 1, 0], [], []>} : vector<16x8xbf16>, vector<16x8xbf16>, vector<16x16xf32> -> vector<16x16xf32>
    %cst_151 = arith.constant dense<0xFF800000> : vector<16xf32>
    %360 = vector.multi_reduction <maximumf>, %359, %cst_151 [1] : vector<16x16xf32> to vector<16xf32>
    %361 = vector.shape_cast %360 : vector<16xf32> to vector<16x1xf32>
    %362 = vector.broadcast %361 : vector<16x1xf32> to vector<16x16xf32>
    %363 = arith.subf %359, %362 : vector<16x16xf32>
    %364 = math.exp %363 : vector<16x16xf32>
    %cst_152 = arith.constant dense<0.000000e+00> : vector<16xf32>
    %365 = vector.multi_reduction <add>, %364, %cst_152 [1] : vector<16x16xf32> to vector<16xf32>
    %366 = vector.shape_cast %365 : vector<16xf32> to vector<16x1xf32>
    %367 = vector.broadcast %366 : vector<16x1xf32> to vector<16x16xf32>
    %368 = arith.divf %364, %367 : vector<16x16xf32>
    %369 = arith.truncf %368 : vector<16x16xf32> to vector<16x16xbf16>
    %370 = vector.extract_strided_slice %356 {offsets = [0, 0], sizes = [16, 8], strides = [1, 1]} : vector<16x32xbf16> to vector<16x8xbf16>
    %cst_153 = arith.constant dense<0.000000e+00> : vector<16x8xf32>
    %371 = tpu.matmul %369, %370, %cst_153 {dimension_numbers = #tpu.dot_dimension_numbers<[1], [0], [0], [1], [0, 0, 1, 1], [], []>} : vector<16x16xbf16>, vector<16x8xbf16>, vector<16x8xf32> -> vector<16x8xf32>
    %372 = vector.extract_strided_slice %352 {offsets = [0, 8], sizes = [16, 8], strides = [1, 1]} : vector<16x32xbf16> to vector<16x8xbf16>
    %373 = vector.extract_strided_slice %354 {offsets = [0, 8], sizes = [16, 8], strides = [1, 1]} : vector<16x32xbf16> to vector<16x8xbf16>
    %cst_154 = arith.constant dense<0.000000e+00> : vector<16x16xf32>
    %374 = tpu.matmul %372, %373, %cst_154 {dimension_numbers = #tpu.dot_dimension_numbers<[1], [1], [0], [0], [0, 0, 1, 0], [], []>} : vector<16x8xbf16>, vector<16x8xbf16>, vector<16x16xf32> -> vector<16x16xf32>
    %cst_155 = arith.constant dense<0xFF800000> : vector<16xf32>
    %375 = vector.multi_reduction <maximumf>, %374, %cst_155 [1] : vector<16x16xf32> to vector<16xf32>
    %376 = vector.shape_cast %375 : vector<16xf32> to vector<16x1xf32>
    %377 = vector.broadcast %376 : vector<16x1xf32> to vector<16x16xf32>
    %378 = arith.subf %374, %377 : vector<16x16xf32>
    %379 = math.exp %378 : vector<16x16xf32>
    %cst_156 = arith.constant dense<0.000000e+00> : vector<16xf32>
    %380 = vector.multi_reduction <add>, %379, %cst_156 [1] : vector<16x16xf32> to vector<16xf32>
    %381 = vector.shape_cast %380 : vector<16xf32> to vector<16x1xf32>
    %382 = vector.broadcast %381 : vector<16x1xf32> to vector<16x16xf32>
    %383 = arith.divf %379, %382 : vector<16x16xf32>
    %384 = arith.truncf %383 : vector<16x16xf32> to vector<16x16xbf16>
    %385 = vector.extract_strided_slice %356 {offsets = [0, 8], sizes = [16, 8], strides = [1, 1]} : vector<16x32xbf16> to vector<16x8xbf16>
    %cst_157 = arith.constant dense<0.000000e+00> : vector<16x8xf32>
    %386 = tpu.matmul %384, %385, %cst_157 {dimension_numbers = #tpu.dot_dimension_numbers<[1], [0], [0], [1], [0, 0, 1, 1], [], []>} : vector<16x16xbf16>, vector<16x8xbf16>, vector<16x8xf32> -> vector<16x8xf32>
    %387 = vector.extract_strided_slice %352 {offsets = [0, 16], sizes = [16, 8], strides = [1, 1]} : vector<16x32xbf16> to vector<16x8xbf16>
    %388 = vector.extract_strided_slice %354 {offsets = [0, 16], sizes = [16, 8], strides = [1, 1]} : vector<16x32xbf16> to vector<16x8xbf16>
    %cst_158 = arith.constant dense<0.000000e+00> : vector<16x16xf32>
    %389 = tpu.matmul %387, %388, %cst_158 {dimension_numbers = #tpu.dot_dimension_numbers<[1], [1], [0], [0], [0, 0, 1, 0], [], []>} : vector<16x8xbf16>, vector<16x8xbf16>, vector<16x16xf32> -> vector<16x16xf32>
    %cst_159 = arith.constant dense<0xFF800000> : vector<16xf32>
    %390 = vector.multi_reduction <maximumf>, %389, %cst_159 [1] : vector<16x16xf32> to vector<16xf32>
    %391 = vector.shape_cast %390 : vector<16xf32> to vector<16x1xf32>
    %392 = vector.broadcast %391 : vector<16x1xf32> to vector<16x16xf32>
    %393 = arith.subf %389, %392 : vector<16x16xf32>
    %394 = math.exp %393 : vector<16x16xf32>
    %cst_160 = arith.constant dense<0.000000e+00> : vector<16xf32>
    %395 = vector.multi_reduction <add>, %394, %cst_160 [1] : vector<16x16xf32> to vector<16xf32>
    %396 = vector.shape_cast %395 : vector<16xf32> to vector<16x1xf32>
    %397 = vector.broadcast %396 : vector<16x1xf32> to vector<16x16xf32>
    %398 = arith.divf %394, %397 : vector<16x16xf32>
    %399 = arith.truncf %398 : vector<16x16xf32> to vector<16x16xbf16>
    %400 = vector.extract_strided_slice %356 {offsets = [0, 16], sizes = [16, 8], strides = [1, 1]} : vector<16x32xbf16> to vector<16x8xbf16>
    %cst_161 = arith.constant dense<0.000000e+00> : vector<16x8xf32>
    %401 = tpu.matmul %399, %400, %cst_161 {dimension_numbers = #tpu.dot_dimension_numbers<[1], [0], [0], [1], [0, 0, 1, 1], [], []>} : vector<16x16xbf16>, vector<16x8xbf16>, vector<16x8xf32> -> vector<16x8xf32>
    %402 = vector.extract_strided_slice %352 {offsets = [0, 24], sizes = [16, 8], strides = [1, 1]} : vector<16x32xbf16> to vector<16x8xbf16>
    %403 = vector.extract_strided_slice %354 {offsets = [0, 24], sizes = [16, 8], strides = [1, 1]} : vector<16x32xbf16> to vector<16x8xbf16>
    %cst_162 = arith.constant dense<0.000000e+00> : vector<16x16xf32>
    %404 = tpu.matmul %402, %403, %cst_162 {dimension_numbers = #tpu.dot_dimension_numbers<[1], [1], [0], [0], [0, 0, 1, 0], [], []>} : vector<16x8xbf16>, vector<16x8xbf16>, vector<16x16xf32> -> vector<16x16xf32>
    %cst_163 = arith.constant dense<0xFF800000> : vector<16xf32>
    %405 = vector.multi_reduction <maximumf>, %404, %cst_163 [1] : vector<16x16xf32> to vector<16xf32>
    %406 = vector.shape_cast %405 : vector<16xf32> to vector<16x1xf32>
    %407 = vector.broadcast %406 : vector<16x1xf32> to vector<16x16xf32>
    %408 = arith.subf %404, %407 : vector<16x16xf32>
    %409 = math.exp %408 : vector<16x16xf32>
    %cst_164 = arith.constant dense<0.000000e+00> : vector<16xf32>
    %410 = vector.multi_reduction <add>, %409, %cst_164 [1] : vector<16x16xf32> to vector<16xf32>
    %411 = vector.shape_cast %410 : vector<16xf32> to vector<16x1xf32>
    %412 = vector.broadcast %411 : vector<16x1xf32> to vector<16x16xf32>
    %413 = arith.divf %409, %412 : vector<16x16xf32>
    %414 = arith.truncf %413 : vector<16x16xf32> to vector<16x16xbf16>
    %415 = vector.extract_strided_slice %356 {offsets = [0, 24], sizes = [16, 8], strides = [1, 1]} : vector<16x32xbf16> to vector<16x8xbf16>
    %cst_165 = arith.constant dense<0.000000e+00> : vector<16x8xf32>
    %416 = tpu.matmul %414, %415, %cst_165 {dimension_numbers = #tpu.dot_dimension_numbers<[1], [0], [0], [1], [0, 0, 1, 1], [], []>} : vector<16x16xbf16>, vector<16x8xbf16>, vector<16x8xf32> -> vector<16x8xf32>
    %417 = tpu.concatenate %371, %386, %401, %416 in 1 : vector<16x8xf32>, vector<16x8xf32>, vector<16x8xf32>, vector<16x8xf32> -> vector<16x32xf32>
    %418 = tpu.concatenate %350, %417 in 0 : vector<16x32xf32>, vector<16x32xf32> -> vector<32x32xf32>
    %c1_166 = arith.constant 1 : index
    %c0_167 = arith.constant 0 : index
    %c0_168 = arith.constant 0 : index
    %419 = vector.load %arg12[%c1_166, %c0_167, %c0_168] : memref<2x32x32xbf16, #tpu.memory_space<vmem>>, vector<1x32x32xbf16>
    %420 = vector.shape_cast %419 : vector<1x32x32xbf16> to vector<32x32xbf16>
    %421 = arith.truncf %418 : vector<32x32xf32> to vector<32x32xbf16>
    %cst_169 = arith.constant dense<0.000000e+00> : vector<32x32xf32>
    %422 = tpu.matmul %421, %420, %cst_169 {dimension_numbers = #tpu.dot_dimension_numbers<[1], [0], [0], [1], [0, 0, 1, 1], [], []>} : vector<32x32xbf16>, vector<32x32xbf16>, vector<32x32xf32> -> vector<32x32xf32>
    %423 = arith.addf %245, %422 : vector<32x32xf32>
    %c1_170 = arith.constant 1 : index
    %c0_171 = arith.constant 0 : index
    %c0_172 = arith.constant 0 : index
    %424 = vector.load %arg13[%c1_170, %c0_171, %c0_172] : memref<2x1x32xf32, #tpu.memory_space<vmem>>, vector<1x1x32xf32>
    %425 = vector.shape_cast %424 : vector<1x1x32xf32> to vector<1x32xf32>
    %426 = vector.broadcast %425 : vector<1x32xf32> to vector<32x32xf32>
    %427 = arith.addf %423, %426 : vector<32x32xf32>
    %c1_173 = arith.constant 1 : index
    %c0_174 = arith.constant 0 : index
    %c0_175 = arith.constant 0 : index
    %428 = vector.load %arg14[%c1_173, %c0_174, %c0_175] : memref<2x1x32xf32, #tpu.memory_space<vmem>>, vector<1x1x32xf32>
    %429 = vector.shape_cast %428 : vector<1x1x32xf32> to vector<1x32xf32>
    %430 = arith.mulf %427, %427 : vector<32x32xf32>
    %cst_176 = arith.constant dense<0.000000e+00> : vector<32xf32>
    %431 = vector.multi_reduction <add>, %430, %cst_176 [1] : vector<32x32xf32> to vector<32xf32>
    %432 = vector.shape_cast %431 : vector<32xf32> to vector<32x1xf32>
    %cst_177 = arith.constant 3.200000e+01 : f32
    %433 = vector.broadcast %cst_177 : f32 to vector<32x1xf32>
    %434 = arith.divf %432, %433 : vector<32x1xf32>
    %cst_178 = arith.constant 9.99999997E-7 : f32
    %435 = vector.broadcast %cst_178 : f32 to vector<32x1xf32>
    %436 = arith.addf %434, %435 : vector<32x1xf32>
    %437 = math.rsqrt %436 : vector<32x1xf32>
    %438 = vector.broadcast %437 : vector<32x1xf32> to vector<32x32xf32>
    %439 = arith.mulf %427, %438 : vector<32x32xf32>
    %440 = vector.broadcast %429 : vector<1x32xf32> to vector<32x32xf32>
    %441 = arith.mulf %439, %440 : vector<32x32xf32>
    %442 = arith.truncf %441 : vector<32x32xf32> to vector<32x32xbf16>
    %c1_179 = arith.constant 1 : index
    %c0_180 = arith.constant 0 : index
    %c0_181 = arith.constant 0 : index
    %443 = vector.load %arg15[%c1_179, %c0_180, %c0_181] : memref<2x32x64xbf16, #tpu.memory_space<vmem>>, vector<1x32x64xbf16>
    %444 = vector.shape_cast %443 : vector<1x32x64xbf16> to vector<32x64xbf16>
    %cst_182 = arith.constant dense<0.000000e+00> : vector<32x64xf32>
    %445 = tpu.matmul %442, %444, %cst_182 {dimension_numbers = #tpu.dot_dimension_numbers<[1], [0], [0], [1], [0, 0, 1, 1], [], []>} : vector<32x32xbf16>, vector<32x64xbf16>, vector<32x64xf32> -> vector<32x64xf32>
    %446 = arith.mulf %445, %445 : vector<32x64xf32>
    %447 = arith.mulf %445, %446 : vector<32x64xf32>
    %cst_183 = arith.constant 4.471500e-02 : f32
    %448 = vector.broadcast %cst_183 : f32 to vector<32x64xf32>
    %449 = arith.mulf %448, %447 : vector<32x64xf32>
    %450 = arith.addf %445, %449 : vector<32x64xf32>
    %cst_184 = arith.constant 0.797884583 : f32
    %451 = vector.broadcast %cst_184 : f32 to vector<32x64xf32>
    %452 = arith.mulf %451, %450 : vector<32x64xf32>
    %453 = math.tanh %452 : vector<32x64xf32>
    %cst_185 = arith.constant 1.000000e+00 : f32
    %454 = vector.broadcast %cst_185 : f32 to vector<32x64xf32>
    %455 = arith.addf %454, %453 : vector<32x64xf32>
    %cst_186 = arith.constant 5.000000e-01 : f32
    %456 = vector.broadcast %cst_186 : f32 to vector<32x64xf32>
    %457 = arith.mulf %456, %455 : vector<32x64xf32>
    %458 = arith.mulf %445, %457 : vector<32x64xf32>
    %c1_187 = arith.constant 1 : index
    %c0_188 = arith.constant 0 : index
    %c0_189 = arith.constant 0 : index
    %459 = vector.load %arg16[%c1_187, %c0_188, %c0_189] : memref<2x32x64xbf16, #tpu.memory_space<vmem>>, vector<1x32x64xbf16>
    %460 = vector.shape_cast %459 : vector<1x32x64xbf16> to vector<32x64xbf16>
    %cst_190 = arith.constant dense<0.000000e+00> : vector<32x64xf32>
    %461 = tpu.matmul %442, %460, %cst_190 {dimension_numbers = #tpu.dot_dimension_numbers<[1], [0], [0], [1], [0, 0, 1, 1], [], []>} : vector<32x32xbf16>, vector<32x64xbf16>, vector<32x64xf32> -> vector<32x64xf32>
    %462 = arith.mulf %458, %461 : vector<32x64xf32>
    %c1_191 = arith.constant 1 : index
    %c0_192 = arith.constant 0 : index
    %c0_193 = arith.constant 0 : index
    %463 = vector.load %arg17[%c1_191, %c0_192, %c0_193] : memref<2x64x32xbf16, #tpu.memory_space<vmem>>, vector<1x64x32xbf16>
    %464 = vector.shape_cast %463 : vector<1x64x32xbf16> to vector<64x32xbf16>
    %465 = arith.truncf %462 : vector<32x64xf32> to vector<32x64xbf16>
    %cst_194 = arith.constant dense<0.000000e+00> : vector<32x32xf32>
    %466 = tpu.matmul %465, %464, %cst_194 {dimension_numbers = #tpu.dot_dimension_numbers<[1], [0], [0], [1], [0, 0, 1, 1], [], []>} : vector<32x64xbf16>, vector<64x32xbf16>, vector<32x32xf32> -> vector<32x32xf32>
    %467 = arith.addf %427, %466 : vector<32x32xf32>
    %c0_195 = arith.constant 0 : index
    %c0_196 = arith.constant 0 : index
    %468 = vector.load %arg18[%c0_195, %c0_196] : memref<1x32xf32, #tpu.memory_space<vmem>>, vector<1x32xf32>
    %469 = arith.mulf %467, %467 : vector<32x32xf32>
    %cst_197 = arith.constant dense<0.000000e+00> : vector<32xf32>
    %470 = vector.multi_reduction <add>, %469, %cst_197 [1] : vector<32x32xf32> to vector<32xf32>
    %471 = vector.shape_cast %470 : vector<32xf32> to vector<32x1xf32>
    %cst_198 = arith.constant 3.200000e+01 : f32
    %472 = vector.broadcast %cst_198 : f32 to vector<32x1xf32>
    %473 = arith.divf %471, %472 : vector<32x1xf32>
    %cst_199 = arith.constant 9.99999997E-7 : f32
    %474 = vector.broadcast %cst_199 : f32 to vector<32x1xf32>
    %475 = arith.addf %473, %474 : vector<32x1xf32>
    %476 = math.rsqrt %475 : vector<32x1xf32>
    %477 = vector.broadcast %476 : vector<32x1xf32> to vector<32x32xf32>
    %478 = arith.mulf %467, %477 : vector<32x32xf32>
    %479 = vector.broadcast %468 : vector<1x32xf32> to vector<32x32xf32>
    %480 = arith.mulf %478, %479 : vector<32x32xf32>
    %c0_200 = arith.constant 0 : index
    %c0_201 = arith.constant 0 : index
    %481 = vector.load %arg19[%c0_200, %c0_201] : memref<32x32xf32, #tpu.memory_space<vmem>>, vector<32x32xf32>
    tpu.vector_store %arg19[%c0_200, %c0_201], %480 {strides = array<i32>} : memref<32x32xf32, #tpu.memory_space<vmem>>, vector<32x32xf32>,
    return
  }
  func.func @transform_0(%arg0: i32) -> (i32, i32, i32) {
    %c0_i32 = arith.constant 0 : i32
    %c0_i32_0 = arith.constant 0 : i32
    %c0_i32_1 = arith.constant 0 : i32
    %c0_i32_2 = arith.constant 0 : i32
    return %c0_i32, %c0_i32_0, %c0_i32_1 : i32, i32, i32
  }
  func.func @transform_1(%arg0: i32) -> (i32, i32, i32) {
    %c0_i32 = arith.constant 0 : i32
    %c0_i32_0 = arith.constant 0 : i32
    %c0_i32_1 = arith.constant 0 : i32
    %c0_i32_2 = arith.constant 0 : i32
    return %c0_i32, %c0_i32_0, %c0_i32_1 : i32, i32, i32
  }
  func.func @transform_2(%arg0: i32) -> (i32, i32) {
    %c0_i32 = arith.constant 0 : i32
    %c0_i32_0 = arith.constant 0 : i32
    %c0_i32_1 = arith.constant 0 : i32
    return %c0_i32, %c0_i32_0 : i32, i32
  }
  func.func @transform_3(%arg0: i32) -> (i32, i32) {
    %c0_i32 = arith.constant 0 : i32
    %c0_i32_0 = arith.constant 0 : i32
    %c0_i32_1 = arith.constant 0 : i32
    return %c0_i32, %c0_i32_0 : i32, i32
  }
  func.func @transform_4(%arg0: i32) -> (i32, i32) {
    %c0_i32 = arith.constant 0 : i32
    %c0_i32_0 = arith.constant 0 : i32
    %c0_i32_1 = arith.constant 0 : i32
    return %c0_i32, %c0_i32_0 : i32, i32
  }
  func.func @transform_5(%arg0: i32) -> (i32, i32, i32) {
    %c0_i32 = arith.constant 0 : i32
    %c0_i32_0 = arith.constant 0 : i32
    %c0_i32_1 = arith.constant 0 : i32
    %c0_i32_2 = arith.constant 0 : i32
    return %c0_i32, %c0_i32_0, %c0_i32_1 : i32, i32, i32
  }
  func.func @transform_6(%arg0: i32) -> (i32, i32, i32) {
    %c0_i32 = arith.constant 0 : i32
    %c0_i32_0 = arith.constant 0 : i32
    %c0_i32_1 = arith.constant 0 : i32
    %c0_i32_2 = arith.constant 0 : i32
    return %c0_i32, %c0_i32_0, %c0_i32_1 : i32, i32, i32
  }
  func.func @transform_7(%arg0: i32) -> (i32, i32, i32) {
    %c0_i32 = arith.constant 0 : i32
    %c0_i32_0 = arith.constant 0 : i32
    %c0_i32_1 = arith.constant 0 : i32
    %c0_i32_2 = arith.constant 0 : i32
    return %c0_i32, %c0_i32_0, %c0_i32_1 : i32, i32, i32
  }
  func.func @transform_8(%arg0: i32) -> (i32, i32, i32) {
    %c0_i32 = arith.constant 0 : i32
    %c0_i32_0 = arith.constant 0 : i32
    %c0_i32_1 = arith.constant 0 : i32
    %c0_i32_2 = arith.constant 0 : i32
    return %c0_i32, %c0_i32_0, %c0_i32_1 : i32, i32, i32
  }
  func.func @transform_9(%arg0: i32) -> (i32, i32, i32) {
    %c0_i32 = arith.constant 0 : i32
    %c0_i32_0 = arith.constant 0 : i32
    %c0_i32_1 = arith.constant 0 : i32
    %c0_i32_2 = arith.constant 0 : i32
    return %c0_i32, %c0_i32_0, %c0_i32_1 : i32, i32, i32
  }
  func.func @transform_10(%arg0: i32) -> (i32, i32, i32) {
    %c0_i32 = arith.constant 0 : i32
    %c0_i32_0 = arith.constant 0 : i32
    %c0_i32_1 = arith.constant 0 : i32
    %c0_i32_2 = arith.constant 0 : i32
    return %c0_i32, %c0_i32_0, %c0_i32_1 : i32, i32, i32
  }
  func.func @transform_11(%arg0: i32) -> (i32, i32, i32) {
    %c0_i32 = arith.constant 0 : i32
    %c0_i32_0 = arith.constant 0 : i32
    %c0_i32_1 = arith.constant 0 : i32
    %c0_i32_2 = arith.constant 0 : i32
    return %c0_i32, %c0_i32_0, %c0_i32_1 : i32, i32, i32
  }
  func.func @transform_12(%arg0: i32) -> (i32, i32, i32) {
    %c0_i32 = arith.constant 0 : i32
    %c0_i32_0 = arith.constant 0 : i32
    %c0_i32_1 = arith.constant 0 : i32
    %c0_i32_2 = arith.constant 0 : i32
    return %c0_i32, %c0_i32_0, %c0_i32_1 : i32, i32, i32
  }
  func.func @transform_13(%arg0: i32) -> (i32, i32, i32) {
    %c0_i32 = arith.constant 0 : i32
    %c0_i32_0 = arith.constant 0 : i32
    %c0_i32_1 = arith.constant 0 : i32
    %c0_i32_2 = arith.constant 0 : i32
    return %c0_i32, %c0_i32_0, %c0_i32_1 : i32, i32, i32
  }
  func.func @transform_14(%arg0: i32) -> (i32, i32, i32) {
    %c0_i32 = arith.constant 0 : i32
    %c0_i32_0 = arith.constant 0 : i32
    %c0_i32_1 = arith.constant 0 : i32
    %c0_i32_2 = arith.constant 0 : i32
    return %c0_i32, %c0_i32_0, %c0_i32_1 : i32, i32, i32
  }
  func.func @transform_15(%arg0: i32) -> (i32, i32, i32) {
    %c0_i32 = arith.constant 0 : i32
    %c0_i32_0 = arith.constant 0 : i32
    %c0_i32_1 = arith.constant 0 : i32
    %c0_i32_2 = arith.constant 0 : i32
    return %c0_i32, %c0_i32_0, %c0_i32_1 : i32, i32, i32
  }
  func.func @transform_16(%arg0: i32) -> (i32, i32, i32) {
    %c0_i32 = arith.constant 0 : i32
    %c0_i32_0 = arith.constant 0 : i32
    %c0_i32_1 = arith.constant 0 : i32
    %c0_i32_2 = arith.constant 0 : i32
    return %c0_i32, %c0_i32_0, %c0_i32_1 : i32, i32, i32
  }
  func.func @transform_17(%arg0: i32) -> (i32, i32) {
    %c0_i32 = arith.constant 0 : i32
    %c0_i32_0 = arith.constant 0 : i32
    %c0_i32_1 = arith.constant 0 : i32
    return %c0_i32, %c0_i32_0 : i32, i32
  }
  func.func @transform_18(%arg0: i32) -> (i32, i32) {
    %c0_i32 = arith.constant 0 : i32
    %c0_i32_0 = arith.constant 0 : i32
    %c0_i32_1 = arith.constant 0 : i32
    return %c0_i32, %c0_i32_0 : i32, i32
  }
}

</mosaic_0001>

<llo_original>
// kernel: tpu_custom_call.1
$region0: #{tpu_custom_call.1}
  #allocation0 [shape = 'u32[]', space=smem, size = 0x4, offset = 0x4, fixed_abs, tag = 'smem constant byte address 0x4 - core index']
  #allocation1 [shape = 'u32[72,128]{1,0:T(1,128)}', space=vmem, size = 0x9000, scoped, tag = 'internal scratch']
  %s0 = inlined_call_operand.vmem [shape: f32[2,8,4], index: 0, kind: input, shape index: {}]
  %s1 = inlined_call_operand.hbm [shape: f32[2,8,32], index: 1, kind: input, shape index: {}]
  %s2 = inlined_call_operand.hbm [shape: f32[8,32], index: 2, kind: input, shape index: {}]
  %s3 = inlined_call_operand.vmem [shape: bf16[4,32], index: 3, kind: input, shape index: {}]
  %s4 = inlined_call_operand.vmem [shape: f32[1,32], index: 4, kind: input, shape index: {}]
  %s5 = inlined_call_operand.vmem [shape: f32[2,1,32], index: 5, kind: input, shape index: {}]
  %s6 = inlined_call_operand.vmem [shape: bf16[2,32,32], index: 6, kind: input, shape index: {}]
  %s7 = inlined_call_operand.vmem [shape: f32[2,1,32], index: 7, kind: input, shape index: {}]
  %s8 = inlined_call_operand.vmem [shape: bf16[2,32,32], index: 8, kind: input, shape index: {}]
  %s9 = inlined_call_operand.vmem [shape: bf16[2,32,32], index: 9, kind: input, shape index: {}]
  %s10 = inlined_call_operand.hbm [shape: f32[2,1,32], index: 10, kind: input, shape index: {}]
  %s11 = inlined_call_operand.hbm [shape: bf16[2,32,32], index: 11, kind: input, shape index: {}]
  %s12 = inlined_call_operand.hbm [shape: f32[2,1,32], index: 12, kind: input, shape index: {}]
  %s13 = inlined_call_operand.hbm [shape: f32[2,1,32], index: 13, kind: input, shape index: {}]
  %s14 = inlined_call_operand.hbm [shape: bf16[2,32,64], index: 14, kind: input, shape index: {}]
  %s15 = inlined_call_operand.hbm [shape: bf16[2,32,64], index: 15, kind: input, shape index: {}]
  %s16 = inlined_call_operand.vmem [shape: bf16[2,64,32], index: 16, kind: input, shape index: {}]
  %s17 = inlined_call_operand.hbm [shape: f32[1,32], index: 17, kind: input, shape index: {}]
  %s18 = inlined_call_operand.hbm [shape: f32[32,32], index: 18, kind: output, shape index: {}]
  %s19 = sld [smem:[#allocation0]]
  $region118: #{tpu_custom_call.1} parent=0
    _
  %s21 = ssub.s32 1, %s19
  %s22 = scalar_select 0, %s21, %s19
  $region1: #{tpu_custom_call.1} parent=0
    #allocation2 [shape = 'u8[8192]{0}', space=vmem, size = 0x2000, scoped, tag = 'input window, operand 1, single buffered']
    #allocation3 [shape = 's32[1]{0}', space=sflag, size = 0x4, scoped, tag = 'scoped memory for tpu_custom_call.1']
    #allocation4 [shape = 's32[1]{0}', space=sflag, size = 0x4, scoped, tag = 'scoped memory for tpu_custom_call.1']
    #allocation5 [shape = 'u8[4096]{0}', space=vmem, size = 0x1000, scoped, tag = 'input window, operand 2, single buffered']
    #allocation6 [shape = 's32[1]{0}', space=sflag, size = 0x4, scoped, tag = 'scoped memory for tpu_custom_call.1']
    #allocation7 [shape = 'u8[1024]{0}', space=vmem, size = 0x400, scoped, tag = 'input window, operand 10, single buffered']
    #allocation8 [shape = 'u8[16384]{0}', space=vmem, size = 0x4000, scoped, tag = 'input window, operand 11, single buffered']
    #allocation9 [shape = 's32[1]{0}', space=sflag, size = 0x4, scoped, tag = 'scoped memory for tpu_custom_call.1']
    #allocation10 [shape = 'u8[1024]{0}', space=vmem, size = 0x400, scoped, tag = 'input window, operand 12, single buffered']
    #allocation11 [shape = 'u8[1024]{0}', space=vmem, size = 0x400, scoped, tag = 'input window, operand 13, single buffered']
    #allocation12 [shape = 's32[1]{0}', space=sflag, size = 0x4, scoped, tag = 'scoped memory for tpu_custom_call.1']
    #allocation13 [shape = 'u8[16384]{0}', space=vmem, size = 0x4000, scoped, tag = 'input window, operand 14, single buffered']
    #allocation14 [shape = 'u8[16384]{0}', space=vmem, size = 0x4000, scoped, tag = 'input window, operand 15, single buffered']
    #allocation15 [shape = 's32[1]{0}', space=sflag, size = 0x4, scoped, tag = 'scoped memory for tpu_custom_call.1']
    #allocation16 [shape = 'u8[512]{0}', space=vmem, size = 0x400, scoped, tag = 'input window, operand 17, single buffered']
    #allocation17 [shape = 'u8[16384]{0}', space=vmem, size = 0x4000, scoped, tag = 'output window, operand 0, single buffered']
    %23 = vsyncpa [#allocation3], 0
    %24 = vsyncpa [#allocation6], 0
    %25 = vsyncpa [#allocation9], 0
    %26 = vsyncpa [#allocation12], 0
    %27 = vsyncpa [#allocation15], 0
    %28 = vsyncpa [#allocation4], 0
    // Predicated region
    $region2: #{tpu_custom_call.1} parent=1 // pred_check
      _
    $region3: #{tpu_custom_call.1} parent=1 // pred_check_branch
      %30 = sbr.rel (0) target = $region5
    $region4: #{tpu_custom_call.1} parent=1 // pred_region
      _
    $region5: #{tpu_custom_call.1} parent=1 // pred_fallthru
      _
    // Predicated region
    $region6: #{tpu_custom_call.1} parent=1 // pred_check
      _
    $region7: #{tpu_custom_call.1} parent=1 // pred_check_branch
      %32 = sbr.rel (0) target = $region9
    $region8: #{tpu_custom_call.1} parent=1 // pred_region
      %34 = vsyncadd [#allocation3], 0
      %s35 = sshll.u32 %s1, 4
      %s36 = int_to_ptr.hbm [resolvable:$true] %s35
      %s37 = sshll.u32 [#allocation2], 4
      %s38 = int_to_ptr.vmem [resolvable:$true] %s37
      %43 = dma.hbm_to_vmem [thread:$0]  %s36, 256, %s38, [#allocation3], 128, 128, 8
    $region9: #{tpu_custom_call.1} parent=1 // pred_fallthru
      _
    // Predicated region
    $region10: #{tpu_custom_call.1} parent=1 // pred_check
      _
    $region11: #{tpu_custom_call.1} parent=1 // pred_check_branch
      %45 = sbr.rel (0) target = $region13
    $region12: #{tpu_custom_call.1} parent=1 // pred_region
      %47 = vsyncadd [#allocation6], 0
      %s49 = sshll.u32 %s2, 4
      %s50 = int_to_ptr.hbm [resolvable:$true] %s49
      %s51 = sshll.u32 [#allocation5], 4
      %s52 = int_to_ptr.vmem [resolvable:$true] %s51
      %54 = dma.hbm_to_vmem [thread:$0]  %s50, 128, %s52, [#allocation6]
    $region13: #{tpu_custom_call.1} parent=1 // pred_fallthru
      _
    // Predicated region
    $region14: #{tpu_custom_call.1} parent=1 // pred_check
      _
    $region15: #{tpu_custom_call.1} parent=1 // pred_check_branch
      %56 = sbr.rel (0) target = $region17
    $region16: #{tpu_custom_call.1} parent=1 // pred_region
      _
    $region17: #{tpu_custom_call.1} parent=1 // pred_fallthru
      _
    // Predicated region
    $region18: #{tpu_custom_call.1} parent=1 // pred_check
      _
    $region19: #{tpu_custom_call.1} parent=1 // pred_check_branch
      %58 = sbr.rel (0) target = $region21
    $region20: #{tpu_custom_call.1} parent=1 // pred_region
      _
    $region21: #{tpu_custom_call.1} parent=1 // pred_fallthru
      _
    // Predicated region
    $region22: #{tpu_custom_call.1} parent=1 // pred_check
      _
    $region23: #{tpu_custom_call.1} parent=1 // pred_check_branch
      %60 = sbr.rel (0) target = $region25
    $region24: #{tpu_custom_call.1} parent=1 // pred_region
      _
    $region25: #{tpu_custom_call.1} parent=1 // pred_fallthru
      _
    // Predicated region
    $region26: #{tpu_custom_call.1} parent=1 // pred_check
      _
    $region27: #{tpu_custom_call.1} parent=1 // pred_check_branch
      %62 = sbr.rel (0) target = $region29
    $region28: #{tpu_custom_call.1} parent=1 // pred_region
      _
    $region29: #{tpu_custom_call.1} parent=1 // pred_fallthru
      _
    // Predicated region
    $region30: #{tpu_custom_call.1} parent=1 // pred_check
      _
    $region31: #{tpu_custom_call.1} parent=1 // pred_check_branch
      %64 = sbr.rel (0) target = $region33
    $region32: #{tpu_custom_call.1} parent=1 // pred_region
      _
    $region33: #{tpu_custom_call.1} parent=1 // pred_fallthru
      _
    // Predicated region
    $region34: #{tpu_custom_call.1} parent=1 // pred_check
      _
    $region35: #{tpu_custom_call.1} parent=1 // pred_check_branch
      %66 = sbr.rel (0) target = $region37
    $region36: #{tpu_custom_call.1} parent=1 // pred_region
      _
    $region37: #{tpu_custom_call.1} parent=1 // pred_fallthru
      _
    // Predicated region
    $region38: #{tpu_custom_call.1} parent=1 // pred_check
      _
    $region39: #{tpu_custom_call.1} parent=1 // pred_check_branch
      %68 = sbr.rel (0) target = $region41
    $region40: #{tpu_custom_call.1} parent=1 // pred_region
      _
    $region41: #{tpu_custom_call.1} parent=1 // pred_fallthru
      _
    // Predicated region
    $region42: #{tpu_custom_call.1} parent=1 // pred_check
      _
    $region43: #{tpu_custom_call.1} parent=1 // pred_check_branch
      %70 = sbr.rel (0) target = $region45
    $region44: #{tpu_custom_call.1} parent=1 // pred_region
      %72 = vsyncadd [#allocation6], 0
      %s73 = sshll.u32 %s10, 4
      %s74 = int_to_ptr.hbm [resolvable:$true] %s73
      %s75 = sshll.u32 [#allocation7], 4
      %s76 = int_to_ptr.vmem [resolvable:$true] %s75
      %81 = dma.hbm_to_vmem [thread:$0]  %s74, 32, %s76, [#allocation6], 16, 16, 1
    $region45: #{tpu_custom_call.1} parent=1 // pred_fallthru
      _
    // Predicated region
    $region46: #{tpu_custom_call.1} parent=1 // pred_check
      _
    $region47: #{tpu_custom_call.1} parent=1 // pred_check_branch
      %83 = sbr.rel (0) target = $region49
    $region48: #{tpu_custom_call.1} parent=1 // pred_region
      %85 = vsyncadd [#allocation9], 0
      %s86 = sshll.u32 %s11, 4
      %s87 = int_to_ptr.hbm [resolvable:$true] %s86
      %s88 = sshll.u32 [#allocation8], 4
      %s89 = int_to_ptr.vmem [resolvable:$true] %s88
      %94 = dma.hbm_to_vmem [thread:$0]  %s87, 512, %s89, [#allocation9], 64, 64, 4
    $region49: #{tpu_custom_call.1} parent=1 // pred_fallthru
      _
    // Predicated region
    $region50: #{tpu_custom_call.1} parent=1 // pred_check
      _
    $region51: #{tpu_custom_call.1} parent=1 // pred_check_branch
      %96 = sbr.rel (0) target = $region53
    $region52: #{tpu_custom_call.1} parent=1 // pred_region
      %98 = vsyncadd [#allocation9], 0
      %s99 = sshll.u32 %s12, 4
      %s100 = int_to_ptr.hbm [resolvable:$true] %s99
      %s101 = sshll.u32 [#allocation10], 4
      %s102 = int_to_ptr.vmem [resolvable:$true] %s101
      %107 = dma.hbm_to_vmem [thread:$0]  %s100, 32, %s102, [#allocation9], 16, 16, 1
    $region53: #{tpu_custom_call.1} parent=1 // pred_fallthru
      _
    // Predicated region
    $region54: #{tpu_custom_call.1} parent=1 // pred_check
      _
    $region55: #{tpu_custom_call.1} parent=1 // pred_check_branch
      %109 = sbr.rel (0) target = $region57
    $region56: #{tpu_custom_call.1} parent=1 // pred_region
      %111 = vsyncadd [#allocation12], 0
      %s112 = sshll.u32 %s13, 4
      %s113 = int_to_ptr.hbm [resolvable:$true] %s112
      %s114 = sshll.u32 [#allocation11], 4
      %s115 = int_to_ptr.vmem [resolvable:$true] %s114
      %120 = dma.hbm_to_vmem [thread:$0]  %s113, 32, %s115, [#allocation12], 16, 16, 1
    $region57: #{tpu_custom_call.1} parent=1 // pred_fallthru
      _
    // Predicated region
    $region58: #{tpu_custom_call.1} parent=1 // pred_check
      _
    $region59: #{tpu_custom_call.1} parent=1 // pred_check_branch
      %122 = sbr.rel (0) target = $region61
    $region60: #{tpu_custom_call.1} parent=1 // pred_region
      %124 = vsyncadd [#allocation12], 0
      %s125 = sshll.u32 %s14, 4
      %s126 = int_to_ptr.hbm [resolvable:$true] %s125
      %s127 = sshll.u32 [#allocation13], 4
      %s128 = int_to_ptr.vmem [resolvable:$true] %s127
      %133 = dma.hbm_to_vmem [thread:$0]  %s126, 512, %s128, [#allocation12], 64, 64, 4
    $region61: #{tpu_custom_call.1} parent=1 // pred_fallthru
      _
    // Predicated region
    $region62: #{tpu_custom_call.1} parent=1 // pred_check
      _
    $region63: #{tpu_custom_call.1} parent=1 // pred_check_branch
      %135 = sbr.rel (0) target = $region65
    $region64: #{tpu_custom_call.1} parent=1 // pred_region
      %137 = vsyncadd [#allocation15], 0
      %s138 = sshll.u32 %s15, 4
      %s139 = int_to_ptr.hbm [resolvable:$true] %s138
      %s140 = sshll.u32 [#allocation14], 4
      %s141 = int_to_ptr.vmem [resolvable:$true] %s140
      %146 = dma.hbm_to_vmem [thread:$0]  %s139, 512, %s141, [#allocation15], 64, 64, 4
    $region65: #{tpu_custom_call.1} parent=1 // pred_fallthru
      _
    // Predicated region
    $region66: #{tpu_custom_call.1} parent=1 // pred_check
      _
    $region67: #{tpu_custom_call.1} parent=1 // pred_check_branch
      %148 = sbr.rel (0) target = $region69
    $region68: #{tpu_custom_call.1} parent=1 // pred_region
      _
    $region69: #{tpu_custom_call.1} parent=1 // pred_fallthru
      _
    // Predicated region
    $region70: #{tpu_custom_call.1} parent=1 // pred_check
      _
    $region71: #{tpu_custom_call.1} parent=1 // pred_check_branch
      %150 = sbr.rel (0) target = $region73
    $region72: #{tpu_custom_call.1} parent=1 // pred_region
      %152 = vsyncadd [#allocation15], 0
      %s154 = sshll.u32 %s17, 4
      %s155 = int_to_ptr.hbm [resolvable:$true] %s154
      %s156 = sshll.u32 [#allocation16], 4
      %s157 = int_to_ptr.vmem [resolvable:$true] %s156
      %159 = dma.hbm_to_vmem [thread:$0]  %s155, 16, %s157, [#allocation15]
    $region73: #{tpu_custom_call.1} parent=1 // pred_fallthru
      _
    // Predicated region
    $region74: #{tpu_custom_call.1} parent=1 // pred_check
      _
    $region75: #{tpu_custom_call.1} parent=1 // pred_check_branch
      %161 = sbr.rel (0) target = $region77
    $region76: #{tpu_custom_call.1} parent=1 // pred_region
      %163 = dma.done [#allocation3], 256
    $region77: #{tpu_custom_call.1} parent=1 // pred_fallthru
      _
    // Predicated region
    $region78: #{tpu_custom_call.1} parent=1 // pred_check
      _
    $region79: #{tpu_custom_call.1} parent=1 // pred_check_branch
      %165 = sbr.rel (0) target = $region81
    $region80: #{tpu_custom_call.1} parent=1 // pred_region
      %167 = dma.done [#allocation6], 128
    $region81: #{tpu_custom_call.1} parent=1 // pred_fallthru
      _
    // Predicated region
    $region82: #{tpu_custom_call.1} parent=1 // pred_check
      _
    $region83: #{tpu_custom_call.1} parent=1 // pred_check_branch
      %169 = sbr.rel (0) target = $region85
    $region84: #{tpu_custom_call.1} parent=1 // pred_region
      %171 = dma.done [#allocation6], 32
    $region85: #{tpu_custom_call.1} parent=1 // pred_fallthru
      _
    // Predicated region
    $region86: #{tpu_custom_call.1} parent=1 // pred_check
      _
    $region87: #{tpu_custom_call.1} parent=1 // pred_check_branch
      %173 = sbr.rel (0) target = $region89
    $region88: #{tpu_custom_call.1} parent=1 // pred_region
      %175 = dma.done [#allocation9], 512
    $region89: #{tpu_custom_call.1} parent=1 // pred_fallthru
      _
    // Predicated region
    $region90: #{tpu_custom_call.1} parent=1 // pred_check
      _
    $region91: #{tpu_custom_call.1} parent=1 // pred_check_branch
      %177 = sbr.rel (0) target = $region93
    $region92: #{tpu_custom_call.1} parent=1 // pred_region
      %179 = dma.done [#allocation9], 32
    $region93: #{tpu_custom_call.1} parent=1 // pred_fallthru
      _
    // Predicated region
    $region94: #{tpu_custom_call.1} parent=1 // pred_check
      _
    $region95: #{tpu_custom_call.1} parent=1 // pred_check_branch
      %181 = sbr.rel (0) target = $region97
    $region96: #{tpu_custom_call.1} parent=1 // pred_region
      %183 = dma.done [#allocation12], 32
    $region97: #{tpu_custom_call.1} parent=1 // pred_fallthru
      _
    // Predicated region
    $region98: #{tpu_custom_call.1} parent=1 // pred_check
      _
    $region99: #{tpu_custom_call.1} parent=1 // pred_check_branch
      %185 = sbr.rel (0) target = $region101
    $region100: #{tpu_custom_call.1} parent=1 // pred_region
      %187 = dma.done [#allocation12], 512
    $region101: #{tpu_custom_call.1} parent=1 // pred_fallthru
      _
    // Predicated region
    $region102: #{tpu_custom_call.1} parent=1 // pred_check
      _
    $region103: #{tpu_custom_call.1} parent=1 // pred_check_branch
      %189 = sbr.rel (0) target = $region105
    $region104: #{tpu_custom_call.1} parent=1 // pred_region
      %191 = dma.done [#allocation15], 512
    $region105: #{tpu_custom_call.1} parent=1 // pred_fallthru
      _
    // Predicated region
    $region106: #{tpu_custom_call.1} parent=1 // pred_check
      _
    $region107: #{tpu_custom_call.1} parent=1 // pred_check_branch
      %193 = sbr.rel (0) target = $region109
    $region108: #{tpu_custom_call.1} parent=1 // pred_region
      %195 = dma.done [#allocation15], 16
    $region109: #{tpu_custom_call.1} parent=1 // pred_fallthru
      _
    %v197 = vld [vmem:[#allocation5] sm:$0xff]
    %v198 = vld [vmem:[%s0] sm:$0xff]
    %v199 = vld [vmem:[%s3] sm:$0x3]
    %v200 = vpack.c.bf16 %v198, %v198
    %v201 = vld [vmem:[%s4] sm:$0x1]
    %v203 = vperm.slane %v201, 0
    %vm205 = vcmask 31744
    %v207 = vsel %vm205, %v200, 0
    %vm209 = vcmask 1041408
    %v211 = vsel %vm209, %v199, 0
    %213 = vmatpush.bf16.msra.mxu0 0
    %214 = vmatpush.bf16.msra.mxu0 0
    %215 = vmatpush.bf16.msra.mxu0 0
    %216 = vmatpush.bf16.msra.mxu0 0
    %217 = vmatpush.bf16.msra.mxu0 0
    %218 = vmatpush.bf16.msra.mxu0 0
    %219 = vmatpush.bf16.msra.mxu0 0
    %220 = vmatpush.bf16.msra.mxu0 %v211
    %221 = vmatmul.bf16.gmra.mxu0 %v207
    %v222 = vpop.f32.mrf.mxu0
    %v223 = vadd.f32 %v203, %v222
    %v224 = vpop.f32.mrf.mxu0
    %225 = vdwg.mxu0
    %v226 = vadd.f32 %v223, %v197
    %v227 = vld [vmem:[#allocation2] sm:$0xff]
    %s228 = scalar_lea.vmem %s0, 8
    %v229 = vld [vmem:[%s228] sm:$0xff]
    %v230 = vpack.c.bf16 %v229, %v229
    %v232 = vsel %vm205, %v230, 0
    %234 = vmatpush.bf16.msra.mxu0 0
    %235 = vmatpush.bf16.msra.mxu0 0
    %236 = vmatpush.bf16.msra.mxu0 0
    %237 = vmatpush.bf16.msra.mxu0 0
    %238 = vmatpush.bf16.msra.mxu0 0
    %239 = vmatpush.bf16.msra.mxu0 0
    %240 = vmatpush.bf16.msra.mxu0 0
    %241 = vmatpush.bf16.msra.mxu0 %v211
    %242 = vmatmul.bf16.gmra.mxu0 %v232
    %v243 = vpop.f32.mrf.mxu0
    %v244 = vadd.f32 %v203, %v243
    %v245 = vpop.f32.mrf.mxu0
    %246 = vdwg.mxu0
    %v247 = vadd.f32 %v244, %v197
    %s248 = scalar_lea.vmem [#allocation2], 8
    %v249 = vld [vmem:[%s248] sm:$0xff]
    %v250 = vld [vmem:[%s5] sm:$0x1]
    %v251 = vmul.f32 %v227, %v227
    %v252 = vmul.f32 %v226, %v226
    %v253 = vmul.f32 %v249, %v249
    %v254 = vmul.f32 %v247, %v247
    %vm255 = vcmask 261120
    %v256 = vsel %vm255, %v251, 0.0
    %257 = vadd.xlane.f32.xlu0 %v256
    %v258 = vpop.xlane.xlu0 %257
    %v259 = vsel %vm255, %v252, 0.0
    %260 = vadd.xlane.f32.xlu0 %v259
    %v261 = vpop.xlane.xlu0 %260
    %v262 = vsel %vm255, %v253, 0.0
    %263 = vadd.xlane.f32.xlu0 %v262
    %v264 = vpop.xlane.xlu0 %263
    %v265 = vsel %vm255, %v254, 0.0
    %266 = vadd.xlane.f32.xlu0 %v265
    %v267 = vpop.xlane.xlu0 %266
    %v268 = vrcp.pop 32.0
    %v269 = vmul.f32 32.0, %v268
    %v270 = vsub.f32 1.0, %v269
    %v271 = vmul.f32 %v268, %v270
    %v272 = vadd.f32 %v268, %v271
    %vm273 = vweird.f32 %v268
    %v274 = vsel %vm273, %v268, %v272
    %v275 = vmul.f32 %v258, %v274
    %v276 = vmul.f32 %v261, %v274
    %v277 = vmul.f32 %v264, %v274
    %v278 = vmul.f32 %v267, %v274
    %v279 = vadd.f32 %v275, 1e-06
    %v280 = vadd.f32 %v276, 1e-06
    %v281 = vadd.f32 %v277, 1e-06
    %v282 = vadd.f32 %v278, 1e-06
    %v283 = vrsqrt.pop %v279
    %v284 = vmul.f32 %v283, %v279
    %v285 = vmul.f32 %v284, %v283
    %v286 = vmul.f32 0.5, %v285
    %v287 = vsub.f32 1.5, %v286
    %v288 = vmul.f32 %v283, %v287
    %vm289 = vweird.f32 %v279
    %vm290 = vweird.f32 %v283
    %vm291 = vmor %vm289, %vm290
    %v292 = vsel %vm291, %v283, %v288
    %v293 = vrsqrt.pop %v280
    %v294 = vmul.f32 %v293, %v280
    %v295 = vmul.f32 %v294, %v293
    %v296 = vmul.f32 0.5, %v295
    %v297 = vsub.f32 1.5, %v296
    %v298 = vmul.f32 %v293, %v297
    %vm299 = vweird.f32 %v280
    %vm300 = vweird.f32 %v293
    %vm301 = vmor %vm299, %vm300
    %v302 = vsel %vm301, %v293, %v298
    %v303 = vrsqrt.pop %v281
    %v304 = vmul.f32 %v303, %v281
    %v305 = vmul.f32 %v304, %v303
    %v306 = vmul.f32 0.5, %v305
    %v307 = vsub.f32 1.5, %v306
    %v308 = vmul.f32 %v303, %v307
    %vm309 = vweird.f32 %v281
    %vm310 = vweird.f32 %v303
    %vm311 = vmor %vm309, %vm310
    %v312 = vsel %vm311, %v303, %v308
    %v313 = vrsqrt.pop %v282
    %v314 = vmul.f32 %v313, %v282
    %v315 = vmul.f32 %v314, %v313
    %v316 = vmul.f32 0.5, %v315
    %v317 = vsub.f32 1.5, %v316
    %v318 = vmul.f32 %v313, %v317
    %vm319 = vweird.f32 %v282
    %vm320 = vweird.f32 %v313
    %vm321 = vmor %vm319, %vm320
    %v322 = vsel %vm321, %v313, %v318
    %v323 = vmul.f32 %v227, %v292
    %v324 = vmul.f32 %v226, %v302
    %v325 = vmul.f32 %v249, %v312
    %v326 = vmul.f32 %v247, %v322
    %v328 = vperm.slane %v250, 0
    %v330 = vmul.f32 %v323, %v328
    %v331 = vmul.f32 %v324, %v328
    %v332 = vmul.f32 %v325, %v328
    %v333 = vmul.f32 %v326, %v328
    %v334 = vld [vmem:[%s6] sm:$0xf]
    %v335 = vld [vmem:[%s6 + $0x4] sm:$0xf]
    %v336 = vld [vmem:[%s6 + $0x8] sm:$0xf]
    %v337 = vld [vmem:[%s6 + $0xc] sm:$0xf]
    %v338 = vpack.c.bf16 %v331, %v330
    %v339 = vpack.c.bf16 %v333, %v332
    %v340 = vld [vmem:[%s7] sm:$0x1]
    %v342 = vperm.slane %v340, 0
    %v348 = vunpack.c.l.b16 %v334
    %v349 = vunpack.c.l.b16 %v335
    %v350 = vunpack.c.l.b16 %v336
    %v351 = vunpack.c.l.b16 %v337
    %v352 = vpack.c.b16 %v349, %v348
    %v353 = vpack.c.b16 %v351, %v350
    %v357 = vsel %vm255, %v338, 0
    %v360 = vsel %vm255, %v339, 0
    %362 = vmatpush.bf16.msra.mxu0 0
    %363 = vmatpush.bf16.msra.mxu0 0
    %364 = vmatpush.bf16.msra.mxu0 0
    %365 = vmatpush.bf16.msra.mxu0 0
    %366 = vmatpush.bf16.msra.mxu0 0
    %367 = vmatpush.bf16.msra.mxu0 0
    %368 = vmatpush.bf16.msra.mxu0 %v353
    %369 = vmatpush.bf16.msra.mxu0 %v352
    %370 = vmatmul.bf16.gmra.mxu0 %v357
    %v371 = vpop.f32.mrf.mxu0
    %v372 = vadd.f32 %v342, %v371
    %v373 = vpop.f32.mrf.mxu0
    %v374 = vadd.f32 %v342, %v373
    %375 = vmatmul.bf16.gmra.mxu0 %v360
    %v376 = vpop.f32.mrf.mxu0
    %v377 = vadd.f32 %v342, %v376
    %v378 = vpop.f32.mrf.mxu0
    %v379 = vadd.f32 %v342, %v378
    %380 = vdwg.mxu0
    %v381 = vmul.f32 %v372, 0.59460354
    %v382 = vmul.f32 %v374, 0.59460354
    %v383 = vmul.f32 %v377, 0.59460354
    %v384 = vmul.f32 %v379, 0.59460354
    %v385 = vld [vmem:[%s8] sm:$0xf]
    %v386 = vld [vmem:[%s8 + $0x4] sm:$0xf]
    %v387 = vld [vmem:[%s8 + $0x8] sm:$0xf]
    %v388 = vld [vmem:[%s8 + $0xc] sm:$0xf]
    %v393 = vunpack.c.l.b16 %v385
    %v394 = vunpack.c.l.b16 %v386
    %v395 = vunpack.c.l.b16 %v387
    %v396 = vunpack.c.l.b16 %v388
    %v397 = vpack.c.b16 %v394, %v393
    %v398 = vpack.c.b16 %v396, %v395
    %401 = vmatpush.bf16.msra.mxu0 0
    %402 = vmatpush.bf16.msra.mxu0 0
    %403 = vmatpush.bf16.msra.mxu0 0
    %404 = vmatpush.bf16.msra.mxu0 0
    %405 = vmatpush.bf16.msra.mxu0 0
    %406 = vmatpush.bf16.msra.mxu0 0
    %407 = vmatpush.bf16.msra.mxu0 %v398
    %408 = vmatpush.bf16.msra.mxu0 %v397
    %409 = vmatmul.bf16.gmra.mxu0 %v357
    %v410 = vpop.f32.mrf.mxu0
    %v411 = vadd.f32 0.0, %v410
    %v412 = vpop.f32.mrf.mxu0
    %v413 = vadd.f32 0.0, %v412
    %414 = vmatmul.bf16.gmra.mxu0 %v360
    %v415 = vpop.f32.mrf.mxu0
    %v416 = vadd.f32 0.0, %v415
    %v417 = vpop.f32.mrf.mxu0
    %v418 = vadd.f32 0.0, %v417
    %419 = vdwg.mxu0
    %v420 = vmul.f32 %v411, 0.59460354
    %v421 = vmul.f32 %v413, 0.59460354
    %v422 = vmul.f32 %v416, 0.59460354
    %v423 = vmul.f32 %v418, 0.59460354
    %v424 = vld [vmem:[%s9] sm:$0xf]
    %v425 = vld [vmem:[%s9 + $0x4] sm:$0xf]
    %v426 = vld [vmem:[%s9 + $0x8] sm:$0xf]
    %v427 = vld [vmem:[%s9 + $0xc] sm:$0xf]
    %v428 = vld [vmem:[#allocation7] sm:$0x1]
    %v430 = vperm.slane %v428, 0
    %v436 = vunpack.c.l.b16 %v424
    %v437 = vunpack.c.l.b16 %v425
    %v438 = vunpack.c.l.b16 %v426
    %v439 = vunpack.c.l.b16 %v427
    %v440 = vpack.c.b16 %v437, %v436
    %v441 = vpack.c.b16 %v439, %v438
    %444 = vmatpush.bf16.msra.mxu0 0
    %445 = vmatpush.bf16.msra.mxu0 0
    %446 = vmatpush.bf16.msra.mxu0 0
    %447 = vmatpush.bf16.msra.mxu0 0
    %448 = vmatpush.bf16.msra.mxu0 0
    %449 = vmatpush.bf16.msra.mxu0 0
    %450 = vmatpush.bf16.msra.mxu0 %v441
    %451 = vmatpush.bf16.msra.mxu0 %v440
    %452 = vmatmul.bf16.gmra.mxu0 %v357
    %v453 = vpop.f32.mrf.mxu0
    %v454 = vadd.f32 %v430, %v453
    %v455 = vpop.f32.mrf.mxu0
    %v456 = vadd.f32 %v430, %v455
    %457 = vmatmul.bf16.gmra.mxu0 %v360
    %v458 = vpop.f32.mrf.mxu0
    %v459 = vadd.f32 %v430, %v458
    %v460 = vpop.f32.mrf.mxu0
    %v461 = vadd.f32 %v430, %v460
    %462 = vdwg.mxu0
    %v463 = vpack.c.bf16 %v381, %v381
    %v464 = vpack.c.bf16 %v382, %v382
    %v465 = vpack.c.bf16 %v420, %v420
    %v466 = vpack.c.bf16 %v421, %v421
    %v467 = vpack.c.bf16 %v454, %v454
    %v468 = vpack.c.bf16 %v456, %v456
    %v471 = vunpack.c.l.b16 %v463
    %v472 = vunpack.c.l.b16 %v464
    %v473 = vpack.c.b16 %v472, %v471
    %v476 = vunpack.c.l.b16 %v465
    %v477 = vunpack.c.l.b16 %v466
    %v478 = vpack.c.b16 %v477, %v476
    %vm479 = vcmask 64512
    %v481 = vsel %vm479, %v473, 0
    %v484 = vsel %vm479, %v478, 0
    %486 = vmatpush.bf16.xpose.msra.mxu0 0
    %487 = vmatpush.bf16.xpose.msra.mxu0 0
    %488 = vmatpush.bf16.xpose.msra.mxu0 0
    %489 = vmatpush.bf16.xpose.msra.mxu0 0
    %490 = vmatpush.bf16.xpose.msra.mxu0 0
    %491 = vmatpush.bf16.xpose.msra.mxu0 0
    %492 = vmatpush.bf16.xpose.msra.mxu0 0
    %493 = vmatpush.bf16.xpose.msra.mxu0 %v484
    %494 = vmatmul.bf16.gmra.mxu0 %v481
    %v495 = vpop.f32.mrf.mxu0
    %v496 = vadd.f32 0.0, %v495
    %v497 = vpop.f32.mrf.mxu0
    %v498 = vadd.f32 0.0, %v497
    %499 = vdwg.mxu0
    %vm500 = vcmask 130048
    %v501 = vsel %vm500, %v496, -inf
    %502 = vmax.xlane.f32.xlu0 %v501
    %v503 = vpop.xlane.xlu0 %502
    %v504 = vsel %vm500, %v498, -inf
    %505 = vmax.xlane.f32.xlu0 %v504
    %v506 = vpop.xlane.xlu0 %505
    %v507 = vsub.f32 %v496, %v503
    %v508 = vsub.f32 %v498, %v506
    %v509 = vmul.f32 %v507, 1.442695
    %v510 = vpow.pop %v509
    %v511 = vmul.f32 %v508, 1.442695
    %v512 = vpow.pop %v511
    %v513 = vsel %vm500, %v510, 0.0
    %514 = vadd.xlane.f32.xlu0 %v513
    %v515 = vpop.xlane.xlu0 %514
    %v516 = vsel %vm500, %v512, 0.0
    %517 = vadd.xlane.f32.xlu0 %v516
    %v518 = vpop.xlane.xlu0 %517
    %v519 = vrcp.pop %v515
    %v520 = vmul.f32 %v515, %v519
    %v521 = vsub.f32 1.0, %v520
    %v522 = vmul.f32 %v519, %v521
    %v523 = vadd.f32 %v519, %v522
    %vm524 = vweird.f32 %v515
    %vm525 = vweird.f32 %v519
    %vm526 = vmor %vm524, %vm525
    %v527 = vsel %vm526, %v519, %v523
    %v528 = vand.u32 2147483647, %v515
    %vm529 = vcmp.eq.f32.partialorder %v528, 8.507059e+37
    %v530 = vand.u32 %v515, 2147483648
    %v531 = vor.u32 1.1754944e-38, %v530
    %v532 = vsel %vm529, %v531, %v527
    %v533 = vmul.f32 %v510, %v532
    %v534 = vrcp.pop %v518
    %v535 = vmul.f32 %v518, %v534
    %v536 = vsub.f32 1.0, %v535
    %v537 = vmul.f32 %v534, %v536
    %v538 = vadd.f32 %v534, %v537
    %vm539 = vweird.f32 %v518
    %vm540 = vweird.f32 %v534
    %vm541 = vmor %vm539, %vm540
    %v542 = vsel %vm541, %v534, %v538
    %v543 = vand.u32 2147483647, %v518
    %vm544 = vcmp.eq.f32.partialorder %v543, 8.507059e+37
    %v545 = vand.u32 %v518, 2147483648
    %v546 = vor.u32 1.1754944e-38, %v545
    %v547 = vsel %vm544, %v546, %v542
    %v548 = vmul.f32 %v512, %v547
    %v549 = vpack.c.bf16 %v548, %v533
    %v552 = vunpack.c.l.b16 %v467
    %v553 = vunpack.c.l.b16 %v468
    %v554 = vpack.c.b16 %v553, %v552
    %v557 = vsel %vm500, %v549, 0
    %559 = vmatpush.bf16.msra.mxu0 0
    %560 = vmatpush.bf16.msra.mxu0 0
    %561 = vmatpush.bf16.msra.mxu0 0
    %562 = vmatpush.bf16.msra.mxu0 0
    %563 = vmatpush.bf16.msra.mxu0 0
    %564 = vmatpush.bf16.msra.mxu0 0
    %565 = vmatpush.bf16.msra.mxu0 0
    %566 = vmatpush.bf16.msra.mxu0 %v554
    %567 = vmatmul.bf16.gmra.mxu0 %v557
    %v568 = vpop.f32.mrf.mxu0
    %v569 = vadd.f32 0.0, %v568
    %v570 = vpop.f32.mrf.mxu0
    %v571 = vadd.f32 0.0, %v570
    %572 = vdwg.mxu0
    %573 = vrot.lane.b32.xlu0 %v473, 120
    %v574 = vpop.permute.xlu0 %573
    %575 = vrot.lane.b32.xlu0 %v478, 120
    %v576 = vpop.permute.xlu0 %575
    %v578 = vsel %vm479, %v574, 0
    %v581 = vsel %vm479, %v576, 0
    %583 = vmatpush.bf16.xpose.msra.mxu0 0
    %584 = vmatpush.bf16.xpose.msra.mxu0 0
    %585 = vmatpush.bf16.xpose.msra.mxu0 0
    %586 = vmatpush.bf16.xpose.msra.mxu0 0
    %587 = vmatpush.bf16.xpose.msra.mxu0 0
    %588 = vmatpush.bf16.xpose.msra.mxu0 0
    %589 = vmatpush.bf16.xpose.msra.mxu0 0
    %590 = vmatpush.bf16.xpose.msra.mxu0 %v581
    %591 = vmatmul.bf16.gmra.mxu0 %v578
    %v592 = vpop.f32.mrf.mxu0
    %v593 = vadd.f32 0.0, %v592
    %v594 = vpop.f32.mrf.mxu0
    %v595 = vadd.f32 0.0, %v594
    %596 = vdwg.mxu0
    %v597 = vsel %vm500, %v593, -inf
    %598 = vmax.xlane.f32.xlu0 %v597
    %v599 = vpop.xlane.xlu0 %598
    %v600 = vsel %vm500, %v595, -inf
    %601 = vmax.xlane.f32.xlu0 %v600
    %v602 = vpop.xlane.xlu0 %601
    %v603 = vsub.f32 %v593, %v599
    %v604 = vsub.f32 %v595, %v602
    %v605 = vmul.f32 %v603, 1.442695
    %v606 = vpow.pop %v605
    %v607 = vmul.f32 %v604, 1.442695
    %v608 = vpow.pop %v607
    %v609 = vsel %vm500, %v606, 0.0
    %610 = vadd.xlane.f32.xlu0 %v609
    %v611 = vpop.xlane.xlu0 %610
    %v612 = vsel %vm500, %v608, 0.0
    %613 = vadd.xlane.f32.xlu0 %v612
    %v614 = vpop.xlane.xlu0 %613
    %v615 = vrcp.pop %v611
    %v616 = vmul.f32 %v611, %v615
    %v617 = vsub.f32 1.0, %v616
    %v618 = vmul.f32 %v615, %v617
    %v619 = vadd.f32 %v615, %v618
    %vm620 = vweird.f32 %v611
    %vm621 = vweird.f32 %v615
    %vm622 = vmor %vm620, %vm621
    %v623 = vsel %vm622, %v615, %v619
    %v624 = vand.u32 2147483647, %v611
    %vm625 = vcmp.eq.f32.partialorder %v624, 8.507059e+37
    %v626 = vand.u32 %v611, 2147483648
    %v627 = vor.u32 1.1754944e-38, %v626
    %v628 = vsel %vm625, %v627, %v623
    %v629 = vmul.f32 %v606, %v628
    %v630 = vrcp.pop %v614
    %v631 = vmul.f32 %v614, %v630
    %v632 = vsub.f32 1.0, %v631
    %v633 = vmul.f32 %v630, %v632
    %v634 = vadd.f32 %v630, %v633
    %vm635 = vweird.f32 %v614
    %vm636 = vweird.f32 %v630
    %vm637 = vmor %vm635, %vm636
    %v638 = vsel %vm637, %v630, %v634
    %v639 = vand.u32 2147483647, %v614
    %vm640 = vcmp.eq.f32.partialorder %v639, 8.507059e+37
    %v641 = vand.u32 %v614, 2147483648
    %v642 = vor.u32 1.1754944e-38, %v641
    %v643 = vsel %vm640, %v642, %v638
    %v644 = vmul.f32 %v608, %v643
    %v645 = vpack.c.bf16 %v644, %v629
    %646 = vrot.lane.b32.xlu0 %v554, 120
    %v647 = vpop.permute.xlu0 %646
    %v650 = vsel %vm500, %v645, 0
    %652 = vmatpush.bf16.msra.mxu0 0
    %653 = vmatpush.bf16.msra.mxu0 0
    %654 = vmatpush.bf16.msra.mxu0 0
    %655 = vmatpush.bf16.msra.mxu0 0
    %656 = vmatpush.bf16.msra.mxu0 0
    %657 = vmatpush.bf16.msra.mxu0 0
    %658 = vmatpush.bf16.msra.mxu0 0
    %659 = vmatpush.bf16.msra.mxu0 %v647
    %660 = vmatmul.bf16.gmra.mxu0 %v650
    %v661 = vpop.f32.mrf.mxu0
    %v662 = vadd.f32 0.0, %v661
    %v663 = vpop.f32.mrf.mxu0
    %v664 = vadd.f32 0.0, %v663
    %665 = vdwg.mxu0
    %666 = vrot.lane.b32.xlu0 %v473, 112
    %v667 = vpop.permute.xlu0 %666
    %668 = vrot.lane.b32.xlu0 %v478, 112
    %v669 = vpop.permute.xlu0 %668
    %v671 = vsel %vm479, %v667, 0
    %v674 = vsel %vm479, %v669, 0
    %676 = vmatpush.bf16.xpose.msra.mxu0 0
    %677 = vmatpush.bf16.xpose.msra.mxu0 0
    %678 = vmatpush.bf16.xpose.msra.mxu0 0
    %679 = vmatpush.bf16.xpose.msra.mxu0 0
    %680 = vmatpush.bf16.xpose.msra.mxu0 0
    %681 = vmatpush.bf16.xpose.msra.mxu0 0
    %682 = vmatpush.bf16.xpose.msra.mxu0 0
    %683 = vmatpush.bf16.xpose.msra.mxu0 %v674
    %684 = vmatmul.bf16.gmra.mxu0 %v671
    %v685 = vpop.f32.mrf.mxu0
    %v686 = vadd.f32 0.0, %v685
    %v687 = vpop.f32.mrf.mxu0
    %v688 = vadd.f32 0.0, %v687
    %689 = vdwg.mxu0
    %v690 = vsel %vm500, %v686, -inf
    %691 = vmax.xlane.f32.xlu0 %v690
    %v692 = vpop.xlane.xlu0 %691
    %v693 = vsel %vm500, %v688, -inf
    %694 = vmax.xlane.f32.xlu0 %v693
    %v695 = vpop.xlane.xlu0 %694
    %v696 = vsub.f32 %v686, %v692
    %v697 = vsub.f32 %v688, %v695
    %v698 = vmul.f32 %v696, 1.442695
    %v699 = vpow.pop %v698
    %v700 = vmul.f32 %v697, 1.442695
    %v701 = vpow.pop %v700
    %v702 = vsel %vm500, %v699, 0.0
    %703 = vadd.xlane.f32.xlu0 %v702
    %v704 = vpop.xlane.xlu0 %703
    %v705 = vsel %vm500, %v701, 0.0
    %706 = vadd.xlane.f32.xlu0 %v705
    %v707 = vpop.xlane.xlu0 %706
    %v708 = vrcp.pop %v704
    %v709 = vmul.f32 %v704, %v708
    %v710 = vsub.f32 1.0, %v709
    %v711 = vmul.f32 %v708, %v710
    %v712 = vadd.f32 %v708, %v711
    %vm713 = vweird.f32 %v704
    %vm714 = vweird.f32 %v708
    %vm715 = vmor %vm713, %vm714
    %v716 = vsel %vm715, %v708, %v712
    %v717 = vand.u32 2147483647, %v704
    %vm718 = vcmp.eq.f32.partialorder %v717, 8.507059e+37
    %v719 = vand.u32 %v704, 2147483648
    %v720 = vor.u32 1.1754944e-38, %v719
    %v721 = vsel %vm718, %v720, %v716
    %v722 = vmul.f32 %v699, %v721
    %v723 = vrcp.pop %v707
    %v724 = vmul.f32 %v707, %v723
    %v725 = vsub.f32 1.0, %v724
    %v726 = vmul.f32 %v723, %v725
    %v727 = vadd.f32 %v723, %v726
    %vm728 = vweird.f32 %v707
    %vm729 = vweird.f32 %v723
    %vm730 = vmor %vm728, %vm729
    %v731 = vsel %vm730, %v723, %v727
    %v732 = vand.u32 2147483647, %v707
    %vm733 = vcmp.eq.f32.partialorder %v732, 8.507059e+37
    %v734 = vand.u32 %v707, 2147483648
    %v735 = vor.u32 1.1754944e-38, %v734
    %v736 = vsel %vm733, %v735, %v731
    %v737 = vmul.f32 %v701, %v736
    %v738 = vpack.c.bf16 %v737, %v722
    %739 = vrot.lane.b32.xlu0 %v554, 112
    %v740 = vpop.permute.xlu0 %739
    %v743 = vsel %vm500, %v738, 0
    %745 = vmatpush.bf16.msra.mxu0 0
    %746 = vmatpush.bf16.msra.mxu0 0
    %747 = vmatpush.bf16.msra.mxu0 0
    %748 = vmatpush.bf16.msra.mxu0 0
    %749 = vmatpush.bf16.msra.mxu0 0
    %750 = vmatpush.bf16.msra.mxu0 0
    %751 = vmatpush.bf16.msra.mxu0 0
    %752 = vmatpush.bf16.msra.mxu0 %v740
    %753 = vmatmul.bf16.gmra.mxu0 %v743
    %v754 = vpop.f32.mrf.mxu0
    %v755 = vadd.f32 0.0, %v754
    %v756 = vpop.f32.mrf.mxu0
    %v757 = vadd.f32 0.0, %v756
    %758 = vdwg.mxu0
    %759 = vrot.lane.b32.xlu0 %v473, 104
    %v760 = vpop.permute.xlu0 %759
    %761 = vrot.lane.b32.xlu0 %v478, 104
    %v762 = vpop.permute.xlu0 %761
    %v764 = vsel %vm479, %v760, 0
    %v767 = vsel %vm479, %v762, 0
    %769 = vmatpush.bf16.xpose.msra.mxu0 0
    %770 = vmatpush.bf16.xpose.msra.mxu0 0
    %771 = vmatpush.bf16.xpose.msra.mxu0 0
    %772 = vmatpush.bf16.xpose.msra.mxu0 0
    %773 = vmatpush.bf16.xpose.msra.mxu0 0
    %774 = vmatpush.bf16.xpose.msra.mxu0 0
    %775 = vmatpush.bf16.xpose.msra.mxu0 0
    %776 = vmatpush.bf16.xpose.msra.mxu0 %v767
    %777 = vmatmul.bf16.gmra.mxu0 %v764
    %v778 = vpop.f32.mrf.mxu0
    %v779 = vadd.f32 0.0, %v778
    %v780 = vpop.f32.mrf.mxu0
    %v781 = vadd.f32 0.0, %v780
    %782 = vdwg.mxu0
    %v783 = vsel %vm500, %v779, -inf
    %784 = vmax.xlane.f32.xlu0 %v783
    %v785 = vpop.xlane.xlu0 %784
    %v786 = vsel %vm500, %v781, -inf
    %787 = vmax.xlane.f32.xlu0 %v786
    %v788 = vpop.xlane.xlu0 %787
    %v789 = vsub.f32 %v779, %v785
    %v790 = vsub.f32 %v781, %v788
    %v791 = vmul.f32 %v789, 1.442695
    %v792 = vpow.pop %v791
    %v793 = vmul.f32 %v790, 1.442695
    %v794 = vpow.pop %v793
    %v795 = vsel %vm500, %v792, 0.0
    %796 = vadd.xlane.f32.xlu0 %v795
    %v797 = vpop.xlane.xlu0 %796
    %v798 = vsel %vm500, %v794, 0.0
    %799 = vadd.xlane.f32.xlu0 %v798
    %v800 = vpop.xlane.xlu0 %799
    %v801 = vrcp.pop %v797
    %v802 = vmul.f32 %v797, %v801
    %v803 = vsub.f32 1.0, %v802
    %v804 = vmul.f32 %v801, %v803
    %v805 = vadd.f32 %v801, %v804
    %vm806 = vweird.f32 %v797
    %vm807 = vweird.f32 %v801
    %vm808 = vmor %vm806, %vm807
    %v809 = vsel %vm808, %v801, %v805
    %v810 = vand.u32 2147483647, %v797
    %vm811 = vcmp.eq.f32.partialorder %v810, 8.507059e+37
    %v812 = vand.u32 %v797, 2147483648
    %v813 = vor.u32 1.1754944e-38, %v812
    %v814 = vsel %vm811, %v813, %v809
    %v815 = vmul.f32 %v792, %v814
    %v816 = vrcp.pop %v800
    %v817 = vmul.f32 %v800, %v816
    %v818 = vsub.f32 1.0, %v817
    %v819 = vmul.f32 %v816, %v818
    %v820 = vadd.f32 %v816, %v819
    %vm821 = vweird.f32 %v800
    %vm822 = vweird.f32 %v816
    %vm823 = vmor %vm821, %vm822
    %v824 = vsel %vm823, %v816, %v820
    %v825 = vand.u32 2147483647, %v800
    %vm826 = vcmp.eq.f32.partialorder %v825, 8.507059e+37
    %v827 = vand.u32 %v800, 2147483648
    %v828 = vor.u32 1.1754944e-38, %v827
    %v829 = vsel %vm826, %v828, %v824
    %v830 = vmul.f32 %v794, %v829
    %v831 = vpack.c.bf16 %v830, %v815
    %832 = vrot.lane.b32.xlu0 %v554, 104
    %v833 = vpop.permute.xlu0 %832
    %v836 = vsel %vm500, %v831, 0
    %838 = vmatpush.bf16.msra.mxu0 0
    %839 = vmatpush.bf16.msra.mxu0 0
    %840 = vmatpush.bf16.msra.mxu0 0
    %841 = vmatpush.bf16.msra.mxu0 0
    %842 = vmatpush.bf16.msra.mxu0 0
    %843 = vmatpush.bf16.msra.mxu0 0
    %844 = vmatpush.bf16.msra.mxu0 0
    %845 = vmatpush.bf16.msra.mxu0 %v833
    %846 = vmatmul.bf16.gmra.mxu0 %v836
    %v847 = vpop.f32.mrf.mxu0
    %v848 = vadd.f32 0.0, %v847
    %v849 = vpop.f32.mrf.mxu0
    %v850 = vadd.f32 0.0, %v849
    %851 = vdwg.mxu0
    %854 = vrot.lane.b32.xlu0 %v662, 8
    %v855 = vpop.permute.xlu0 %854
    %856 = vrot.lane.b32.xlu0 %v664, 8
    %v857 = vpop.permute.xlu0 %856
    %862 = vrot.lane.b32.xlu0 %v755, 16
    %v863 = vpop.permute.xlu0 %862
    %864 = vrot.lane.b32.xlu0 %v757, 16
    %v865 = vpop.permute.xlu0 %864
    %870 = vrot.lane.b32.xlu0 %v848, 24
    %v871 = vpop.permute.xlu0 %870
    %872 = vrot.lane.b32.xlu0 %v850, 24
    %v873 = vpop.permute.xlu0 %872
    %v876 = vsel %vm479, %v569, %v855
    %v877 = vsel %vm479, %v571, %v857
    %v878 = vsel %vm500, %v876, %v863
    %v879 = vsel %vm500, %v877, %v865
    %vm880 = vcmask 195584
    %v881 = vsel %vm880, %v878, %v871
    %v882 = vsel %vm880, %v879, %v873
    %v883 = vpack.c.bf16 %v383, %v383
    %v884 = vpack.c.bf16 %v384, %v384
    %v885 = vpack.c.bf16 %v422, %v422
    %v886 = vpack.c.bf16 %v423, %v423
    %v887 = vpack.c.bf16 %v459, %v459
    %v888 = vpack.c.bf16 %v461, %v461
    %v891 = vunpack.c.l.b16 %v883
    %v892 = vunpack.c.l.b16 %v884
    %v893 = vpack.c.b16 %v892, %v891
    %v896 = vunpack.c.l.b16 %v885
    %v897 = vunpack.c.l.b16 %v886
    %v898 = vpack.c.b16 %v897, %v896
    %v900 = vsel %vm479, %v893, 0
    %v903 = vsel %vm479, %v898, 0
    %905 = vmatpush.bf16.xpose.msra.mxu0 0
    %906 = vmatpush.bf16.xpose.msra.mxu0 0
    %907 = vmatpush.bf16.xpose.msra.mxu0 0
    %908 = vmatpush.bf16.xpose.msra.mxu0 0
    %909 = vmatpush.bf16.xpose.msra.mxu0 0
    %910 = vmatpush.bf16.xpose.msra.mxu0 0
    %911 = vmatpush.bf16.xpose.msra.mxu0 0
    %912 = vmatpush.bf16.xpose.msra.mxu0 %v903
    %913 = vmatmul.bf16.gmra.mxu0 %v900
    %v914 = vpop.f32.mrf.mxu0
    %v915 = vadd.f32 0.0, %v914
    %v916 = vpop.f32.mrf.mxu0
    %v917 = vadd.f32 0.0, %v916
    %918 = vdwg.mxu0
    %v919 = vsel %vm500, %v915, -inf
    %920 = vmax.xlane.f32.xlu0 %v919
    %v921 = vpop.xlane.xlu0 %920
    %v922 = vsel %vm500, %v917, -inf
    %923 = vmax.xlane.f32.xlu0 %v922
    %v924 = vpop.xlane.xlu0 %923
    %v925 = vsub.f32 %v915, %v921
    %v926 = vsub.f32 %v917, %v924
    %v927 = vmul.f32 %v925, 1.442695
    %v928 = vpow.pop %v927
    %v929 = vmul.f32 %v926, 1.442695
    %v930 = vpow.pop %v929
    %v931 = vsel %vm500, %v928, 0.0
    %932 = vadd.xlane.f32.xlu0 %v931
    %v933 = vpop.xlane.xlu0 %932
    %v934 = vsel %vm500, %v930, 0.0
    %935 = vadd.xlane.f32.xlu0 %v934
    %v936 = vpop.xlane.xlu0 %935
    %v937 = vrcp.pop %v933
    %v938 = vmul.f32 %v933, %v937
    %v939 = vsub.f32 1.0, %v938
    %v940 = vmul.f32 %v937, %v939
    %v941 = vadd.f32 %v937, %v940
    %vm942 = vweird.f32 %v933
    %vm943 = vweird.f32 %v937
    %vm944 = vmor %vm942, %vm943
    %v945 = vsel %vm944, %v937, %v941
    %v946 = vand.u32 2147483647, %v933
    %vm947 = vcmp.eq.f32.partialorder %v946, 8.507059e+37
    %v948 = vand.u32 %v933, 2147483648
    %v949 = vor.u32 1.1754944e-38, %v948
    %v950 = vsel %vm947, %v949, %v945
    %v951 = vmul.f32 %v928, %v950
    %v952 = vrcp.pop %v936
    %v953 = vmul.f32 %v936, %v952
    %v954 = vsub.f32 1.0, %v953
    %v955 = vmul.f32 %v952, %v954
    %v956 = vadd.f32 %v952, %v955
    %vm957 = vweird.f32 %v936
    %vm958 = vweird.f32 %v952
    %vm959 = vmor %vm957, %vm958
    %v960 = vsel %vm959, %v952, %v956
    %v961 = vand.u32 2147483647, %v936
    %vm962 = vcmp.eq.f32.partialorder %v961, 8.507059e+37
    %v963 = vand.u32 %v936, 2147483648
    %v964 = vor.u32 1.1754944e-38, %v963
    %v965 = vsel %vm962, %v964, %v960
    %v966 = vmul.f32 %v930, %v965
    %v967 = vpack.c.bf16 %v966, %v951
    %v970 = vunpack.c.l.b16 %v887
    %v971 = vunpack.c.l.b16 %v888
    %v972 = vpack.c.b16 %v971, %v970
    %v975 = vsel %vm500, %v967, 0
    %977 = vmatpush.bf16.msra.mxu0 0
    %978 = vmatpush.bf16.msra.mxu0 0
    %979 = vmatpush.bf16.msra.mxu0 0
    %980 = vmatpush.bf16.msra.mxu0 0
    %981 = vmatpush.bf16.msra.mxu0 0
    %982 = vmatpush.bf16.msra.mxu0 0
    %983 = vmatpush.bf16.msra.mxu0 0
    %984 = vmatpush.bf16.msra.mxu0 %v972
    %985 = vmatmul.bf16.gmra.mxu0 %v975
    %v986 = vpop.f32.mrf.mxu0
    %v987 = vadd.f32 0.0, %v986
    %v988 = vpop.f32.mrf.mxu0
    %v989 = vadd.f32 0.0, %v988
    %990 = vdwg.mxu0
    %991 = vrot.lane.b32.xlu0 %v893, 120
    %v992 = vpop.permute.xlu0 %991
    %993 = vrot.lane.b32.xlu0 %v898, 120
    %v994 = vpop.permute.xlu0 %993
    %v996 = vsel %vm479, %v992, 0
    %v999 = vsel %vm479, %v994, 0
    %1001 = vmatpush.bf16.xpose.msra.mxu0 0
    %1002 = vmatpush.bf16.xpose.msra.mxu0 0
    %1003 = vmatpush.bf16.xpose.msra.mxu0 0
    %1004 = vmatpush.bf16.xpose.msra.mxu0 0
    %1005 = vmatpush.bf16.xpose.msra.mxu0 0
    %1006 = vmatpush.bf16.xpose.msra.mxu0 0
    %1007 = vmatpush.bf16.xpose.msra.mxu0 0
    %1008 = vmatpush.bf16.xpose.msra.mxu0 %v999
    %1009 = vmatmul.bf16.gmra.mxu0 %v996
    %v1010 = vpop.f32.mrf.mxu0
    %v1011 = vadd.f32 0.0, %v1010
    %v1012 = vpop.f32.mrf.mxu0
    %v1013 = vadd.f32 0.0, %v1012
    %1014 = vdwg.mxu0
    %v1015 = vsel %vm500, %v1011, -inf
    %1016 = vmax.xlane.f32.xlu0 %v1015
    %v1017 = vpop.xlane.xlu0 %1016
    %v1018 = vsel %vm500, %v1013, -inf
    %1019 = vmax.xlane.f32.xlu0 %v1018
    %v1020 = vpop.xlane.xlu0 %1019
    %v1021 = vsub.f32 %v1011, %v1017
    %v1022 = vsub.f32 %v1013, %v1020
    %v1023 = vmul.f32 %v1021, 1.442695
    %v1024 = vpow.pop %v1023
    %v1025 = vmul.f32 %v1022, 1.442695
    %v1026 = vpow.pop %v1025
    %v1027 = vsel %vm500, %v1024, 0.0
    %1028 = vadd.xlane.f32.xlu0 %v1027
    %v1029 = vpop.xlane.xlu0 %1028
    %v1030 = vsel %vm500, %v1026, 0.0
    %1031 = vadd.xlane.f32.xlu0 %v1030
    %v1032 = vpop.xlane.xlu0 %1031
    %v1033 = vrcp.pop %v1029
    %v1034 = vmul.f32 %v1029, %v1033
    %v1035 = vsub.f32 1.0, %v1034
    %v1036 = vmul.f32 %v1033, %v1035
    %v1037 = vadd.f32 %v1033, %v1036
    %vm1038 = vweird.f32 %v1029
    %vm1039 = vweird.f32 %v1033
    %vm1040 = vmor %vm1038, %vm1039
    %v1041 = vsel %vm1040, %v1033, %v1037
    %v1042 = vand.u32 2147483647, %v1029
    %vm1043 = vcmp.eq.f32.partialorder %v1042, 8.507059e+37
    %v1044 = vand.u32 %v1029, 2147483648
    %v1045 = vor.u32 1.1754944e-38, %v1044
    %v1046 = vsel %vm1043, %v1045, %v1041
    %v1047 = vmul.f32 %v1024, %v1046
    %v1048 = vrcp.pop %v1032
    %v1049 = vmul.f32 %v1032, %v1048
    %v1050 = vsub.f32 1.0, %v1049
    %v1051 = vmul.f32 %v1048, %v1050
    %v1052 = vadd.f32 %v1048, %v1051
    %vm1053 = vweird.f32 %v1032
    %vm1054 = vweird.f32 %v1048
    %vm1055 = vmor %vm1053, %vm1054
    %v1056 = vsel %vm1055, %v1048, %v1052
    %v1057 = vand.u32 2147483647, %v1032
    %vm1058 = vcmp.eq.f32.partialorder %v1057, 8.507059e+37
    %v1059 = vand.u32 %v1032, 2147483648
    %v1060 = vor.u32 1.1754944e-38, %v1059
    %v1061 = vsel %vm1058, %v1060, %v1056
    %v1062 = vmul.f32 %v1026, %v1061
    %v1063 = vpack.c.bf16 %v1062, %v1047
    %1064 = vrot.lane.b32.xlu0 %v972, 120
    %v1065 = vpop.permute.xlu0 %1064
    %v1068 = vsel %vm500, %v1063, 0
    %1070 = vmatpush.bf16.msra.mxu0 0
    %1071 = vmatpush.bf16.msra.mxu0 0
    %1072 = vmatpush.bf16.msra.mxu0 0
    %1073 = vmatpush.bf16.msra.mxu0 0
    %1074 = vmatpush.bf16.msra.mxu0 0
    %1075 = vmatpush.bf16.msra.mxu0 0
    %1076 = vmatpush.bf16.msra.mxu0 0
    %1077 = vmatpush.bf16.msra.mxu0 %v1065
    %1078 = vmatmul.bf16.gmra.mxu0 %v1068
    %v1079 = vpop.f32.mrf.mxu0
    %v1080 = vadd.f32 0.0, %v1079
    %v1081 = vpop.f32.mrf.mxu0
    %v1082 = vadd.f32 0.0, %v1081
    %1083 = vdwg.mxu0
    %1084 = vrot.lane.b32.xlu0 %v893, 112
    %v1085 = vpop.permute.xlu0 %1084
    %1086 = vrot.lane.b32.xlu0 %v898, 112
    %v1087 = vpop.permute.xlu0 %1086
    %v1089 = vsel %vm479, %v1085, 0
    %v1092 = vsel %vm479, %v1087, 0
    %1094 = vmatpush.bf16.xpose.msra.mxu0 0
    %1095 = vmatpush.bf16.xpose.msra.mxu0 0
    %1096 = vmatpush.bf16.xpose.msra.mxu0 0
    %1097 = vmatpush.bf16.xpose.msra.mxu0 0
    %1098 = vmatpush.bf16.xpose.msra.mxu0 0
    %1099 = vmatpush.bf16.xpose.msra.mxu0 0
    %1100 = vmatpush.bf16.xpose.msra.mxu0 0
    %1101 = vmatpush.bf16.xpose.msra.mxu0 %v1092
    %1102 = vmatmul.bf16.gmra.mxu0 %v1089
    %v1103 = vpop.f32.mrf.mxu0
    %v1104 = vadd.f32 0.0, %v1103
    %v1105 = vpop.f32.mrf.mxu0
    %v1106 = vadd.f32 0.0, %v1105
    %1107 = vdwg.mxu0
    %v1108 = vsel %vm500, %v1104, -inf
    %1109 = vmax.xlane.f32.xlu0 %v1108
    %v1110 = vpop.xlane.xlu0 %1109
    %v1111 = vsel %vm500, %v1106, -inf
    %1112 = vmax.xlane.f32.xlu0 %v1111
    %v1113 = vpop.xlane.xlu0 %1112
    %v1114 = vsub.f32 %v1104, %v1110
    %v1115 = vsub.f32 %v1106, %v1113
    %v1116 = vmul.f32 %v1114, 1.442695
    %v1117 = vpow.pop %v1116
    %v1118 = vmul.f32 %v1115, 1.442695
    %v1119 = vpow.pop %v1118
    %v1120 = vsel %vm500, %v1117, 0.0
    %1121 = vadd.xlane.f32.xlu0 %v1120
    %v1122 = vpop.xlane.xlu0 %1121
    %v1123 = vsel %vm500, %v1119, 0.0
    %1124 = vadd.xlane.f32.xlu0 %v1123
    %v1125 = vpop.xlane.xlu0 %1124
    %v1126 = vrcp.pop %v1122
    %v1127 = vmul.f32 %v1122, %v1126
    %v1128 = vsub.f32 1.0, %v1127
    %v1129 = vmul.f32 %v1126, %v1128
    %v1130 = vadd.f32 %v1126, %v1129
    %vm1131 = vweird.f32 %v1122
    %vm1132 = vweird.f32 %v1126
    %vm1133 = vmor %vm1131, %vm1132
    %v1134 = vsel %vm1133, %v1126, %v1130
    %v1135 = vand.u32 2147483647, %v1122
    %vm1136 = vcmp.eq.f32.partialorder %v1135, 8.507059e+37
    %v1137 = vand.u32 %v1122, 2147483648
    %v1138 = vor.u32 1.1754944e-38, %v1137
    %v1139 = vsel %vm1136, %v1138, %v1134
    %v1140 = vmul.f32 %v1117, %v1139
    %v1141 = vrcp.pop %v1125
    %v1142 = vmul.f32 %v1125, %v1141
    %v1143 = vsub.f32 1.0, %v1142
    %v1144 = vmul.f32 %v1141, %v1143
    %v1145 = vadd.f32 %v1141, %v1144
    %vm1146 = vweird.f32 %v1125
    %vm1147 = vweird.f32 %v1141
    %vm1148 = vmor %vm1146, %vm1147
    %v1149 = vsel %vm1148, %v1141, %v1145
    %v1150 = vand.u32 2147483647, %v1125
    %vm1151 = vcmp.eq.f32.partialorder %v1150, 8.507059e+37
    %v1152 = vand.u32 %v1125, 2147483648
    %v1153 = vor.u32 1.1754944e-38, %v1152
    %v1154 = vsel %vm1151, %v1153, %v1149
    %v1155 = vmul.f32 %v1119, %v1154
    %v1156 = vpack.c.bf16 %v1155, %v1140
    %1157 = vrot.lane.b32.xlu0 %v972, 112
    %v1158 = vpop.permute.xlu0 %1157
    %v1161 = vsel %vm500, %v1156, 0
    %1163 = vmatpush.bf16.msra.mxu0 0
    %1164 = vmatpush.bf16.msra.mxu0 0
    %1165 = vmatpush.bf16.msra.mxu0 0
    %1166 = vmatpush.bf16.msra.mxu0 0
    %1167 = vmatpush.bf16.msra.mxu0 0
    %1168 = vmatpush.bf16.msra.mxu0 0
    %1169 = vmatpush.bf16.msra.mxu0 0
    %1170 = vmatpush.bf16.msra.mxu0 %v1158
    %1171 = vmatmul.bf16.gmra.mxu0 %v1161
    %v1172 = vpop.f32.mrf.mxu0
    %v1173 = vadd.f32 0.0, %v1172
    %v1174 = vpop.f32.mrf.mxu0
    %v1175 = vadd.f32 0.0, %v1174
    %1176 = vdwg.mxu0
    %1177 = vrot.lane.b32.xlu0 %v893, 104
    %v1178 = vpop.permute.xlu0 %1177
    %1179 = vrot.lane.b32.xlu0 %v898, 104
    %v1180 = vpop.permute.xlu0 %1179
    %v1182 = vsel %vm479, %v1178, 0
    %v1185 = vsel %vm479, %v1180, 0
    %1187 = vmatpush.bf16.xpose.msra.mxu0 0
    %1188 = vmatpush.bf16.xpose.msra.mxu0 0
    %1189 = vmatpush.bf16.xpose.msra.mxu0 0
    %1190 = vmatpush.bf16.xpose.msra.mxu0 0
    %1191 = vmatpush.bf16.xpose.msra.mxu0 0
    %1192 = vmatpush.bf16.xpose.msra.mxu0 0
    %1193 = vmatpush.bf16.xpose.msra.mxu0 0
    %1194 = vmatpush.bf16.xpose.msra.mxu0 %v1185
    %1195 = vmatmul.bf16.gmra.mxu0 %v1182
    %v1196 = vpop.f32.mrf.mxu0
    %v1197 = vadd.f32 0.0, %v1196
    %v1198 = vpop.f32.mrf.mxu0
    %v1199 = vadd.f32 0.0, %v1198
    %1200 = vdwg.mxu0
    %v1201 = vsel %vm500, %v1197, -inf
    %1202 = vmax.xlane.f32.xlu0 %v1201
    %v1203 = vpop.xlane.xlu0 %1202
    %v1204 = vsel %vm500, %v1199, -inf
    %1205 = vmax.xlane.f32.xlu0 %v1204
    %v1206 = vpop.xlane.xlu0 %1205
    %v1207 = vsub.f32 %v1197, %v1203
    %v1208 = vsub.f32 %v1199, %v1206
    %v1209 = vmul.f32 %v1207, 1.442695
    %v1210 = vpow.pop %v1209
    %v1211 = vmul.f32 %v1208, 1.442695
    %v1212 = vpow.pop %v1211
    %v1213 = vsel %vm500, %v1210, 0.0
    %1214 = vadd.xlane.f32.xlu0 %v1213
    %v1215 = vpop.xlane.xlu0 %1214
    %v1216 = vsel %vm500, %v1212, 0.0
    %1217 = vadd.xlane.f32.xlu0 %v1216
    %v1218 = vpop.xlane.xlu0 %1217
    %v1219 = vrcp.pop %v1215
    %v1220 = vmul.f32 %v1215, %v1219
    %v1221 = vsub.f32 1.0, %v1220
    %v1222 = vmul.f32 %v1219, %v1221
    %v1223 = vadd.f32 %v1219, %v1222
    %vm1224 = vweird.f32 %v1215
    %vm1225 = vweird.f32 %v1219
    %vm1226 = vmor %vm1224, %vm1225
    %v1227 = vsel %vm1226, %v1219, %v1223
    %v1228 = vand.u32 2147483647, %v1215
    %vm1229 = vcmp.eq.f32.partialorder %v1228, 8.507059e+37
    %v1230 = vand.u32 %v1215, 2147483648
    %v1231 = vor.u32 1.1754944e-38, %v1230
    %v1232 = vsel %vm1229, %v1231, %v1227
    %v1233 = vmul.f32 %v1210, %v1232
    %v1234 = vrcp.pop %v1218
    %v1235 = vmul.f32 %v1218, %v1234
    %v1236 = vsub.f32 1.0, %v1235
    %v1237 = vmul.f32 %v1234, %v1236
    %v1238 = vadd.f32 %v1234, %v1237
    %vm1239 = vweird.f32 %v1218
    %vm1240 = vweird.f32 %v1234
    %vm1241 = vmor %vm1239, %vm1240
    %v1242 = vsel %vm1241, %v1234, %v1238
    %v1243 = vand.u32 2147483647, %v1218
    %vm1244 = vcmp.eq.f32.partialorder %v1243, 8.507059e+37
    %v1245 = vand.u32 %v1218, 2147483648
    %v1246 = vor.u32 1.1754944e-38, %v1245
    %v1247 = vsel %vm1244, %v1246, %v1242
    %v1248 = vmul.f32 %v1212, %v1247
    %v1249 = vpack.c.bf16 %v1248, %v1233
    %1250 = vrot.lane.b32.xlu0 %v972, 104
    %v1251 = vpop.permute.xlu0 %1250
    %v1254 = vsel %vm500, %v1249, 0
    %1256 = vmatpush.bf16.msra.mxu0 0
    %1257 = vmatpush.bf16.msra.mxu0 0
    %1258 = vmatpush.bf16.msra.mxu0 0
    %1259 = vmatpush.bf16.msra.mxu0 0
    %1260 = vmatpush.bf16.msra.mxu0 0
    %1261 = vmatpush.bf16.msra.mxu0 0
    %1262 = vmatpush.bf16.msra.mxu0 0
    %1263 = vmatpush.bf16.msra.mxu0 %v1251
    %1264 = vmatmul.bf16.gmra.mxu0 %v1254
    %v1265 = vpop.f32.mrf.mxu0
    %v1266 = vadd.f32 0.0, %v1265
    %v1267 = vpop.f32.mrf.mxu0
    %v1268 = vadd.f32 0.0, %v1267
    %1269 = vdwg.mxu0
    %1272 = vrot.lane.b32.xlu0 %v1080, 8
    %v1273 = vpop.permute.xlu0 %1272
    %1274 = vrot.lane.b32.xlu0 %v1082, 8
    %v1275 = vpop.permute.xlu0 %1274
    %1280 = vrot.lane.b32.xlu0 %v1173, 16
    %v1281 = vpop.permute.xlu0 %1280
    %1282 = vrot.lane.b32.xlu0 %v1175, 16
    %v1283 = vpop.permute.xlu0 %1282
    %1288 = vrot.lane.b32.xlu0 %v1266, 24
    %v1289 = vpop.permute.xlu0 %1288
    %1290 = vrot.lane.b32.xlu0 %v1268, 24
    %v1291 = vpop.permute.xlu0 %1290
    %v1294 = vsel %vm479, %v987, %v1273
    %v1295 = vsel %vm479, %v989, %v1275
    %v1296 = vsel %vm500, %v1294, %v1281
    %v1297 = vsel %vm500, %v1295, %v1283
    %v1298 = vsel %vm880, %v1296, %v1289
    %v1299 = vsel %vm880, %v1297, %v1291
    %v1300 = vld [vmem:[#allocation8] sm:$0xf]
    %v1301 = vld [vmem:[#allocation8 + $0x4] sm:$0xf]
    %v1302 = vld [vmem:[#allocation8 + $0x8] sm:$0xf]
    %v1303 = vld [vmem:[#allocation8 + $0xc] sm:$0xf]
    %v1304 = vpack.c.bf16 %v882, %v881
    %v1305 = vpack.c.bf16 %v1299, %v1298
    %v1310 = vunpack.c.l.b16 %v1300
    %v1311 = vunpack.c.l.b16 %v1301
    %v1312 = vunpack.c.l.b16 %v1302
    %v1313 = vunpack.c.l.b16 %v1303
    %v1314 = vpack.c.b16 %v1311, %v1310
    %v1315 = vpack.c.b16 %v1313, %v1312
    %v1319 = vsel %vm255, %v1304, 0
    %v1322 = vsel %vm255, %v1305, 0
    %1324 = vmatpush.bf16.msra.mxu0 0
    %1325 = vmatpush.bf16.msra.mxu0 0
    %1326 = vmatpush.bf16.msra.mxu0 0
    %1327 = vmatpush.bf16.msra.mxu0 0
    %1328 = vmatpush.bf16.msra.mxu0 0
    %1329 = vmatpush.bf16.msra.mxu0 0
    %1330 = vmatpush.bf16.msra.mxu0 %v1315
    %1331 = vmatpush.bf16.msra.mxu0 %v1314
    %1332 = vmatmul.bf16.gmra.mxu0 %v1319
    %v1333 = vpop.f32.mrf.mxu0
    %v1334 = vadd.f32 0.0, %v1333
    %v1335 = vpop.f32.mrf.mxu0
    %v1336 = vadd.f32 0.0, %v1335
    %1337 = vmatmul.bf16.gmra.mxu0 %v1322
    %v1338 = vpop.f32.mrf.mxu0
    %v1339 = vadd.f32 0.0, %v1338
    %v1340 = vpop.f32.mrf.mxu0
    %v1341 = vadd.f32 0.0, %v1340
    %1342 = vdwg.mxu0
    %v1343 = vadd.f32 %v227, %v1334
    %v1344 = vadd.f32 %v226, %v1336
    %v1345 = vadd.f32 %v249, %v1339
    %v1346 = vadd.f32 %v247, %v1341
    %v1347 = vld [vmem:[#allocation10] sm:$0x1]
    %v1349 = vperm.slane %v1347, 0
    %v1351 = vadd.f32 %v1343, %v1349
    %v1352 = vadd.f32 %v1344, %v1349
    %v1353 = vadd.f32 %v1345, %v1349
    %v1354 = vadd.f32 %v1346, %v1349
    %v1355 = vld [vmem:[#allocation11] sm:$0x1]
    %v1356 = vmul.f32 %v1351, %v1351
    %v1357 = vmul.f32 %v1352, %v1352
    %v1358 = vmul.f32 %v1353, %v1353
    %v1359 = vmul.f32 %v1354, %v1354
    %v1360 = vsel %vm255, %v1356, 0.0
    %1361 = vadd.xlane.f32.xlu0 %v1360
    %v1362 = vpop.xlane.xlu0 %1361
    %v1363 = vsel %vm255, %v1357, 0.0
    %1364 = vadd.xlane.f32.xlu0 %v1363
    %v1365 = vpop.xlane.xlu0 %1364
    %v1366 = vsel %vm255, %v1358, 0.0
    %1367 = vadd.xlane.f32.xlu0 %v1366
    %v1368 = vpop.xlane.xlu0 %1367
    %v1369 = vsel %vm255, %v1359, 0.0
    %1370 = vadd.xlane.f32.xlu0 %v1369
    %v1371 = vpop.xlane.xlu0 %1370
    %v1372 = vmul.f32 %v1362, %v274
    %v1373 = vmul.f32 %v1365, %v274
    %v1374 = vmul.f32 %v1368, %v274
    %v1375 = vmul.f32 %v1371, %v274
    %v1376 = vadd.f32 %v1372, 1e-06
    %v1377 = vadd.f32 %v1373, 1e-06
    %v1378 = vadd.f32 %v1374, 1e-06
    %v1379 = vadd.f32 %v1375, 1e-06
    %v1380 = vrsqrt.pop %v1376
    %v1381 = vmul.f32 %v1380, %v1376
    %v1382 = vmul.f32 %v1381, %v1380
    %v1383 = vmul.f32 0.5, %v1382
    %v1384 = vsub.f32 1.5, %v1383
    %v1385 = vmul.f32 %v1380, %v1384
    %vm1386 = vweird.f32 %v1376
    %vm1387 = vweird.f32 %v1380
    %vm1388 = vmor %vm1386, %vm1387
    %v1389 = vsel %vm1388, %v1380, %v1385
    %v1390 = vrsqrt.pop %v1377
    %v1391 = vmul.f32 %v1390, %v1377
    %v1392 = vmul.f32 %v1391, %v1390
    %v1393 = vmul.f32 0.5, %v1392
    %v1394 = vsub.f32 1.5, %v1393
    %v1395 = vmul.f32 %v1390, %v1394
    %vm1396 = vweird.f32 %v1377
    %vm1397 = vweird.f32 %v1390
    %vm1398 = vmor %vm1396, %vm1397
    %v1399 = vsel %vm1398, %v1390, %v1395
    %v1400 = vrsqrt.pop %v1378
    %v1401 = vmul.f32 %v1400, %v1378
    %v1402 = vmul.f32 %v1401, %v1400
    %v1403 = vmul.f32 0.5, %v1402
    %v1404 = vsub.f32 1.5, %v1403
    %v1405 = vmul.f32 %v1400, %v1404
    %vm1406 = vweird.f32 %v1378
    %vm1407 = vweird.f32 %v1400
    %vm1408 = vmor %vm1406, %vm1407
    %v1409 = vsel %vm1408, %v1400, %v1405
    %v1410 = vrsqrt.pop %v1379
    %v1411 = vmul.f32 %v1410, %v1379
    %v1412 = vmul.f32 %v1411, %v1410
    %v1413 = vmul.f32 0.5, %v1412
    %v1414 = vsub.f32 1.5, %v1413
    %v1415 = vmul.f32 %v1410, %v1414
    %vm1416 = vweird.f32 %v1379
    %vm1417 = vweird.f32 %v1410
    %vm1418 = vmor %vm1416, %vm1417
    %v1419 = vsel %vm1418, %v1410, %v1415
    %v1420 = vmul.f32 %v1351, %v1389
    %v1421 = vmul.f32 %v1352, %v1399
    %v1422 = vmul.f32 %v1353, %v1409
    %v1423 = vmul.f32 %v1354, %v1419
    %v1425 = vperm.slane %v1355, 0
    %v1427 = vmul.f32 %v1420, %v1425
    %v1428 = vmul.f32 %v1421, %v1425
    %v1429 = vmul.f32 %v1422, %v1425
    %v1430 = vmul.f32 %v1423, %v1425
    %v1431 = vpack.c.bf16 %v1428, %v1427
    %v1432 = vpack.c.bf16 %v1430, %v1429
    %v1433 = vld [vmem:[#allocation13] sm:$0xf]
    %v1434 = vld [vmem:[#allocation13 + $0x4] sm:$0xf]
    %v1435 = vld [vmem:[#allocation13 + $0x8] sm:$0xf]
    %v1436 = vld [vmem:[#allocation13 + $0xc] sm:$0xf]
    %v1441 = vunpack.c.l.b16 %v1433
    %v1442 = vunpack.c.l.b16 %v1434
    %v1443 = vunpack.c.l.b16 %v1435
    %v1444 = vunpack.c.l.b16 %v1436
    %v1445 = vpack.c.b16 %v1442, %v1441
    %v1446 = vpack.c.b16 %v1444, %v1443
    %v1450 = vsel %vm255, %v1431, 0
    %v1453 = vsel %vm255, %v1432, 0
    %1455 = vmatpush.bf16.msra.mxu0 0
    %1456 = vmatpush.bf16.msra.mxu0 0
    %1457 = vmatpush.bf16.msra.mxu0 0
    %1458 = vmatpush.bf16.msra.mxu0 0
    %1459 = vmatpush.bf16.msra.mxu0 0
    %1460 = vmatpush.bf16.msra.mxu0 0
    %1461 = vmatpush.bf16.msra.mxu0 %v1446
    %1462 = vmatpush.bf16.msra.mxu0 %v1445
    %1463 = vmatmul.bf16.gmra.mxu0 %v1450
    %v1464 = vpop.f32.mrf.mxu0
    %v1465 = vadd.f32 0.0, %v1464
    %v1466 = vpop.f32.mrf.mxu0
    %v1467 = vadd.f32 0.0, %v1466
    %1468 = vmatmul.bf16.gmra.mxu0 %v1453
    %v1469 = vpop.f32.mrf.mxu0
    %v1470 = vadd.f32 0.0, %v1469
    %v1471 = vpop.f32.mrf.mxu0
    %v1472 = vadd.f32 0.0, %v1471
    %1473 = vdwg.mxu0
    %v1474 = vmul.f32 %v1465, %v1465
    %v1475 = vmul.f32 %v1467, %v1467
    %v1476 = vmul.f32 %v1470, %v1470
    %v1477 = vmul.f32 %v1472, %v1472
    %v1478 = vmul.f32 %v1465, %v1474
    %v1479 = vmul.f32 %v1467, %v1475
    %v1480 = vmul.f32 %v1470, %v1476
    %v1481 = vmul.f32 %v1472, %v1477
    %v1482 = vmul.f32 %v1478, 0.044715
    %v1483 = vmul.f32 %v1479, 0.044715
    %v1484 = vmul.f32 %v1480, 0.044715
    %v1485 = vmul.f32 %v1481, 0.044715
    %v1486 = vadd.f32 %v1465, %v1482
    %v1487 = vadd.f32 %v1467, %v1483
    %v1488 = vadd.f32 %v1470, %v1484
    %v1489 = vadd.f32 %v1472, %v1485
    %v1490 = vmul.f32 %v1486, 0.7978846
    %v1491 = vmul.f32 %v1487, 0.7978846
    %v1492 = vmul.f32 %v1488, 0.7978846
    %v1493 = vmul.f32 %v1489, 0.7978846
    %v1494 = vtanh.pop %v1490
    %v1495 = vtanh.pop %v1491
    %v1496 = vtanh.pop %v1492
    %v1497 = vtanh.pop %v1493
    %v1498 = vadd.f32 %v1494, 1.0
    %v1499 = vadd.f32 %v1495, 1.0
    %v1500 = vadd.f32 %v1496, 1.0
    %v1501 = vadd.f32 %v1497, 1.0
    %v1502 = vmul.f32 %v1498, 0.5
    %v1503 = vmul.f32 %v1499, 0.5
    %v1504 = vmul.f32 %v1500, 0.5
    %v1505 = vmul.f32 %v1501, 0.5
    %v1506 = vmul.f32 %v1465, %v1502
    %v1507 = vmul.f32 %v1467, %v1503
    %v1508 = vmul.f32 %v1470, %v1504
    %v1509 = vmul.f32 %v1472, %v1505
    %v1510 = vld [vmem:[#allocation14] sm:$0xf]
    %v1511 = vld [vmem:[#allocation14 + $0x4] sm:$0xf]
    %v1512 = vld [vmem:[#allocation14 + $0x8] sm:$0xf]
    %v1513 = vld [vmem:[#allocation14 + $0xc] sm:$0xf]
    %v1518 = vunpack.c.l.b16 %v1510
    %v1519 = vunpack.c.l.b16 %v1511
    %v1520 = vunpack.c.l.b16 %v1512
    %v1521 = vunpack.c.l.b16 %v1513
    %v1522 = vpack.c.b16 %v1519, %v1518
    %v1523 = vpack.c.b16 %v1521, %v1520
    %1526 = vmatpush.bf16.msra.mxu0 0
    %1527 = vmatpush.bf16.msra.mxu0 0
    %1528 = vmatpush.bf16.msra.mxu0 0
    %1529 = vmatpush.bf16.msra.mxu0 0
    %1530 = vmatpush.bf16.msra.mxu0 0
    %1531 = vmatpush.bf16.msra.mxu0 0
    %1532 = vmatpush.bf16.msra.mxu0 %v1523
    %1533 = vmatpush.bf16.msra.mxu0 %v1522
    %1534 = vmatmul.bf16.gmra.mxu0 %v1450
    %v1535 = vpop.f32.mrf.mxu0
    %v1536 = vadd.f32 0.0, %v1535
    %v1537 = vpop.f32.mrf.mxu0
    %v1538 = vadd.f32 0.0, %v1537
    %1539 = vmatmul.bf16.gmra.mxu0 %v1453
    %v1540 = vpop.f32.mrf.mxu0
    %v1541 = vadd.f32 0.0, %v1540
    %v1542 = vpop.f32.mrf.mxu0
    %v1543 = vadd.f32 0.0, %v1542
    %1544 = vdwg.mxu0
    %v1545 = vmul.f32 %v1506, %v1536
    %v1546 = vmul.f32 %v1507, %v1538
    %v1547 = vmul.f32 %v1508, %v1541
    %v1548 = vmul.f32 %v1509, %v1543
    %v1549 = vld [vmem:[%s16] sm:$0xf]
    %v1550 = vld [vmem:[%s16 + $0x4] sm:$0xf]
    %v1551 = vld [vmem:[%s16 + $0x8] sm:$0xf]
    %v1552 = vld [vmem:[%s16 + $0xc] sm:$0xf]
    %v1553 = vld [vmem:[%s16 + $0x10] sm:$0xf]
    %v1554 = vld [vmem:[%s16 + $0x14] sm:$0xf]
    %v1555 = vld [vmem:[%s16 + $0x18] sm:$0xf]
    %v1556 = vld [vmem:[%s16 + $0x1c] sm:$0xf]
    %v1557 = vpack.c.bf16 %v1546, %v1545
    %v1558 = vpack.c.bf16 %v1548, %v1547
    %v1567 = vunpack.c.l.b16 %v1549
    %v1568 = vunpack.c.l.b16 %v1550
    %v1569 = vunpack.c.l.b16 %v1551
    %v1570 = vunpack.c.l.b16 %v1552
    %v1571 = vunpack.c.l.b16 %v1553
    %v1572 = vunpack.c.l.b16 %v1554
    %v1573 = vunpack.c.l.b16 %v1555
    %v1574 = vunpack.c.l.b16 %v1556
    %v1575 = vpack.c.b16 %v1568, %v1567
    %v1576 = vpack.c.b16 %v1570, %v1569
    %v1577 = vpack.c.b16 %v1572, %v1571
    %v1578 = vpack.c.b16 %v1574, %v1573
    %vm1583 = vcmask 523264
    %v1585 = vsel %vm1583, %v1557, 0
    %v1588 = vsel %vm1583, %v1558, 0
    %1590 = vmatpush.bf16.msra.mxu0 0
    %1591 = vmatpush.bf16.msra.mxu0 0
    %1592 = vmatpush.bf16.msra.mxu0 0
    %1593 = vmatpush.bf16.msra.mxu0 0
    %1594 = vmatpush.bf16.msra.mxu0 %v1578
    %1595 = vmatpush.bf16.msra.mxu0 %v1577
    %1596 = vmatpush.bf16.msra.mxu0 %v1576
    %1597 = vmatpush.bf16.msra.mxu0 %v1575
    %1598 = vmatmul.bf16.gmra.mxu0 %v1585
    %v1599 = vpop.f32.mrf.mxu0
    %v1600 = vadd.f32 0.0, %v1599
    %v1601 = vpop.f32.mrf.mxu0
    %v1602 = vadd.f32 0.0, %v1601
    %1603 = vmatmul.bf16.gmra.mxu0 %v1588
    %v1604 = vpop.f32.mrf.mxu0
    %v1605 = vadd.f32 0.0, %v1604
    %v1606 = vpop.f32.mrf.mxu0
    %v1607 = vadd.f32 0.0, %v1606
    %1608 = vdwg.mxu0
    %v1609 = vadd.f32 %v1351, %v1600
    %v1610 = vadd.f32 %v1352, %v1602
    %v1611 = vadd.f32 %v1353, %v1605
    %v1612 = vadd.f32 %v1354, %v1607
    %s1613 = scalar_lea.vmem %s5, 1
    %v1614 = vld [vmem:[%s1613] sm:$0x1]
    %v1615 = vmul.f32 %v1609, %v1609
    %v1616 = vmul.f32 %v1610, %v1610
    %v1617 = vmul.f32 %v1611, %v1611
    %v1618 = vmul.f32 %v1612, %v1612
    %v1619 = vsel %vm255, %v1615, 0.0
    %1620 = vadd.xlane.f32.xlu0 %v1619
    %v1621 = vpop.xlane.xlu0 %1620
    %v1622 = vsel %vm255, %v1616, 0.0
    %1623 = vadd.xlane.f32.xlu0 %v1622
    %v1624 = vpop.xlane.xlu0 %1623
    %v1625 = vsel %vm255, %v1617, 0.0
    %1626 = vadd.xlane.f32.xlu0 %v1625
    %v1627 = vpop.xlane.xlu0 %1626
    %v1628 = vsel %vm255, %v1618, 0.0
    %1629 = vadd.xlane.f32.xlu0 %v1628
    %v1630 = vpop.xlane.xlu0 %1629
    %v1631 = vmul.f32 %v1621, %v274
    %v1632 = vmul.f32 %v1624, %v274
    %v1633 = vmul.f32 %v1627, %v274
    %v1634 = vmul.f32 %v1630, %v274
    %v1635 = vadd.f32 %v1631, 1e-06
    %v1636 = vadd.f32 %v1632, 1e-06
    %v1637 = vadd.f32 %v1633, 1e-06
    %v1638 = vadd.f32 %v1634, 1e-06
    %v1639 = vrsqrt.pop %v1635
    %v1640 = vmul.f32 %v1639, %v1635
    %v1641 = vmul.f32 %v1640, %v1639
    %v1642 = vmul.f32 0.5, %v1641
    %v1643 = vsub.f32 1.5, %v1642
    %v1644 = vmul.f32 %v1639, %v1643
    %vm1645 = vweird.f32 %v1635
    %vm1646 = vweird.f32 %v1639
    %vm1647 = vmor %vm1645, %vm1646
    %v1648 = vsel %vm1647, %v1639, %v1644
    %v1649 = vrsqrt.pop %v1636
    %v1650 = vmul.f32 %v1649, %v1636
    %v1651 = vmul.f32 %v1650, %v1649
    %v1652 = vmul.f32 0.5, %v1651
    %v1653 = vsub.f32 1.5, %v1652
    %v1654 = vmul.f32 %v1649, %v1653
    %vm1655 = vweird.f32 %v1636
    %vm1656 = vweird.f32 %v1649
    %vm1657 = vmor %vm1655, %vm1656
    %v1658 = vsel %vm1657, %v1649, %v1654
    %v1659 = vrsqrt.pop %v1637
    %v1660 = vmul.f32 %v1659, %v1637
    %v1661 = vmul.f32 %v1660, %v1659
    %v1662 = vmul.f32 0.5, %v1661
    %v1663 = vsub.f32 1.5, %v1662
    %v1664 = vmul.f32 %v1659, %v1663
    %vm1665 = vweird.f32 %v1637
    %vm1666 = vweird.f32 %v1659
    %vm1667 = vmor %vm1665, %vm1666
    %v1668 = vsel %vm1667, %v1659, %v1664
    %v1669 = vrsqrt.pop %v1638
    %v1670 = vmul.f32 %v1669, %v1638
    %v1671 = vmul.f32 %v1670, %v1669
    %v1672 = vmul.f32 0.5, %v1671
    %v1673 = vsub.f32 1.5, %v1672
    %v1674 = vmul.f32 %v1669, %v1673
    %vm1675 = vweird.f32 %v1638
    %vm1676 = vweird.f32 %v1669
    %vm1677 = vmor %vm1675, %vm1676
    %v1678 = vsel %vm1677, %v1669, %v1674
    %v1679 = vmul.f32 %v1609, %v1648
    %v1680 = vmul.f32 %v1610, %v1658
    %v1681 = vmul.f32 %v1611, %v1668
    %v1682 = vmul.f32 %v1612, %v1678
    %v1684 = vperm.slane %v1614, 0
    %v1686 = vmul.f32 %v1679, %v1684
    %v1687 = vmul.f32 %v1680, %v1684
    %v1688 = vmul.f32 %v1681, %v1684
    %v1689 = vmul.f32 %v1682, %v1684
    %s1690 = scalar_lea.vmem %s6, 16
    %v1691 = vld [vmem:[%s1690] sm:$0xf]
    %v1692 = vld [vmem:[%s1690 + $0x4] sm:$0xf]
    %v1693 = vld [vmem:[%s1690 + $0x8] sm:$0xf]
    %v1694 = vld [vmem:[%s1690 + $0xc] sm:$0xf]
    %v1695 = vpack.c.bf16 %v1687, %v1686
    %v1696 = vpack.c.bf16 %v1689, %v1688
    %s1697 = scalar_lea.vmem %s7, 1
    %v1698 = vld [vmem:[%s1697] sm:$0x1]
    %v1700 = vperm.slane %v1698, 0
    %v1706 = vunpack.c.l.b16 %v1691
    %v1707 = vunpack.c.l.b16 %v1692
    %v1708 = vunpack.c.l.b16 %v1693
    %v1709 = vunpack.c.l.b16 %v1694
    %v1710 = vpack.c.b16 %v1707, %v1706
    %v1711 = vpack.c.b16 %v1709, %v1708
    %v1715 = vsel %vm255, %v1695, 0
    %v1718 = vsel %vm255, %v1696, 0
    %1720 = vmatpush.bf16.msra.mxu0 0
    %1721 = vmatpush.bf16.msra.mxu0 0
    %1722 = vmatpush.bf16.msra.mxu0 0
    %1723 = vmatpush.bf16.msra.mxu0 0
    %1724 = vmatpush.bf16.msra.mxu0 0
    %1725 = vmatpush.bf16.msra.mxu0 0
    %1726 = vmatpush.bf16.msra.mxu0 %v1711
    %1727 = vmatpush.bf16.msra.mxu0 %v1710
    %1728 = vmatmul.bf16.gmra.mxu0 %v1715
    %v1729 = vpop.f32.mrf.mxu0
    %v1730 = vadd.f32 %v1700, %v1729
    %v1731 = vpop.f32.mrf.mxu0
    %v1732 = vadd.f32 %v1700, %v1731
    %1733 = vmatmul.bf16.gmra.mxu0 %v1718
    %v1734 = vpop.f32.mrf.mxu0
    %v1735 = vadd.f32 %v1700, %v1734
    %v1736 = vpop.f32.mrf.mxu0
    %v1737 = vadd.f32 %v1700, %v1736
    %1738 = vdwg.mxu0
    %v1739 = vmul.f32 %v1730, 0.59460354
    %v1740 = vmul.f32 %v1732, 0.59460354
    %v1741 = vmul.f32 %v1735, 0.59460354
    %v1742 = vmul.f32 %v1737, 0.59460354
    %s1743 = scalar_lea.vmem %s8, 16
    %v1744 = vld [vmem:[%s1743] sm:$0xf]
    %v1745 = vld [vmem:[%s1743 + $0x4] sm:$0xf]
    %v1746 = vld [vmem:[%s1743 + $0x8] sm:$0xf]
    %v1747 = vld [vmem:[%s1743 + $0xc] sm:$0xf]
    %v1752 = vunpack.c.l.b16 %v1744
    %v1753 = vunpack.c.l.b16 %v1745
    %v1754 = vunpack.c.l.b16 %v1746
    %v1755 = vunpack.c.l.b16 %v1747
    %v1756 = vpack.c.b16 %v1753, %v1752
    %v1757 = vpack.c.b16 %v1755, %v1754
    %1760 = vmatpush.bf16.msra.mxu0 0
    %1761 = vmatpush.bf16.msra.mxu0 0
    %1762 = vmatpush.bf16.msra.mxu0 0
    %1763 = vmatpush.bf16.msra.mxu0 0
    %1764 = vmatpush.bf16.msra.mxu0 0
    %1765 = vmatpush.bf16.msra.mxu0 0
    %1766 = vmatpush.bf16.msra.mxu0 %v1757
    %1767 = vmatpush.bf16.msra.mxu0 %v1756
    %1768 = vmatmul.bf16.gmra.mxu0 %v1715
    %v1769 = vpop.f32.mrf.mxu0
    %v1770 = vadd.f32 0.0, %v1769
    %v1771 = vpop.f32.mrf.mxu0
    %v1772 = vadd.f32 0.0, %v1771
    %1773 = vmatmul.bf16.gmra.mxu0 %v1718
    %v1774 = vpop.f32.mrf.mxu0
    %v1775 = vadd.f32 0.0, %v1774
    %v1776 = vpop.f32.mrf.mxu0
    %v1777 = vadd.f32 0.0, %v1776
    %1778 = vdwg.mxu0
    %v1779 = vmul.f32 %v1770, 0.59460354
    %v1780 = vmul.f32 %v1772, 0.59460354
    %v1781 = vmul.f32 %v1775, 0.59460354
    %v1782 = vmul.f32 %v1777, 0.59460354
    %s1783 = scalar_lea.vmem %s9, 16
    %v1784 = vld [vmem:[%s1783] sm:$0xf]
    %v1785 = vld [vmem:[%s1783 + $0x4] sm:$0xf]
    %v1786 = vld [vmem:[%s1783 + $0x8] sm:$0xf]
    %v1787 = vld [vmem:[%s1783 + $0xc] sm:$0xf]
    %s1788 = scalar_lea.vmem [#allocation7], 1
    %v1789 = vld [vmem:[%s1788] sm:$0x1]
    %v1791 = vperm.slane %v1789, 0
    %v1797 = vunpack.c.l.b16 %v1784
    %v1798 = vunpack.c.l.b16 %v1785
    %v1799 = vunpack.c.l.b16 %v1786
    %v1800 = vunpack.c.l.b16 %v1787
    %v1801 = vpack.c.b16 %v1798, %v1797
    %v1802 = vpack.c.b16 %v1800, %v1799
    %1805 = vmatpush.bf16.msra.mxu0 0
    %1806 = vmatpush.bf16.msra.mxu0 0
    %1807 = vmatpush.bf16.msra.mxu0 0
    %1808 = vmatpush.bf16.msra.mxu0 0
    %1809 = vmatpush.bf16.msra.mxu0 0
    %1810 = vmatpush.bf16.msra.mxu0 0
    %1811 = vmatpush.bf16.msra.mxu0 %v1802
    %1812 = vmatpush.bf16.msra.mxu0 %v1801
    %1813 = vmatmul.bf16.gmra.mxu0 %v1715
    %v1814 = vpop.f32.mrf.mxu0
    %v1815 = vadd.f32 %v1791, %v1814
    %v1816 = vpop.f32.mrf.mxu0
    %v1817 = vadd.f32 %v1791, %v1816
    %1818 = vmatmul.bf16.gmra.mxu0 %v1718
    %v1819 = vpop.f32.mrf.mxu0
    %v1820 = vadd.f32 %v1791, %v1819
    %v1821 = vpop.f32.mrf.mxu0
    %v1822 = vadd.f32 %v1791, %v1821
    %1823 = vdwg.mxu0
    %v1824 = vpack.c.bf16 %v1739, %v1739
    %v1825 = vpack.c.bf16 %v1740, %v1740
    %v1826 = vpack.c.bf16 %v1779, %v1779
    %v1827 = vpack.c.bf16 %v1780, %v1780
    %v1828 = vpack.c.bf16 %v1815, %v1815
    %v1829 = vpack.c.bf16 %v1817, %v1817
    %v1832 = vunpack.c.l.b16 %v1824
    %v1833 = vunpack.c.l.b16 %v1825
    %v1834 = vpack.c.b16 %v1833, %v1832
    %v1837 = vunpack.c.l.b16 %v1826
    %v1838 = vunpack.c.l.b16 %v1827
    %v1839 = vpack.c.b16 %v1838, %v1837
    %v1841 = vsel %vm479, %v1834, 0
    %v1844 = vsel %vm479, %v1839, 0
    %1846 = vmatpush.bf16.xpose.msra.mxu0 0
    %1847 = vmatpush.bf16.xpose.msra.mxu0 0
    %1848 = vmatpush.bf16.xpose.msra.mxu0 0
    %1849 = vmatpush.bf16.xpose.msra.mxu0 0
    %1850 = vmatpush.bf16.xpose.msra.mxu0 0
    %1851 = vmatpush.bf16.xpose.msra.mxu0 0
    %1852 = vmatpush.bf16.xpose.msra.mxu0 0
    %1853 = vmatpush.bf16.xpose.msra.mxu0 %v1844
    %1854 = vmatmul.bf16.gmra.mxu0 %v1841
    %v1855 = vpop.f32.mrf.mxu0
    %v1856 = vadd.f32 0.0, %v1855
    %v1857 = vpop.f32.mrf.mxu0
    %v1858 = vadd.f32 0.0, %v1857
    %1859 = vdwg.mxu0
    %v1860 = vsel %vm500, %v1856, -inf
    %1861 = vmax.xlane.f32.xlu0 %v1860
    %v1862 = vpop.xlane.xlu0 %1861
    %v1863 = vsel %vm500, %v1858, -inf
    %1864 = vmax.xlane.f32.xlu0 %v1863
    %v1865 = vpop.xlane.xlu0 %1864
    %v1866 = vsub.f32 %v1856, %v1862
    %v1867 = vsub.f32 %v1858, %v1865
    %v1868 = vmul.f32 %v1866, 1.442695
    %v1869 = vpow.pop %v1868
    %v1870 = vmul.f32 %v1867, 1.442695
    %v1871 = vpow.pop %v1870
    %v1872 = vsel %vm500, %v1869, 0.0
    %1873 = vadd.xlane.f32.xlu0 %v1872
    %v1874 = vpop.xlane.xlu0 %1873
    %v1875 = vsel %vm500, %v1871, 0.0
    %1876 = vadd.xlane.f32.xlu0 %v1875
    %v1877 = vpop.xlane.xlu0 %1876
    %v1878 = vrcp.pop %v1874
    %v1879 = vmul.f32 %v1874, %v1878
    %v1880 = vsub.f32 1.0, %v1879
    %v1881 = vmul.f32 %v1878, %v1880
    %v1882 = vadd.f32 %v1878, %v1881
    %vm1883 = vweird.f32 %v1874
    %vm1884 = vweird.f32 %v1878
    %vm1885 = vmor %vm1883, %vm1884
    %v1886 = vsel %vm1885, %v1878, %v1882
    %v1887 = vand.u32 2147483647, %v1874
    %vm1888 = vcmp.eq.f32.partialorder %v1887, 8.507059e+37
    %v1889 = vand.u32 %v1874, 2147483648
    %v1890 = vor.u32 1.1754944e-38, %v1889
    %v1891 = vsel %vm1888, %v1890, %v1886
    %v1892 = vmul.f32 %v1869, %v1891
    %v1893 = vrcp.pop %v1877
    %v1894 = vmul.f32 %v1877, %v1893
    %v1895 = vsub.f32 1.0, %v1894
    %v1896 = vmul.f32 %v1893, %v1895
    %v1897 = vadd.f32 %v1893, %v1896
    %vm1898 = vweird.f32 %v1877
    %vm1899 = vweird.f32 %v1893
    %vm1900 = vmor %vm1898, %vm1899
    %v1901 = vsel %vm1900, %v1893, %v1897
    %v1902 = vand.u32 2147483647, %v1877
    %vm1903 = vcmp.eq.f32.partialorder %v1902, 8.507059e+37
    %v1904 = vand.u32 %v1877, 2147483648
    %v1905 = vor.u32 1.1754944e-38, %v1904
    %v1906 = vsel %vm1903, %v1905, %v1901
    %v1907 = vmul.f32 %v1871, %v1906
    %v1908 = vpack.c.bf16 %v1907, %v1892
    %v1911 = vunpack.c.l.b16 %v1828
    %v1912 = vunpack.c.l.b16 %v1829
    %v1913 = vpack.c.b16 %v1912, %v1911
    %v1916 = vsel %vm500, %v1908, 0
    %1918 = vmatpush.bf16.msra.mxu0 0
    %1919 = vmatpush.bf16.msra.mxu0 0
    %1920 = vmatpush.bf16.msra.mxu0 0
    %1921 = vmatpush.bf16.msra.mxu0 0
    %1922 = vmatpush.bf16.msra.mxu0 0
    %1923 = vmatpush.bf16.msra.mxu0 0
    %1924 = vmatpush.bf16.msra.mxu0 0
    %1925 = vmatpush.bf16.msra.mxu0 %v1913
    %1926 = vmatmul.bf16.gmra.mxu0 %v1916
    %v1927 = vpop.f32.mrf.mxu0
    %v1928 = vadd.f32 0.0, %v1927
    %v1929 = vpop.f32.mrf.mxu0
    %v1930 = vadd.f32 0.0, %v1929
    %1931 = vdwg.mxu0
    %1932 = vrot.lane.b32.xlu0 %v1834, 120
    %v1933 = vpop.permute.xlu0 %1932
    %1934 = vrot.lane.b32.xlu0 %v1839, 120
    %v1935 = vpop.permute.xlu0 %1934
    %v1937 = vsel %vm479, %v1933, 0
    %v1940 = vsel %vm479, %v1935, 0
    %1942 = vmatpush.bf16.xpose.msra.mxu0 0
    %1943 = vmatpush.bf16.xpose.msra.mxu0 0
    %1944 = vmatpush.bf16.xpose.msra.mxu0 0
    %1945 = vmatpush.bf16.xpose.msra.mxu0 0
    %1946 = vmatpush.bf16.xpose.msra.mxu0 0
    %1947 = vmatpush.bf16.xpose.msra.mxu0 0
    %1948 = vmatpush.bf16.xpose.msra.mxu0 0
    %1949 = vmatpush.bf16.xpose.msra.mxu0 %v1940
    %1950 = vmatmul.bf16.gmra.mxu0 %v1937
    %v1951 = vpop.f32.mrf.mxu0
    %v1952 = vadd.f32 0.0, %v1951
    %v1953 = vpop.f32.mrf.mxu0
    %v1954 = vadd.f32 0.0, %v1953
    %1955 = vdwg.mxu0
    %v1956 = vsel %vm500, %v1952, -inf
    %1957 = vmax.xlane.f32.xlu0 %v1956
    %v1958 = vpop.xlane.xlu0 %1957
    %v1959 = vsel %vm500, %v1954, -inf
    %1960 = vmax.xlane.f32.xlu0 %v1959
    %v1961 = vpop.xlane.xlu0 %1960
    %v1962 = vsub.f32 %v1952, %v1958
    %v1963 = vsub.f32 %v1954, %v1961
    %v1964 = vmul.f32 %v1962, 1.442695
    %v1965 = vpow.pop %v1964
    %v1966 = vmul.f32 %v1963, 1.442695
    %v1967 = vpow.pop %v1966
    %v1968 = vsel %vm500, %v1965, 0.0
    %1969 = vadd.xlane.f32.xlu0 %v1968
    %v1970 = vpop.xlane.xlu0 %1969
    %v1971 = vsel %vm500, %v1967, 0.0
    %1972 = vadd.xlane.f32.xlu0 %v1971
    %v1973 = vpop.xlane.xlu0 %1972
    %v1974 = vrcp.pop %v1970
    %v1975 = vmul.f32 %v1970, %v1974
    %v1976 = vsub.f32 1.0, %v1975
    %v1977 = vmul.f32 %v1974, %v1976
    %v1978 = vadd.f32 %v1974, %v1977
    %vm1979 = vweird.f32 %v1970
    %vm1980 = vweird.f32 %v1974
    %vm1981 = vmor %vm1979, %vm1980
    %v1982 = vsel %vm1981, %v1974, %v1978
    %v1983 = vand.u32 2147483647, %v1970
    %vm1984 = vcmp.eq.f32.partialorder %v1983, 8.507059e+37
    %v1985 = vand.u32 %v1970, 2147483648
    %v1986 = vor.u32 1.1754944e-38, %v1985
    %v1987 = vsel %vm1984, %v1986, %v1982
    %v1988 = vmul.f32 %v1965, %v1987
    %v1989 = vrcp.pop %v1973
    %v1990 = vmul.f32 %v1973, %v1989
    %v1991 = vsub.f32 1.0, %v1990
    %v1992 = vmul.f32 %v1989, %v1991
    %v1993 = vadd.f32 %v1989, %v1992
    %vm1994 = vweird.f32 %v1973
    %vm1995 = vweird.f32 %v1989
    %vm1996 = vmor %vm1994, %vm1995
    %v1997 = vsel %vm1996, %v1989, %v1993
    %v1998 = vand.u32 2147483647, %v1973
    %vm1999 = vcmp.eq.f32.partialorder %v1998, 8.507059e+37
    %v2000 = vand.u32 %v1973, 2147483648
    %v2001 = vor.u32 1.1754944e-38, %v2000
    %v2002 = vsel %vm1999, %v2001, %v1997
    %v2003 = vmul.f32 %v1967, %v2002
    %v2004 = vpack.c.bf16 %v2003, %v1988
    %2005 = vrot.lane.b32.xlu0 %v1913, 120
    %v2006 = vpop.permute.xlu0 %2005
    %v2009 = vsel %vm500, %v2004, 0
    %2011 = vmatpush.bf16.msra.mxu0 0
    %2012 = vmatpush.bf16.msra.mxu0 0
    %2013 = vmatpush.bf16.msra.mxu0 0
    %2014 = vmatpush.bf16.msra.mxu0 0
    %2015 = vmatpush.bf16.msra.mxu0 0
    %2016 = vmatpush.bf16.msra.mxu0 0
    %2017 = vmatpush.bf16.msra.mxu0 0
    %2018 = vmatpush.bf16.msra.mxu0 %v2006
    %2019 = vmatmul.bf16.gmra.mxu0 %v2009
    %v2020 = vpop.f32.mrf.mxu0
    %v2021 = vadd.f32 0.0, %v2020
    %v2022 = vpop.f32.mrf.mxu0
    %v2023 = vadd.f32 0.0, %v2022
    %2024 = vdwg.mxu0
    %2025 = vrot.lane.b32.xlu0 %v1834, 112
    %v2026 = vpop.permute.xlu0 %2025
    %2027 = vrot.lane.b32.xlu0 %v1839, 112
    %v2028 = vpop.permute.xlu0 %2027
    %v2030 = vsel %vm479, %v2026, 0
    %v2033 = vsel %vm479, %v2028, 0
    %2035 = vmatpush.bf16.xpose.msra.mxu0 0
    %2036 = vmatpush.bf16.xpose.msra.mxu0 0
    %2037 = vmatpush.bf16.xpose.msra.mxu0 0
    %2038 = vmatpush.bf16.xpose.msra.mxu0 0
    %2039 = vmatpush.bf16.xpose.msra.mxu0 0
    %2040 = vmatpush.bf16.xpose.msra.mxu0 0
    %2041 = vmatpush.bf16.xpose.msra.mxu0 0
    %2042 = vmatpush.bf16.xpose.msra.mxu0 %v2033
    %2043 = vmatmul.bf16.gmra.mxu0 %v2030
    %v2044 = vpop.f32.mrf.mxu0
    %v2045 = vadd.f32 0.0, %v2044
    %v2046 = vpop.f32.mrf.mxu0
    %v2047 = vadd.f32 0.0, %v2046
    %2048 = vdwg.mxu0
    %v2049 = vsel %vm500, %v2045, -inf
    %2050 = vmax.xlane.f32.xlu0 %v2049
    %v2051 = vpop.xlane.xlu0 %2050
    %v2052 = vsel %vm500, %v2047, -inf
    %2053 = vmax.xlane.f32.xlu0 %v2052
    %v2054 = vpop.xlane.xlu0 %2053
    %v2055 = vsub.f32 %v2045, %v2051
    %v2056 = vsub.f32 %v2047, %v2054
    %v2057 = vmul.f32 %v2055, 1.442695
    %v2058 = vpow.pop %v2057
    %v2059 = vmul.f32 %v2056, 1.442695
    %v2060 = vpow.pop %v2059
    %v2061 = vsel %vm500, %v2058, 0.0
    %2062 = vadd.xlane.f32.xlu0 %v2061
    %v2063 = vpop.xlane.xlu0 %2062
    %v2064 = vsel %vm500, %v2060, 0.0
    %2065 = vadd.xlane.f32.xlu0 %v2064
    %v2066 = vpop.xlane.xlu0 %2065
    %v2067 = vrcp.pop %v2063
    %v2068 = vmul.f32 %v2063, %v2067
    %v2069 = vsub.f32 1.0, %v2068
    %v2070 = vmul.f32 %v2067, %v2069
    %v2071 = vadd.f32 %v2067, %v2070
    %vm2072 = vweird.f32 %v2063
    %vm2073 = vweird.f32 %v2067
    %vm2074 = vmor %vm2072, %vm2073
    %v2075 = vsel %vm2074, %v2067, %v2071
    %v2076 = vand.u32 2147483647, %v2063
    %vm2077 = vcmp.eq.f32.partialorder %v2076, 8.507059e+37
    %v2078 = vand.u32 %v2063, 2147483648
    %v2079 = vor.u32 1.1754944e-38, %v2078
    %v2080 = vsel %vm2077, %v2079, %v2075
    %v2081 = vmul.f32 %v2058, %v2080
    %v2082 = vrcp.pop %v2066
    %v2083 = vmul.f32 %v2066, %v2082
    %v2084 = vsub.f32 1.0, %v2083
    %v2085 = vmul.f32 %v2082, %v2084
    %v2086 = vadd.f32 %v2082, %v2085
    %vm2087 = vweird.f32 %v2066
    %vm2088 = vweird.f32 %v2082
    %vm2089 = vmor %vm2087, %vm2088
    %v2090 = vsel %vm2089, %v2082, %v2086
    %v2091 = vand.u32 2147483647, %v2066
    %vm2092 = vcmp.eq.f32.partialorder %v2091, 8.507059e+37
    %v2093 = vand.u32 %v2066, 2147483648
    %v2094 = vor.u32 1.1754944e-38, %v2093
    %v2095 = vsel %vm2092, %v2094, %v2090
    %v2096 = vmul.f32 %v2060, %v2095
    %v2097 = vpack.c.bf16 %v2096, %v2081
    %2098 = vrot.lane.b32.xlu0 %v1913, 112
    %v2099 = vpop.permute.xlu0 %2098
    %v2102 = vsel %vm500, %v2097, 0
    %2104 = vmatpush.bf16.msra.mxu0 0
    %2105 = vmatpush.bf16.msra.mxu0 0
    %2106 = vmatpush.bf16.msra.mxu0 0
    %2107 = vmatpush.bf16.msra.mxu0 0
    %2108 = vmatpush.bf16.msra.mxu0 0
    %2109 = vmatpush.bf16.msra.mxu0 0
    %2110 = vmatpush.bf16.msra.mxu0 0
    %2111 = vmatpush.bf16.msra.mxu0 %v2099
    %2112 = vmatmul.bf16.gmra.mxu0 %v2102
    %v2113 = vpop.f32.mrf.mxu0
    %v2114 = vadd.f32 0.0, %v2113
    %v2115 = vpop.f32.mrf.mxu0
    %v2116 = vadd.f32 0.0, %v2115
    %2117 = vdwg.mxu0
    %2118 = vrot.lane.b32.xlu0 %v1834, 104
    %v2119 = vpop.permute.xlu0 %2118
    %2120 = vrot.lane.b32.xlu0 %v1839, 104
    %v2121 = vpop.permute.xlu0 %2120
    %v2123 = vsel %vm479, %v2119, 0
    %v2126 = vsel %vm479, %v2121, 0
    %2128 = vmatpush.bf16.xpose.msra.mxu0 0
    %2129 = vmatpush.bf16.xpose.msra.mxu0 0
    %2130 = vmatpush.bf16.xpose.msra.mxu0 0
    %2131 = vmatpush.bf16.xpose.msra.mxu0 0
    %2132 = vmatpush.bf16.xpose.msra.mxu0 0
    %2133 = vmatpush.bf16.xpose.msra.mxu0 0
    %2134 = vmatpush.bf16.xpose.msra.mxu0 0
    %2135 = vmatpush.bf16.xpose.msra.mxu0 %v2126
    %2136 = vmatmul.bf16.gmra.mxu0 %v2123
    %v2137 = vpop.f32.mrf.mxu0
    %v2138 = vadd.f32 0.0, %v2137
    %v2139 = vpop.f32.mrf.mxu0
    %v2140 = vadd.f32 0.0, %v2139
    %2141 = vdwg.mxu0
    %v2142 = vsel %vm500, %v2138, -inf
    %2143 = vmax.xlane.f32.xlu0 %v2142
    %v2144 = vpop.xlane.xlu0 %2143
    %v2145 = vsel %vm500, %v2140, -inf
    %2146 = vmax.xlane.f32.xlu0 %v2145
    %v2147 = vpop.xlane.xlu0 %2146
    %v2148 = vsub.f32 %v2138, %v2144
    %v2149 = vsub.f32 %v2140, %v2147
    %v2150 = vmul.f32 %v2148, 1.442695
    %v2151 = vpow.pop %v2150
    %v2152 = vmul.f32 %v2149, 1.442695
    %v2153 = vpow.pop %v2152
    %v2154 = vsel %vm500, %v2151, 0.0
    %2155 = vadd.xlane.f32.xlu0 %v2154
    %v2156 = vpop.xlane.xlu0 %2155
    %v2157 = vsel %vm500, %v2153, 0.0
    %2158 = vadd.xlane.f32.xlu0 %v2157
    %v2159 = vpop.xlane.xlu0 %2158
    %v2160 = vrcp.pop %v2156
    %v2161 = vmul.f32 %v2156, %v2160
    %v2162 = vsub.f32 1.0, %v2161
    %v2163 = vmul.f32 %v2160, %v2162
    %v2164 = vadd.f32 %v2160, %v2163
    %vm2165 = vweird.f32 %v2156
    %vm2166 = vweird.f32 %v2160
    %vm2167 = vmor %vm2165, %vm2166
    %v2168 = vsel %vm2167, %v2160, %v2164
    %v2169 = vand.u32 2147483647, %v2156
    %vm2170 = vcmp.eq.f32.partialorder %v2169, 8.507059e+37
    %v2171 = vand.u32 %v2156, 2147483648
    %v2172 = vor.u32 1.1754944e-38, %v2171
    %v2173 = vsel %vm2170, %v2172, %v2168
    %v2174 = vmul.f32 %v2151, %v2173
    %v2175 = vrcp.pop %v2159
    %v2176 = vmul.f32 %v2159, %v2175
    %v2177 = vsub.f32 1.0, %v2176
    %v2178 = vmul.f32 %v2175, %v2177
    %v2179 = vadd.f32 %v2175, %v2178
    %vm2180 = vweird.f32 %v2159
    %vm2181 = vweird.f32 %v2175
    %vm2182 = vmor %vm2180, %vm2181
    %v2183 = vsel %vm2182, %v2175, %v2179
    %v2184 = vand.u32 2147483647, %v2159
    %vm2185 = vcmp.eq.f32.partialorder %v2184, 8.507059e+37
    %v2186 = vand.u32 %v2159, 2147483648
    %v2187 = vor.u32 1.1754944e-38, %v2186
    %v2188 = vsel %vm2185, %v2187, %v2183
    %v2189 = vmul.f32 %v2153, %v2188
    %v2190 = vpack.c.bf16 %v2189, %v2174
    %2191 = vrot.lane.b32.xlu0 %v1913, 104
    %v2192 = vpop.permute.xlu0 %2191
    %v2195 = vsel %vm500, %v2190, 0
    %2197 = vmatpush.bf16.msra.mxu0 0
    %2198 = vmatpush.bf16.msra.mxu0 0
    %2199 = vmatpush.bf16.msra.mxu0 0
    %2200 = vmatpush.bf16.msra.mxu0 0
    %2201 = vmatpush.bf16.msra.mxu0 0
    %2202 = vmatpush.bf16.msra.mxu0 0
    %2203 = vmatpush.bf16.msra.mxu0 0
    %2204 = vmatpush.bf16.msra.mxu0 %v2192
    %2205 = vmatmul.bf16.gmra.mxu0 %v2195
    %v2206 = vpop.f32.mrf.mxu0
    %v2207 = vadd.f32 0.0, %v2206
    %v2208 = vpop.f32.mrf.mxu0
    %v2209 = vadd.f32 0.0, %v2208
    %2210 = vdwg.mxu0
    %2213 = vrot.lane.b32.xlu0 %v2021, 8
    %v2214 = vpop.permute.xlu0 %2213
    %2215 = vrot.lane.b32.xlu0 %v2023, 8
    %v2216 = vpop.permute.xlu0 %2215
    %2221 = vrot.lane.b32.xlu0 %v2114, 16
    %v2222 = vpop.permute.xlu0 %2221
    %2223 = vrot.lane.b32.xlu0 %v2116, 16
    %v2224 = vpop.permute.xlu0 %2223
    %2229 = vrot.lane.b32.xlu0 %v2207, 24
    %v2230 = vpop.permute.xlu0 %2229
    %2231 = vrot.lane.b32.xlu0 %v2209, 24
    %v2232 = vpop.permute.xlu0 %2231
    %v2235 = vsel %vm479, %v1928, %v2214
    %v2236 = vsel %vm479, %v1930, %v2216
    %v2237 = vsel %vm500, %v2235, %v2222
    %v2238 = vsel %vm500, %v2236, %v2224
    %v2239 = vsel %vm880, %v2237, %v2230
    %v2240 = vsel %vm880, %v2238, %v2232
    %v2241 = vpack.c.bf16 %v1741, %v1741
    %v2242 = vpack.c.bf16 %v1742, %v1742
    %v2243 = vpack.c.bf16 %v1781, %v1781
    %v2244 = vpack.c.bf16 %v1782, %v1782
    %v2245 = vpack.c.bf16 %v1820, %v1820
    %v2246 = vpack.c.bf16 %v1822, %v1822
    %v2249 = vunpack.c.l.b16 %v2241
    %v2250 = vunpack.c.l.b16 %v2242
    %v2251 = vpack.c.b16 %v2250, %v2249
    %v2254 = vunpack.c.l.b16 %v2243
    %v2255 = vunpack.c.l.b16 %v2244
    %v2256 = vpack.c.b16 %v2255, %v2254
    %v2258 = vsel %vm479, %v2251, 0
    %v2261 = vsel %vm479, %v2256, 0
    %2263 = vmatpush.bf16.xpose.msra.mxu0 0
    %2264 = vmatpush.bf16.xpose.msra.mxu0 0
    %2265 = vmatpush.bf16.xpose.msra.mxu0 0
    %2266 = vmatpush.bf16.xpose.msra.mxu0 0
    %2267 = vmatpush.bf16.xpose.msra.mxu0 0
    %2268 = vmatpush.bf16.xpose.msra.mxu0 0
    %2269 = vmatpush.bf16.xpose.msra.mxu0 0
    %2270 = vmatpush.bf16.xpose.msra.mxu0 %v2261
    %2271 = vmatmul.bf16.gmra.mxu0 %v2258
    %v2272 = vpop.f32.mrf.mxu0
    %v2273 = vadd.f32 0.0, %v2272
    %v2274 = vpop.f32.mrf.mxu0
    %v2275 = vadd.f32 0.0, %v2274
    %2276 = vdwg.mxu0
    %v2277 = vsel %vm500, %v2273, -inf
    %2278 = vmax.xlane.f32.xlu0 %v2277
    %v2279 = vpop.xlane.xlu0 %2278
    %v2280 = vsel %vm500, %v2275, -inf
    %2281 = vmax.xlane.f32.xlu0 %v2280
    %v2282 = vpop.xlane.xlu0 %2281
    %v2283 = vsub.f32 %v2273, %v2279
    %v2284 = vsub.f32 %v2275, %v2282
    %v2285 = vmul.f32 %v2283, 1.442695
    %v2286 = vpow.pop %v2285
    %v2287 = vmul.f32 %v2284, 1.442695
    %v2288 = vpow.pop %v2287
    %v2289 = vsel %vm500, %v2286, 0.0
    %2290 = vadd.xlane.f32.xlu0 %v2289
    %v2291 = vpop.xlane.xlu0 %2290
    %v2292 = vsel %vm500, %v2288, 0.0
    %2293 = vadd.xlane.f32.xlu0 %v2292
    %v2294 = vpop.xlane.xlu0 %2293
    %v2295 = vrcp.pop %v2291
    %v2296 = vmul.f32 %v2291, %v2295
    %v2297 = vsub.f32 1.0, %v2296
    %v2298 = vmul.f32 %v2295, %v2297
    %v2299 = vadd.f32 %v2295, %v2298
    %vm2300 = vweird.f32 %v2291
    %vm2301 = vweird.f32 %v2295
    %vm2302 = vmor %vm2300, %vm2301
    %v2303 = vsel %vm2302, %v2295, %v2299
    %v2304 = vand.u32 2147483647, %v2291
    %vm2305 = vcmp.eq.f32.partialorder %v2304, 8.507059e+37
    %v2306 = vand.u32 %v2291, 2147483648
    %v2307 = vor.u32 1.1754944e-38, %v2306
    %v2308 = vsel %vm2305, %v2307, %v2303
    %v2309 = vmul.f32 %v2286, %v2308
    %v2310 = vrcp.pop %v2294
    %v2311 = vmul.f32 %v2294, %v2310
    %v2312 = vsub.f32 1.0, %v2311
    %v2313 = vmul.f32 %v2310, %v2312
    %v2314 = vadd.f32 %v2310, %v2313
    %vm2315 = vweird.f32 %v2294
    %vm2316 = vweird.f32 %v2310
    %vm2317 = vmor %vm2315, %vm2316
    %v2318 = vsel %vm2317, %v2310, %v2314
    %v2319 = vand.u32 2147483647, %v2294
    %vm2320 = vcmp.eq.f32.partialorder %v2319, 8.507059e+37
    %v2321 = vand.u32 %v2294, 2147483648
    %v2322 = vor.u32 1.1754944e-38, %v2321
    %v2323 = vsel %vm2320, %v2322, %v2318
    %v2324 = vmul.f32 %v2288, %v2323
    %v2325 = vpack.c.bf16 %v2324, %v2309
    %v2328 = vunpack.c.l.b16 %v2245
    %v2329 = vunpack.c.l.b16 %v2246
    %v2330 = vpack.c.b16 %v2329, %v2328
    %v2333 = vsel %vm500, %v2325, 0
    %2335 = vmatpush.bf16.msra.mxu0 0
    %2336 = vmatpush.bf16.msra.mxu0 0
    %2337 = vmatpush.bf16.msra.mxu0 0
    %2338 = vmatpush.bf16.msra.mxu0 0
    %2339 = vmatpush.bf16.msra.mxu0 0
    %2340 = vmatpush.bf16.msra.mxu0 0
    %2341 = vmatpush.bf16.msra.mxu0 0
    %2342 = vmatpush.bf16.msra.mxu0 %v2330
    %2343 = vmatmul.bf16.gmra.mxu0 %v2333
    %v2344 = vpop.f32.mrf.mxu0
    %v2345 = vadd.f32 0.0, %v2344
    %v2346 = vpop.f32.mrf.mxu0
    %v2347 = vadd.f32 0.0, %v2346
    %2348 = vdwg.mxu0
    %2349 = vrot.lane.b32.xlu0 %v2251, 120
    %v2350 = vpop.permute.xlu0 %2349
    %2351 = vrot.lane.b32.xlu0 %v2256, 120
    %v2352 = vpop.permute.xlu0 %2351
    %v2354 = vsel %vm479, %v2350, 0
    %v2357 = vsel %vm479, %v2352, 0
    %2359 = vmatpush.bf16.xpose.msra.mxu0 0
    %2360 = vmatpush.bf16.xpose.msra.mxu0 0
    %2361 = vmatpush.bf16.xpose.msra.mxu0 0
    %2362 = vmatpush.bf16.xpose.msra.mxu0 0
    %2363 = vmatpush.bf16.xpose.msra.mxu0 0
    %2364 = vmatpush.bf16.xpose.msra.mxu0 0
    %2365 = vmatpush.bf16.xpose.msra.mxu0 0
    %2366 = vmatpush.bf16.xpose.msra.mxu0 %v2357
    %2367 = vmatmul.bf16.gmra.mxu0 %v2354
    %v2368 = vpop.f32.mrf.mxu0
    %v2369 = vadd.f32 0.0, %v2368
    %v2370 = vpop.f32.mrf.mxu0
    %v2371 = vadd.f32 0.0, %v2370
    %2372 = vdwg.mxu0
    %v2373 = vsel %vm500, %v2369, -inf
    %2374 = vmax.xlane.f32.xlu0 %v2373
    %v2375 = vpop.xlane.xlu0 %2374
    %v2376 = vsel %vm500, %v2371, -inf
    %2377 = vmax.xlane.f32.xlu0 %v2376
    %v2378 = vpop.xlane.xlu0 %2377
    %v2379 = vsub.f32 %v2369, %v2375
    %v2380 = vsub.f32 %v2371, %v2378
    %v2381 = vmul.f32 %v2379, 1.442695
    %v2382 = vpow.pop %v2381
    %v2383 = vmul.f32 %v2380, 1.442695
    %v2384 = vpow.pop %v2383
    %v2385 = vsel %vm500, %v2382, 0.0
    %2386 = vadd.xlane.f32.xlu0 %v2385
    %v2387 = vpop.xlane.xlu0 %2386
    %v2388 = vsel %vm500, %v2384, 0.0
    %2389 = vadd.xlane.f32.xlu0 %v2388
    %v2390 = vpop.xlane.xlu0 %2389
    %v2391 = vrcp.pop %v2387
    %v2392 = vmul.f32 %v2387, %v2391
    %v2393 = vsub.f32 1.0, %v2392
    %v2394 = vmul.f32 %v2391, %v2393
    %v2395 = vadd.f32 %v2391, %v2394
    %vm2396 = vweird.f32 %v2387
    %vm2397 = vweird.f32 %v2391
    %vm2398 = vmor %vm2396, %vm2397
    %v2399 = vsel %vm2398, %v2391, %v2395
    %v2400 = vand.u32 2147483647, %v2387
    %vm2401 = vcmp.eq.f32.partialorder %v2400, 8.507059e+37
    %v2402 = vand.u32 %v2387, 2147483648
    %v2403 = vor.u32 1.1754944e-38, %v2402
    %v2404 = vsel %vm2401, %v2403, %v2399
    %v2405 = vmul.f32 %v2382, %v2404
    %v2406 = vrcp.pop %v2390
    %v2407 = vmul.f32 %v2390, %v2406
    %v2408 = vsub.f32 1.0, %v2407
    %v2409 = vmul.f32 %v2406, %v2408
    %v2410 = vadd.f32 %v2406, %v2409
    %vm2411 = vweird.f32 %v2390
    %vm2412 = vweird.f32 %v2406
    %vm2413 = vmor %vm2411, %vm2412
    %v2414 = vsel %vm2413, %v2406, %v2410
    %v2415 = vand.u32 2147483647, %v2390
    %vm2416 = vcmp.eq.f32.partialorder %v2415, 8.507059e+37
    %v2417 = vand.u32 %v2390, 2147483648
    %v2418 = vor.u32 1.1754944e-38, %v2417
    %v2419 = vsel %vm2416, %v2418, %v2414
    %v2420 = vmul.f32 %v2384, %v2419
    %v2421 = vpack.c.bf16 %v2420, %v2405
    %2422 = vrot.lane.b32.xlu0 %v2330, 120
    %v2423 = vpop.permute.xlu0 %2422
    %v2426 = vsel %vm500, %v2421, 0
    %2428 = vmatpush.bf16.msra.mxu0 0
    %2429 = vmatpush.bf16.msra.mxu0 0
    %2430 = vmatpush.bf16.msra.mxu0 0
    %2431 = vmatpush.bf16.msra.mxu0 0
    %2432 = vmatpush.bf16.msra.mxu0 0
    %2433 = vmatpush.bf16.msra.mxu0 0
    %2434 = vmatpush.bf16.msra.mxu0 0
    %2435 = vmatpush.bf16.msra.mxu0 %v2423
    %2436 = vmatmul.bf16.gmra.mxu0 %v2426
    %v2437 = vpop.f32.mrf.mxu0
    %v2438 = vadd.f32 0.0, %v2437
    %v2439 = vpop.f32.mrf.mxu0
    %v2440 = vadd.f32 0.0, %v2439
    %2441 = vdwg.mxu0
    %2442 = vrot.lane.b32.xlu0 %v2251, 112
    %v2443 = vpop.permute.xlu0 %2442
    %2444 = vrot.lane.b32.xlu0 %v2256, 112
    %v2445 = vpop.permute.xlu0 %2444
    %v2447 = vsel %vm479, %v2443, 0
    %v2450 = vsel %vm479, %v2445, 0
    %2452 = vmatpush.bf16.xpose.msra.mxu0 0
    %2453 = vmatpush.bf16.xpose.msra.mxu0 0
    %2454 = vmatpush.bf16.xpose.msra.mxu0 0
    %2455 = vmatpush.bf16.xpose.msra.mxu0 0
    %2456 = vmatpush.bf16.xpose.msra.mxu0 0
    %2457 = vmatpush.bf16.xpose.msra.mxu0 0
    %2458 = vmatpush.bf16.xpose.msra.mxu0 0
    %2459 = vmatpush.bf16.xpose.msra.mxu0 %v2450
    %2460 = vmatmul.bf16.gmra.mxu0 %v2447
    %v2461 = vpop.f32.mrf.mxu0
    %v2462 = vadd.f32 0.0, %v2461
    %v2463 = vpop.f32.mrf.mxu0
    %v2464 = vadd.f32 0.0, %v2463
    %2465 = vdwg.mxu0
    %v2466 = vsel %vm500, %v2462, -inf
    %2467 = vmax.xlane.f32.xlu0 %v2466
    %v2468 = vpop.xlane.xlu0 %2467
    %v2469 = vsel %vm500, %v2464, -inf
    %2470 = vmax.xlane.f32.xlu0 %v2469
    %v2471 = vpop.xlane.xlu0 %2470
    %v2472 = vsub.f32 %v2462, %v2468
    %v2473 = vsub.f32 %v2464, %v2471
    %v2474 = vmul.f32 %v2472, 1.442695
    %v2475 = vpow.pop %v2474
    %v2476 = vmul.f32 %v2473, 1.442695
    %v2477 = vpow.pop %v2476
    %v2478 = vsel %vm500, %v2475, 0.0
    %2479 = vadd.xlane.f32.xlu0 %v2478
    %v2480 = vpop.xlane.xlu0 %2479
    %v2481 = vsel %vm500, %v2477, 0.0
    %2482 = vadd.xlane.f32.xlu0 %v2481
    %v2483 = vpop.xlane.xlu0 %2482
    %v2484 = vrcp.pop %v2480
    %v2485 = vmul.f32 %v2480, %v2484
    %v2486 = vsub.f32 1.0, %v2485
    %v2487 = vmul.f32 %v2484, %v2486
    %v2488 = vadd.f32 %v2484, %v2487
    %vm2489 = vweird.f32 %v2480
    %vm2490 = vweird.f32 %v2484
    %vm2491 = vmor %vm2489, %vm2490
    %v2492 = vsel %vm2491, %v2484, %v2488
    %v2493 = vand.u32 2147483647, %v2480
    %vm2494 = vcmp.eq.f32.partialorder %v2493, 8.507059e+37
    %v2495 = vand.u32 %v2480, 2147483648
    %v2496 = vor.u32 1.1754944e-38, %v2495
    %v2497 = vsel %vm2494, %v2496, %v2492
    %v2498 = vmul.f32 %v2475, %v2497
    %v2499 = vrcp.pop %v2483
    %v2500 = vmul.f32 %v2483, %v2499
    %v2501 = vsub.f32 1.0, %v2500
    %v2502 = vmul.f32 %v2499, %v2501
    %v2503 = vadd.f32 %v2499, %v2502
    %vm2504 = vweird.f32 %v2483
    %vm2505 = vweird.f32 %v2499
    %vm2506 = vmor %vm2504, %vm2505
    %v2507 = vsel %vm2506, %v2499, %v2503
    %v2508 = vand.u32 2147483647, %v2483
    %vm2509 = vcmp.eq.f32.partialorder %v2508, 8.507059e+37
    %v2510 = vand.u32 %v2483, 2147483648
    %v2511 = vor.u32 1.1754944e-38, %v2510
    %v2512 = vsel %vm2509, %v2511, %v2507
    %v2513 = vmul.f32 %v2477, %v2512
    %v2514 = vpack.c.bf16 %v2513, %v2498
    %2515 = vrot.lane.b32.xlu0 %v2330, 112
    %v2516 = vpop.permute.xlu0 %2515
    %v2519 = vsel %vm500, %v2514, 0
    %2521 = vmatpush.bf16.msra.mxu0 0
    %2522 = vmatpush.bf16.msra.mxu0 0
    %2523 = vmatpush.bf16.msra.mxu0 0
    %2524 = vmatpush.bf16.msra.mxu0 0
    %2525 = vmatpush.bf16.msra.mxu0 0
    %2526 = vmatpush.bf16.msra.mxu0 0
    %2527 = vmatpush.bf16.msra.mxu0 0
    %2528 = vmatpush.bf16.msra.mxu0 %v2516
    %2529 = vmatmul.bf16.gmra.mxu0 %v2519
    %v2530 = vpop.f32.mrf.mxu0
    %v2531 = vadd.f32 0.0, %v2530
    %v2532 = vpop.f32.mrf.mxu0
    %v2533 = vadd.f32 0.0, %v2532
    %2534 = vdwg.mxu0
    %2535 = vrot.lane.b32.xlu0 %v2251, 104
    %v2536 = vpop.permute.xlu0 %2535
    %2537 = vrot.lane.b32.xlu0 %v2256, 104
    %v2538 = vpop.permute.xlu0 %2537
    %v2540 = vsel %vm479, %v2536, 0
    %v2543 = vsel %vm479, %v2538, 0
    %2545 = vmatpush.bf16.xpose.msra.mxu0 0
    %2546 = vmatpush.bf16.xpose.msra.mxu0 0
    %2547 = vmatpush.bf16.xpose.msra.mxu0 0
    %2548 = vmatpush.bf16.xpose.msra.mxu0 0
    %2549 = vmatpush.bf16.xpose.msra.mxu0 0
    %2550 = vmatpush.bf16.xpose.msra.mxu0 0
    %2551 = vmatpush.bf16.xpose.msra.mxu0 0
    %2552 = vmatpush.bf16.xpose.msra.mxu0 %v2543
    %2553 = vmatmul.bf16.gmra.mxu0 %v2540
    %v2554 = vpop.f32.mrf.mxu0
    %v2555 = vadd.f32 0.0, %v2554
    %v2556 = vpop.f32.mrf.mxu0
    %v2557 = vadd.f32 0.0, %v2556
    %2558 = vdwg.mxu0
    %v2559 = vsel %vm500, %v2555, -inf
    %2560 = vmax.xlane.f32.xlu0 %v2559
    %v2561 = vpop.xlane.xlu0 %2560
    %v2562 = vsel %vm500, %v2557, -inf
    %2563 = vmax.xlane.f32.xlu0 %v2562
    %v2564 = vpop.xlane.xlu0 %2563
    %v2565 = vsub.f32 %v2555, %v2561
    %v2566 = vsub.f32 %v2557, %v2564
    %v2567 = vmul.f32 %v2565, 1.442695
    %v2568 = vpow.pop %v2567
    %v2569 = vmul.f32 %v2566, 1.442695
    %v2570 = vpow.pop %v2569
    %v2571 = vsel %vm500, %v2568, 0.0
    %2572 = vadd.xlane.f32.xlu0 %v2571
    %v2573 = vpop.xlane.xlu0 %2572
    %v2574 = vsel %vm500, %v2570, 0.0
    %2575 = vadd.xlane.f32.xlu0 %v2574
    %v2576 = vpop.xlane.xlu0 %2575
    %v2577 = vrcp.pop %v2573
    %v2578 = vmul.f32 %v2573, %v2577
    %v2579 = vsub.f32 1.0, %v2578
    %v2580 = vmul.f32 %v2577, %v2579
    %v2581 = vadd.f32 %v2577, %v2580
    %vm2582 = vweird.f32 %v2573
    %vm2583 = vweird.f32 %v2577
    %vm2584 = vmor %vm2582, %vm2583
    %v2585 = vsel %vm2584, %v2577, %v2581
    %v2586 = vand.u32 2147483647, %v2573
    %vm2587 = vcmp.eq.f32.partialorder %v2586, 8.507059e+37
    %v2588 = vand.u32 %v2573, 2147483648
    %v2589 = vor.u32 1.1754944e-38, %v2588
    %v2590 = vsel %vm2587, %v2589, %v2585
    %v2591 = vmul.f32 %v2568, %v2590
    %v2592 = vrcp.pop %v2576
    %v2593 = vmul.f32 %v2576, %v2592
    %v2594 = vsub.f32 1.0, %v2593
    %v2595 = vmul.f32 %v2592, %v2594
    %v2596 = vadd.f32 %v2592, %v2595
    %vm2597 = vweird.f32 %v2576
    %vm2598 = vweird.f32 %v2592
    %vm2599 = vmor %vm2597, %vm2598
    %v2600 = vsel %vm2599, %v2592, %v2596
    %v2601 = vand.u32 2147483647, %v2576
    %vm2602 = vcmp.eq.f32.partialorder %v2601, 8.507059e+37
    %v2603 = vand.u32 %v2576, 2147483648
    %v2604 = vor.u32 1.1754944e-38, %v2603
    %v2605 = vsel %vm2602, %v2604, %v2600
    %v2606 = vmul.f32 %v2570, %v2605
    %v2607 = vpack.c.bf16 %v2606, %v2591
    %2608 = vrot.lane.b32.xlu0 %v2330, 104
    %v2609 = vpop.permute.xlu0 %2608
    %v2612 = vsel %vm500, %v2607, 0
    %2614 = vmatpush.bf16.msra.mxu0 0
    %2615 = vmatpush.bf16.msra.mxu0 0
    %2616 = vmatpush.bf16.msra.mxu0 0
    %2617 = vmatpush.bf16.msra.mxu0 0
    %2618 = vmatpush.bf16.msra.mxu0 0
    %2619 = vmatpush.bf16.msra.mxu0 0
    %2620 = vmatpush.bf16.msra.mxu0 0
    %2621 = vmatpush.bf16.msra.mxu0 %v2609
    %2622 = vmatmul.bf16.gmra.mxu0 %v2612
    %v2623 = vpop.f32.mrf.mxu0
    %v2624 = vadd.f32 0.0, %v2623
    %v2625 = vpop.f32.mrf.mxu0
    %v2626 = vadd.f32 0.0, %v2625
    %2627 = vdwg.mxu0
    %2630 = vrot.lane.b32.xlu0 %v2438, 8
    %v2631 = vpop.permute.xlu0 %2630
    %2632 = vrot.lane.b32.xlu0 %v2440, 8
    %v2633 = vpop.permute.xlu0 %2632
    %2638 = vrot.lane.b32.xlu0 %v2531, 16
    %v2639 = vpop.permute.xlu0 %2638
    %2640 = vrot.lane.b32.xlu0 %v2533, 16
    %v2641 = vpop.permute.xlu0 %2640
    %2646 = vrot.lane.b32.xlu0 %v2624, 24
    %v2647 = vpop.permute.xlu0 %2646
    %2648 = vrot.lane.b32.xlu0 %v2626, 24
    %v2649 = vpop.permute.xlu0 %2648
    %v2652 = vsel %vm479, %v2345, %v2631
    %v2653 = vsel %vm479, %v2347, %v2633
    %v2654 = vsel %vm500, %v2652, %v2639
    %v2655 = vsel %vm500, %v2653, %v2641
    %v2656 = vsel %vm880, %v2654, %v2647
    %v2657 = vsel %vm880, %v2655, %v2649
    %s2658 = scalar_lea.vmem [#allocation8], 16
    %v2659 = vld [vmem:[%s2658] sm:$0xf]
    %v2660 = vld [vmem:[%s2658 + $0x4] sm:$0xf]
    %v2661 = vld [vmem:[%s2658 + $0x8] sm:$0xf]
    %v2662 = vld [vmem:[%s2658 + $0xc] sm:$0xf]
    %v2663 = vpack.c.bf16 %v2240, %v2239
    %v2664 = vpack.c.bf16 %v2657, %v2656
    %v2669 = vunpack.c.l.b16 %v2659
    %v2670 = vunpack.c.l.b16 %v2660
    %v2671 = vunpack.c.l.b16 %v2661
    %v2672 = vunpack.c.l.b16 %v2662
    %v2673 = vpack.c.b16 %v2670, %v2669
    %v2674 = vpack.c.b16 %v2672, %v2671
    %v2678 = vsel %vm255, %v2663, 0
    %v2681 = vsel %vm255, %v2664, 0
    %2683 = vmatpush.bf16.msra.mxu0 0
    %2684 = vmatpush.bf16.msra.mxu0 0
    %2685 = vmatpush.bf16.msra.mxu0 0
    %2686 = vmatpush.bf16.msra.mxu0 0
    %2687 = vmatpush.bf16.msra.mxu0 0
    %2688 = vmatpush.bf16.msra.mxu0 0
    %2689 = vmatpush.bf16.msra.mxu0 %v2674
    %2690 = vmatpush.bf16.msra.mxu0 %v2673
    %2691 = vmatmul.bf16.gmra.mxu0 %v2678
    %v2692 = vpop.f32.mrf.mxu0
    %v2693 = vadd.f32 0.0, %v2692
    %v2694 = vpop.f32.mrf.mxu0
    %v2695 = vadd.f32 0.0, %v2694
    %2696 = vmatmul.bf16.gmra.mxu0 %v2681
    %v2697 = vpop.f32.mrf.mxu0
    %v2698 = vadd.f32 0.0, %v2697
    %v2699 = vpop.f32.mrf.mxu0
    %v2700 = vadd.f32 0.0, %v2699
    %2701 = vdwg.mxu0
    %v2702 = vadd.f32 %v1609, %v2693
    %v2703 = vadd.f32 %v1610, %v2695
    %v2704 = vadd.f32 %v1611, %v2698
    %v2705 = vadd.f32 %v1612, %v2700
    %s2706 = scalar_lea.vmem [#allocation10], 1
    %v2707 = vld [vmem:[%s2706] sm:$0x1]
    %v2709 = vperm.slane %v2707, 0
    %v2711 = vadd.f32 %v2702, %v2709
    %v2712 = vadd.f32 %v2703, %v2709
    %v2713 = vadd.f32 %v2704, %v2709
    %v2714 = vadd.f32 %v2705, %v2709
    %s2715 = scalar_lea.vmem [#allocation11], 1
    %v2716 = vld [vmem:[%s2715] sm:$0x1]
    %v2717 = vmul.f32 %v2711, %v2711
    %v2718 = vmul.f32 %v2712, %v2712
    %v2719 = vmul.f32 %v2713, %v2713
    %v2720 = vmul.f32 %v2714, %v2714
    %v2721 = vsel %vm255, %v2717, 0.0
    %2722 = vadd.xlane.f32.xlu0 %v2721
    %v2723 = vpop.xlane.xlu0 %2722
    %v2724 = vsel %vm255, %v2718, 0.0
    %2725 = vadd.xlane.f32.xlu0 %v2724
    %v2726 = vpop.xlane.xlu0 %2725
    %v2727 = vsel %vm255, %v2719, 0.0
    %2728 = vadd.xlane.f32.xlu0 %v2727
    %v2729 = vpop.xlane.xlu0 %2728
    %v2730 = vsel %vm255, %v2720, 0.0
    %2731 = vadd.xlane.f32.xlu0 %v2730
    %v2732 = vpop.xlane.xlu0 %2731
    %v2733 = vmul.f32 %v2723, %v274
    %v2734 = vmul.f32 %v2726, %v274
    %v2735 = vmul.f32 %v2729, %v274
    %v2736 = vmul.f32 %v2732, %v274
    %v2737 = vadd.f32 %v2733, 1e-06
    %v2738 = vadd.f32 %v2734, 1e-06
    %v2739 = vadd.f32 %v2735, 1e-06
    %v2740 = vadd.f32 %v2736, 1e-06
    %v2741 = vrsqrt.pop %v2737
    %v2742 = vmul.f32 %v2741, %v2737
    %v2743 = vmul.f32 %v2742, %v2741
    %v2744 = vmul.f32 0.5, %v2743
    %v2745 = vsub.f32 1.5, %v2744
    %v2746 = vmul.f32 %v2741, %v2745
    %vm2747 = vweird.f32 %v2737
    %vm2748 = vweird.f32 %v2741
    %vm2749 = vmor %vm2747, %vm2748
    %v2750 = vsel %vm2749, %v2741, %v2746
    %v2751 = vrsqrt.pop %v2738
    %v2752 = vmul.f32 %v2751, %v2738
    %v2753 = vmul.f32 %v2752, %v2751
    %v2754 = vmul.f32 0.5, %v2753
    %v2755 = vsub.f32 1.5, %v2754
    %v2756 = vmul.f32 %v2751, %v2755
    %vm2757 = vweird.f32 %v2738
    %vm2758 = vweird.f32 %v2751
    %vm2759 = vmor %vm2757, %vm2758
    %v2760 = vsel %vm2759, %v2751, %v2756
    %v2761 = vrsqrt.pop %v2739
    %v2762 = vmul.f32 %v2761, %v2739
    %v2763 = vmul.f32 %v2762, %v2761
    %v2764 = vmul.f32 0.5, %v2763
    %v2765 = vsub.f32 1.5, %v2764
    %v2766 = vmul.f32 %v2761, %v2765
    %vm2767 = vweird.f32 %v2739
    %vm2768 = vweird.f32 %v2761
    %vm2769 = vmor %vm2767, %vm2768
    %v2770 = vsel %vm2769, %v2761, %v2766
    %v2771 = vrsqrt.pop %v2740
    %v2772 = vmul.f32 %v2771, %v2740
    %v2773 = vmul.f32 %v2772, %v2771
    %v2774 = vmul.f32 0.5, %v2773
    %v2775 = vsub.f32 1.5, %v2774
    %v2776 = vmul.f32 %v2771, %v2775
    %vm2777 = vweird.f32 %v2740
    %vm2778 = vweird.f32 %v2771
    %vm2779 = vmor %vm2777, %vm2778
    %v2780 = vsel %vm2779, %v2771, %v2776
    %v2781 = vmul.f32 %v2711, %v2750
    %v2782 = vmul.f32 %v2712, %v2760
    %v2783 = vmul.f32 %v2713, %v2770
    %v2784 = vmul.f32 %v2714, %v2780
    %v2786 = vperm.slane %v2716, 0
    %v2788 = vmul.f32 %v2781, %v2786
    %v2789 = vmul.f32 %v2782, %v2786
    %v2790 = vmul.f32 %v2783, %v2786
    %v2791 = vmul.f32 %v2784, %v2786
    %v2792 = vpack.c.bf16 %v2789, %v2788
    %v2793 = vpack.c.bf16 %v2791, %v2790
    %s2794 = scalar_lea.vmem [#allocation13], 16
    %v2795 = vld [vmem:[%s2794] sm:$0xf]
    %v2796 = vld [vmem:[%s2794 + $0x4] sm:$0xf]
    %v2797 = vld [vmem:[%s2794 + $0x8] sm:$0xf]
    %v2798 = vld [vmem:[%s2794 + $0xc] sm:$0xf]
    %v2803 = vunpack.c.l.b16 %v2795
    %v2804 = vunpack.c.l.b16 %v2796
    %v2805 = vunpack.c.l.b16 %v2797
    %v2806 = vunpack.c.l.b16 %v2798
    %v2807 = vpack.c.b16 %v2804, %v2803
    %v2808 = vpack.c.b16 %v2806, %v2805
    %v2812 = vsel %vm255, %v2792, 0
    %v2815 = vsel %vm255, %v2793, 0
    %2817 = vmatpush.bf16.msra.mxu0 0
    %2818 = vmatpush.bf16.msra.mxu0 0
    %2819 = vmatpush.bf16.msra.mxu0 0
    %2820 = vmatpush.bf16.msra.mxu0 0
    %2821 = vmatpush.bf16.msra.mxu0 0
    %2822 = vmatpush.bf16.msra.mxu0 0
    %2823 = vmatpush.bf16.msra.mxu0 %v2808
    %2824 = vmatpush.bf16.msra.mxu0 %v2807
    %2825 = vmatmul.bf16.gmra.mxu0 %v2812
    %v2826 = vpop.f32.mrf.mxu0
    %v2827 = vadd.f32 0.0, %v2826
    %v2828 = vpop.f32.mrf.mxu0
    %v2829 = vadd.f32 0.0, %v2828
    %2830 = vmatmul.bf16.gmra.mxu0 %v2815
    %v2831 = vpop.f32.mrf.mxu0
    %v2832 = vadd.f32 0.0, %v2831
    %v2833 = vpop.f32.mrf.mxu0
    %v2834 = vadd.f32 0.0, %v2833
    %2835 = vdwg.mxu0
    %v2836 = vmul.f32 %v2827, %v2827
    %v2837 = vmul.f32 %v2829, %v2829
    %v2838 = vmul.f32 %v2832, %v2832
    %v2839 = vmul.f32 %v2834, %v2834
    %v2840 = vmul.f32 %v2827, %v2836
    %v2841 = vmul.f32 %v2829, %v2837
    %v2842 = vmul.f32 %v2832, %v2838
    %v2843 = vmul.f32 %v2834, %v2839
    %v2844 = vmul.f32 %v2840, 0.044715
    %v2845 = vmul.f32 %v2841, 0.044715
    %v2846 = vmul.f32 %v2842, 0.044715
    %v2847 = vmul.f32 %v2843, 0.044715
    %v2848 = vadd.f32 %v2827, %v2844
    %v2849 = vadd.f32 %v2829, %v2845
    %v2850 = vadd.f32 %v2832, %v2846
    %v2851 = vadd.f32 %v2834, %v2847
    %v2852 = vmul.f32 %v2848, 0.7978846
    %v2853 = vmul.f32 %v2849, 0.7978846
    %v2854 = vmul.f32 %v2850, 0.7978846
    %v2855 = vmul.f32 %v2851, 0.7978846
    %v2856 = vtanh.pop %v2852
    %v2857 = vtanh.pop %v2853
    %v2858 = vtanh.pop %v2854
    %v2859 = vtanh.pop %v2855
    %v2860 = vadd.f32 %v2856, 1.0
    %v2861 = vadd.f32 %v2857, 1.0
    %v2862 = vadd.f32 %v2858, 1.0
    %v2863 = vadd.f32 %v2859, 1.0
    %v2864 = vmul.f32 %v2860, 0.5
    %v2865 = vmul.f32 %v2861, 0.5
    %v2866 = vmul.f32 %v2862, 0.5
    %v2867 = vmul.f32 %v2863, 0.5
    %v2868 = vmul.f32 %v2827, %v2864
    %v2869 = vmul.f32 %v2829, %v2865
    %v2870 = vmul.f32 %v2832, %v2866
    %v2871 = vmul.f32 %v2834, %v2867
    %s2872 = scalar_lea.vmem [#allocation14], 16
    %v2873 = vld [vmem:[%s2872] sm:$0xf]
    %v2874 = vld [vmem:[%s2872 + $0x4] sm:$0xf]
    %v2875 = vld [vmem:[%s2872 + $0x8] sm:$0xf]
    %v2876 = vld [vmem:[%s2872 + $0xc] sm:$0xf]
    %v2881 = vunpack.c.l.b16 %v2873
    %v2882 = vunpack.c.l.b16 %v2874
    %v2883 = vunpack.c.l.b16 %v2875
    %v2884 = vunpack.c.l.b16 %v2876
    %v2885 = vpack.c.b16 %v2882, %v2881
    %v2886 = vpack.c.b16 %v2884, %v2883
    %2889 = vmatpush.bf16.msra.mxu0 0
    %2890 = vmatpush.bf16.msra.mxu0 0
    %2891 = vmatpush.bf16.msra.mxu0 0
    %2892 = vmatpush.bf16.msra.mxu0 0
    %2893 = vmatpush.bf16.msra.mxu0 0
    %2894 = vmatpush.bf16.msra.mxu0 0
    %2895 = vmatpush.bf16.msra.mxu0 %v2886
    %2896 = vmatpush.bf16.msra.mxu0 %v2885
    %2897 = vmatmul.bf16.gmra.mxu0 %v2812
    %v2898 = vpop.f32.mrf.mxu0
    %v2899 = vadd.f32 0.0, %v2898
    %v2900 = vpop.f32.mrf.mxu0
    %v2901 = vadd.f32 0.0, %v2900
    %2902 = vmatmul.bf16.gmra.mxu0 %v2815
    %v2903 = vpop.f32.mrf.mxu0
    %v2904 = vadd.f32 0.0, %v2903
    %v2905 = vpop.f32.mrf.mxu0
    %v2906 = vadd.f32 0.0, %v2905
    %2907 = vdwg.mxu0
    %v2908 = vmul.f32 %v2868, %v2899
    %v2909 = vmul.f32 %v2869, %v2901
    %v2910 = vmul.f32 %v2870, %v2904
    %v2911 = vmul.f32 %v2871, %v2906
    %s2912 = scalar_lea.vmem %s16, 32
    %v2913 = vld [vmem:[%s2912] sm:$0xf]
    %v2914 = vld [vmem:[%s2912 + $0x4] sm:$0xf]
    %v2915 = vld [vmem:[%s2912 + $0x8] sm:$0xf]
    %v2916 = vld [vmem:[%s2912 + $0xc] sm:$0xf]
    %v2917 = vld [vmem:[%s2912 + $0x10] sm:$0xf]
    %v2918 = vld [vmem:[%s2912 + $0x14] sm:$0xf]
    %v2919 = vld [vmem:[%s2912 + $0x18] sm:$0xf]
    %v2920 = vld [vmem:[%s2912 + $0x1c] sm:$0xf]
    %v2921 = vpack.c.bf16 %v2909, %v2908
    %v2922 = vpack.c.bf16 %v2911, %v2910
    %v2931 = vunpack.c.l.b16 %v2913
    %v2932 = vunpack.c.l.b16 %v2914
    %v2933 = vunpack.c.l.b16 %v2915
    %v2934 = vunpack.c.l.b16 %v2916
    %v2935 = vunpack.c.l.b16 %v2917
    %v2936 = vunpack.c.l.b16 %v2918
    %v2937 = vunpack.c.l.b16 %v2919
    %v2938 = vunpack.c.l.b16 %v2920
    %v2939 = vpack.c.b16 %v2932, %v2931
    %v2940 = vpack.c.b16 %v2934, %v2933
    %v2941 = vpack.c.b16 %v2936, %v2935
    %v2942 = vpack.c.b16 %v2938, %v2937
    %v2948 = vsel %vm1583, %v2921, 0
    %v2951 = vsel %vm1583, %v2922, 0
    %2953 = vmatpush.bf16.msra.mxu0 0
    %2954 = vmatpush.bf16.msra.mxu0 0
    %2955 = vmatpush.bf16.msra.mxu0 0
    %2956 = vmatpush.bf16.msra.mxu0 0
    %2957 = vmatpush.bf16.msra.mxu0 %v2942
    %2958 = vmatpush.bf16.msra.mxu0 %v2941
    %2959 = vmatpush.bf16.msra.mxu0 %v2940
    %2960 = vmatpush.bf16.msra.mxu0 %v2939
    %2961 = vmatmul.bf16.gmra.mxu0 %v2948
    %v2962 = vpop.f32.mrf.mxu0
    %v2963 = vadd.f32 0.0, %v2962
    %v2964 = vpop.f32.mrf.mxu0
    %v2965 = vadd.f32 0.0, %v2964
    %2966 = vmatmul.bf16.gmra.mxu0 %v2951
    %v2967 = vpop.f32.mrf.mxu0
    %v2968 = vadd.f32 0.0, %v2967
    %v2969 = vpop.f32.mrf.mxu0
    %v2970 = vadd.f32 0.0, %v2969
    %2971 = vdwg.mxu0
    %v2972 = vadd.f32 %v2711, %v2963
    %v2973 = vadd.f32 %v2712, %v2965
    %v2974 = vadd.f32 %v2713, %v2968
    %v2975 = vadd.f32 %v2714, %v2970
    %v2976 = vld [vmem:[#allocation16] sm:$0x1]
    %v2977 = vmul.f32 %v2972, %v2972
    %v2978 = vmul.f32 %v2973, %v2973
    %v2979 = vmul.f32 %v2974, %v2974
    %v2980 = vmul.f32 %v2975, %v2975
    %v2981 = vsel %vm255, %v2977, 0.0
    %2982 = vadd.xlane.f32.xlu0 %v2981
    %v2983 = vpop.xlane.xlu0 %2982
    %v2984 = vsel %vm255, %v2978, 0.0
    %2985 = vadd.xlane.f32.xlu0 %v2984
    %v2986 = vpop.xlane.xlu0 %2985
    %v2987 = vsel %vm255, %v2979, 0.0
    %2988 = vadd.xlane.f32.xlu0 %v2987
    %v2989 = vpop.xlane.xlu0 %2988
    %v2990 = vsel %vm255, %v2980, 0.0
    %2991 = vadd.xlane.f32.xlu0 %v2990
    %v2992 = vpop.xlane.xlu0 %2991
    %v2993 = vmul.f32 %v2983, %v274
    %v2994 = vmul.f32 %v2986, %v274
    %v2995 = vmul.f32 %v2989, %v274
    %v2996 = vmul.f32 %v2992, %v274
    %v2997 = vadd.f32 %v2993, 1e-06
    %v2998 = vadd.f32 %v2994, 1e-06
    %v2999 = vadd.f32 %v2995, 1e-06
    %v3000 = vadd.f32 %v2996, 1e-06
    %v3001 = vrsqrt.pop %v2997
    %v3002 = vmul.f32 %v3001, %v2997
    %v3003 = vmul.f32 %v3002, %v3001
    %v3004 = vmul.f32 0.5, %v3003
    %v3005 = vsub.f32 1.5, %v3004
    %v3006 = vmul.f32 %v3001, %v3005
    %vm3007 = vweird.f32 %v2997
    %vm3008 = vweird.f32 %v3001
    %vm3009 = vmor %vm3007, %vm3008
    %v3010 = vsel %vm3009, %v3001, %v3006
    %v3011 = vrsqrt.pop %v2998
    %v3012 = vmul.f32 %v3011, %v2998
    %v3013 = vmul.f32 %v3012, %v3011
    %v3014 = vmul.f32 0.5, %v3013
    %v3015 = vsub.f32 1.5, %v3014
    %v3016 = vmul.f32 %v3011, %v3015
    %vm3017 = vweird.f32 %v2998
    %vm3018 = vweird.f32 %v3011
    %vm3019 = vmor %vm3017, %vm3018
    %v3020 = vsel %vm3019, %v3011, %v3016
    %v3021 = vrsqrt.pop %v2999
    %v3022 = vmul.f32 %v3021, %v2999
    %v3023 = vmul.f32 %v3022, %v3021
    %v3024 = vmul.f32 0.5, %v3023
    %v3025 = vsub.f32 1.5, %v3024
    %v3026 = vmul.f32 %v3021, %v3025
    %vm3027 = vweird.f32 %v2999
    %vm3028 = vweird.f32 %v3021
    %vm3029 = vmor %vm3027, %vm3028
    %v3030 = vsel %vm3029, %v3021, %v3026
    %v3031 = vrsqrt.pop %v3000
    %v3032 = vmul.f32 %v3031, %v3000
    %v3033 = vmul.f32 %v3032, %v3031
    %v3034 = vmul.f32 0.5, %v3033
    %v3035 = vsub.f32 1.5, %v3034
    %v3036 = vmul.f32 %v3031, %v3035
    %vm3037 = vweird.f32 %v3000
    %vm3038 = vweird.f32 %v3031
    %vm3039 = vmor %vm3037, %vm3038
    %v3040 = vsel %vm3039, %v3031, %v3036
    %v3041 = vmul.f32 %v2972, %v3010
    %v3042 = vmul.f32 %v2973, %v3020
    %v3043 = vmul.f32 %v2974, %v3030
    %v3044 = vmul.f32 %v2975, %v3040
    %v3046 = vperm.slane %v2976, 0
    %v3048 = vmul.f32 %v3041, %v3046
    %v3049 = vmul.f32 %v3042, %v3046
    %v3050 = vmul.f32 %v3043, %v3046
    %v3051 = vmul.f32 %v3044, %v3046
    %3052 = vst.msk [vmem:[#allocation17] sm:$0xff] %vm255, %v3048
    %3053 = vst.msk [vmem:[#allocation17 + $0x8] sm:$0xff] %vm255, %v3049
    %3054 = vst.msk [vmem:[#allocation17 + $0x10] sm:$0xff] %vm255, %v3050
    %3055 = vst.msk [vmem:[#allocation17 + $0x18] sm:$0xff] %vm255, %v3051
    // Predicated region
    $region110: #{tpu_custom_call.1} parent=1 // pred_check
      _
    $region111: #{tpu_custom_call.1} parent=1 // pred_check_branch
      %3057 = sbr.rel (0) target = $region113
    $region112: #{tpu_custom_call.1} parent=1 // pred_region
      %3059 = vsyncadd [#allocation4], 0
      %s3060 = sshll.u32 [#allocation17], 4
      %s3061 = int_to_ptr.vmem [resolvable:$true] %s3060
      %s3062 = sshll.u32 %s18, 4
      %s3063 = int_to_ptr.hbm [resolvable:$true] %s3062
      %3068 = dma.vmem_to_hbm [thread:$0]  %s3061, 512, %s3063, [#allocation4], 128, 128, 8
    $region113: #{tpu_custom_call.1} parent=1 // pred_fallthru
      _
    // Predicated region
    $region114: #{tpu_custom_call.1} parent=1 // pred_check
      _
    $region115: #{tpu_custom_call.1} parent=1 // pred_check_branch
      %3070 = sbr.rel (0) target = $region117
    $region116: #{tpu_custom_call.1} parent=1 // pred_region
      %3072 = dma.done [#allocation4], 512
    $region117: #{tpu_custom_call.1} parent=1 // pred_fallthru
      _
    %3073 = vsyncpa [#allocation3], 1
    %3074 = vsyncpa [#allocation6], 1
    %3075 = vsyncpa [#allocation9], 1
    %3076 = vsyncpa [#allocation12], 1
    %3077 = vsyncpa [#allocation15], 1
    %3078 = vsyncpa [#allocation4], 1

</llo_original>
